<compile_context>
chip_gen: v6e
topology: v6e:2x2x1
jax: 0.10.0
libtpu: 0.0.40
codegen_flags: <defaults>
</compile_context>

<pallas_src>
import functools

import jax
import jax.numpy as jnp
from jax.experimental import pallas as pl
from jax.experimental.pallas import tpu as pltpu


def _round_up(x, m):
    return (x + m - 1) // m * m


# -----------------------------------------------------------------------------
# Fused kernel: 3x3 gate/current_h conv  ->  LSTM gating  ->  5x5 out_conv
# -----------------------------------------------------------------------------
def _convlstm_fused_kernel(x_ref, h_ref, hh_ref, c_ref,        # inputs (1,C,HW)
                           wg_ref, bg_ref, wo_ref, bo_ref,     # packed weights
                           out_ref, hn_ref, cn_ref, curh_ref,  # outputs (1,C,HW)
                           patch1_ref, patch2_ref,             # im2col scratch
                           *, H, W, hidden_dim):
    HW = H * W
    HD = hidden_dim
    CX = x_ref.shape[1]
    CH = hh_ref.shape[1]
    CIN = CX + HD + CH
    CIN_PAD = wg_ref.shape[1] // 9      # per-tap K rows (channels padded to 8)
    HD_PAD = wo_ref.shape[1] // 25
    pow2_w = (W & (W - 1)) == 0

    def tap_copy(src_ref, patch_ref, row0, dyo, dxo):
        """patch[row0 + c, h*W + w] = src[0, c, (h+dyo)*W + (w+dxo)], zero when
        (h+dyo, w+dxo) falls outside the HxW image.  I.e. one zero-padded conv
        tap written lane-dense into the im2col scratch (no roll / concat)."""
        nrows = src_ref.shape[1]
        off = dyo * W + dxo
        p0 = max(0, -off)                # first destination column copied
        p1 = HW - max(0, off)            # one past the last copied column
        width = p1 - p0
        v = src_ref[0, :, p0 + off:p1 + off]                     # (nrows,width)
        dstp = jax.lax.broadcasted_iota(jnp.int32, (1, width), 1) + p0
        conds = []
        if dyo > 0:
            conds.append(dstp < (H - dyo) * W)
        elif dyo < 0:
            conds.append(dstp >= (-dyo) * W)
        if dxo != 0:
            col = (dstp & (W - 1)) if pow2_w else (dstp % W)
            if dxo > 0:
                conds.append(col < (W - dxo))
            else:
                conds.append(col >= -dxo)
        if conds:
            mask = conds[0]
            for c in conds[1:]:
                mask = mask & c
            v = jnp.where(mask, v, 0.0)
        patch_ref[row0:row0 + nrows, p0:p1] = v
        if p0 > 0:                       # columns whose source row is above
            patch_ref[row0:row0 + nrows, 0:p0] = jnp.zeros((nrows, p0),
                                                           jnp.float32)
        if p1 < HW:                      # columns whose source row is below
            patch_ref[row0:row0 + nrows, p1:HW] = jnp.zeros((nrows, HW - p1),
                                                            jnp.float32)

    # --- im2col for the fused 3x3 conv (per-tap channel order: [h, hh, x]) ---
    for dy in range(3):
        for dx in range(3):
            base = (dy * 3 + dx) * CIN_PAD
            dyo, dxo = dy - 1, dx - 1
            tap_copy(h_ref, patch1_ref, base, dyo, dxo)
            tap_copy(hh_ref, patch1_ref, base + HD, dyo, dxo)
            tap_copy(x_ref, patch1_ref, base + HD + CH, dyo, dxo)
            if CIN_PAD > CIN:            # zero the K-padding rows of this tap
                patch1_ref[base + CIN:base + CIN_PAD, :] = jnp.zeros(
                    (CIN_PAD - CIN, HW), jnp.float32)

    # One MXU matmul for gates + current_h:
    #   (4*HD + CH, 9*CIN_PAD)_bf16 @ (9*CIN_PAD, HW)_bf16 -> f32
    acc = jnp.dot(wg_ref[...], patch1_ref[...].astype(jnp.bfloat16),
                  preferred_element_type=jnp.float32)
    acc = acc + bg_ref[...]              # (NOUT, 1) broadcast along lanes

    # Gate blocks are [i, f, o, g] x HD rows (torch.split order); channel-major
    # layout makes these 8-sublane-aligned slices, not narrow lane slices.
    sig = jax.nn.sigmoid(acc[0:3 * HD, :])        # i, f, o in one EUP pass
    g = jnp.tanh(acc[3 * HD:4 * HD, :])
    i_g = sig[0:HD, :]
    f_g = sig[HD:2 * HD, :]
    o_g = sig[2 * HD:3 * HD, :]

    c_next = f_g * c_ref[0] + i_g * g
    h_next = o_g * jnp.tanh(c_next)

    hn_ref[0] = h_next
    cn_ref[0] = c_next
    curh_ref[0] = acc[4 * HD:4 * HD + CH, :]

    # --- fused 5x5 out_conv + LeakyReLU on the VMEM-resident h_next ----------
    for dy in range(5):
        for dx in range(5):
            base = (dy * 5 + dx) * HD_PAD
            tap_copy(hn_ref, patch2_ref, base, dy - 2, dx - 2)
            if HD_PAD > HD:
                patch2_ref[base + HD:base + HD_PAD, :] = jnp.zeros(
                    (HD_PAD - HD, HW), jnp.float32)

    acc2 = jnp.dot(wo_ref[...], patch2_ref[...].astype(jnp.bfloat16),
                   preferred_element_type=jnp.float32)
    acc2 = acc2 + bo_ref[...]
    out_ref[0] = jnp.where(acc2 >= 0.0, acc2, 0.01 * acc2)    # LeakyReLU(0.01)


# -----------------------------------------------------------------------------
# Wrapper
# -----------------------------------------------------------------------------
@functools.partial(jax.jit, static_argnames=("hidden_dim",))
def conv_lstm_cell_forward(x, h_cur, c_cur, higher_h, packed, hidden_dim):
    """NCHW in / NCHW out, matching the PyTorch module:
    returns (out, (h_next, c_next), current_h)."""
    B, CX, H, W = x.shape
    HD = hidden_dim
    CH = higher_h.shape[1]
    HW = H * W

    wg, bg = packed["w_gate_k"], packed["b_gate_k"]   # (4HD+CH, 9*CIN_PAD) bf16
    wo, bo = packed["w_out_k"], packed["b_out_k"]     # (CO, 25*HD_PAD)     bf16
    NOUT, K1 = wg.shape
    CO, K2 = wo.shape
    del NOUT

    # NCHW -> (B, C, H*W): free contiguous reshape (no transpose/concat/pad).
    flat = lambda t: t.reshape(t.shape[0], t.shape[1], HW)

    def batch_spec(c):
        return pl.BlockSpec((1, c, HW), lambda b: (b, 0, 0))

    def full_spec(arr):
        return pl.BlockSpec(arr.shape, lambda b: (0, 0))

    kernel = functools.partial(_convlstm_fused_kernel, H=H, W=W, hidden_dim=HD)

    out, h_next, c_next, cur_h = pl.pallas_call(
        kernel,
        out_shape=(
            jax.ShapeDtypeStruct((B, CO, HW), jnp.float32),
            jax.ShapeDtypeStruct((B, HD, HW), jnp.float32),
            jax.ShapeDtypeStruct((B, HD, HW), jnp.float32),
            jax.ShapeDtypeStruct((B, CH, HW), jnp.float32),
        ),
        grid=(B,),
        in_specs=[
            batch_spec(CX),      # x
            batch_spec(HD),      # h_cur
            batch_spec(CH),      # higher_h
            batch_spec(HD),      # c_cur
            full_spec(wg), full_spec(bg),
            full_spec(wo), full_spec(bo),
        ],
        out_specs=(
            batch_spec(CO),      # out
            batch_spec(HD),      # h_next
            batch_spec(HD),      # c_next
            batch_spec(CH),      # current_h
        ),
        scratch_shapes=[
            pltpu.VMEM((K1, HW), jnp.float32),   # im2col for the 3x3 conv
            pltpu.VMEM((K2, HW), jnp.float32),   # im2col for the 5x5 out_conv
        ],
        compiler_params=pltpu.CompilerParams(
            dimension_semantics=("parallel",)),  # megacore split over batch
    )(flat(x), flat(h_cur), flat(higher_h), flat(c_cur), wg, bg, wo, bo)

    unflat = lambda t: t.reshape(t.shape[0], t.shape[1], H, W)
    return unflat(out), (unflat(h_next), unflat(c_next)), unflat(cur_h)


# -----------------------------------------------------------------------------
# Parameters (raw HWIO weights + kernel-layout packing)
# -----------------------------------------------------------------------------
def init_params(key, input_dim, hidden_dim, higher_channel, out_dim):
    """Raw HWIO conv weights (same role as the PyTorch module's parameters)."""
    cin = input_dim + hidden_dim + higher_channel
    k = jax.random.split(key, 6)
    s = 0.1
    return {
        "w_gate": s * jax.random.normal(k[0], (3, 3, cin, 4 * hidden_dim),
                                        jnp.float32),
        "b_gate": s * jax.random.normal(k[1], (4 * hidden_dim,), jnp.float32),
        "w_curh": s * jax.random.normal(k[2], (3, 3, cin, higher_channel),
                                        jnp.float32),
        "b_curh": s * jax.random.normal(k[3], (higher_channel,), jnp.float32),
        "w_out": s * jax.random.normal(k[4], (5, 5, hidden_dim, out_dim),
                                       jnp.float32),
        "b_out": s * jax.random.normal(k[5], (out_dim,), jnp.float32),
    }


def pack_params(raw, input_dim, hidden_dim, higher_channel):
    """Pack raw HWIO weights into the kernel's fused, channel-major layout:
    one (4*Hd+Ch, 9*Cin_pad) bf16 gate/current_h matrix (gate order [i,f,o,g],
    per-tap input-channel order [h_cur, higher_h, x], zero-padded to 8) and one
    (out_dim, 25*Hd_pad) bf16 out_conv matrix.  Biases stay f32, shape (C, 1)."""
    CX, HD, CH = input_dim, hidden_dim, higher_channel
    CIN = CX + HD + CH
    NOUT = 4 * HD + CH

    w_cat = jnp.concatenate([raw["w_gate"], raw["w_curh"]], axis=-1)
    # reorder Cin from concat order [x, h, higher_h] -> kernel order [h, hh, x]
    w_re = jnp.concatenate(
        [w_cat[:, :, CX:CX + HD], w_cat[:, :, CX + HD:], w_cat[:, :, :CX]],
        axis=2)
    CIN_PAD = _round_up(CIN, 8)
    w_re = jnp.pad(w_re, ((0, 0), (0, 0), (0, CIN_PAD - CIN), (0, 0)))
    w_gate_k = w_re.reshape(9 * CIN_PAD, NOUT).T.astype(jnp.bfloat16)
    b_gate_k = jnp.concatenate([raw["b_gate"], raw["b_curh"]]).reshape(
        NOUT, 1).astype(jnp.float32)

    wo = raw["w_out"]
    CO = wo.shape[-1]
    HD_PAD = _round_up(HD, 8)
    wo_p = jnp.pad(wo, ((0, 0), (0, 0), (0, HD_PAD - HD), (0, 0)))
    w_out_k = wo_p.reshape(25 * HD_PAD, CO).T.astype(jnp.bfloat16)
    b_out_k = raw["b_out"].reshape(CO, 1).astype(jnp.float32)

    return {"w_gate_k": w_gate_k, "b_gate_k": b_gate_k,
            "w_out_k": w_out_k, "b_out_k": b_out_k}


# -----------------------------------------------------------------------------
# Pure-JAX (XLA) reference for correctness checking
# -----------------------------------------------------------------------------
def _reference_forward(x, h_cur, c_cur, higher_h, raw, hidden_dim):
    def conv(inp, w, b, pad):
        y = jax.lax.conv_general_dilated(
            inp, w, window_strides=(1, 1), padding=[(pad, pad), (pad, pad)],
            dimension_numbers=("NCHW", "HWIO", "NCHW"))
        return y + b.reshape(1, -1, 1, 1)

    combined = jnp.concatenate([x, h_cur, higher_h], axis=1)
    gates = conv(combined, raw["w_gate"], raw["b_gate"], 1)
    current_h = conv(combined, raw["w_curh"], raw["b_curh"], 1)
    cc_i, cc_f, cc_o, cc_g = jnp.split(gates, 4, axis=1)
    i = jax.nn.sigmoid(cc_i)
    f = jax.nn.sigmoid(cc_f)
    o = jax.nn.sigmoid(cc_o)
    g = jnp.tanh(cc_g)
    c_next = f * c_cur + i * g
    h_next = o * jnp.tanh(c_next)
    y = conv(h_next, raw["w_out"], raw["b_out"], 2)
    out = jnp.where(y >= 0.0, y, 0.01 * y)
    return out, (h_next, c_next), current_h


if __name__ == "__main__":
    B, H, W = 2, 16, 16
    input_dim, hidden_dim, higher_channel, out_dim = 4, 8, 8, 4

    key = jax.random.PRNGKey(0)
    kx, kh, kc, ku, kp = jax.random.split(key, 5)
    x = jax.random.normal(kx, (B, input_dim, H, W), jnp.float32)       # NCHW
    h_cur = jax.random.normal(kh, (B, hidden_dim, H, W), jnp.float32)
    c_cur = jax.random.normal(kc, (B, hidden_dim, H, W), jnp.float32)
    higher_h = jax.random.normal(ku, (B, higher_channel, H, W), jnp.float32)

    raw = init_params(kp, input_dim, hidden_dim, higher_channel, out_dim)
    packed = pack_params(raw, input_dim, hidden_dim, higher_channel)

    out, (h_next, c_next), current_h = conv_lstm_cell_forward(
        x, h_cur, c_cur, higher_h, packed, hidden_dim)
    jax.block_until_ready((out, h_next, c_next, current_h))

    assert out.shape == (B, out_dim, H, W)
    assert h_next.shape == (B, hidden_dim, H, W)
    assert c_next.shape == (B, hidden_dim, H, W)
    assert current_h.shape == (B, higher_channel, H, W)

    # Correctness vs. the pure-JAX reference (loose tolerance: the kernel feeds
    # the MXU bf16 operands while the reference stays in f32 end to end).
    r_out, (r_h, r_c), r_ch = _reference_forward(
        x, h_cur, c_cur, higher_h, raw, hidden_dim)
    for got, want in ((out, r_out), (h_next, r_h), (c_next, r_c),
                      (current_h, r_ch)):
        assert float(jnp.max(jnp.abs(got - want))) < 0.15

    print("KERNEL_OK")
</pallas_src>

<mosaic_0001>
module attributes {stable_mosaic.version = 11 : i64} {
  func.func @_convlstm_fused_kernel(%arg0: i32, %arg1: memref<1x4x256xf32, #tpu.memory_space<vmem>>, %arg2: memref<1x8x256xf32, #tpu.memory_space<vmem>>, %arg3: memref<1x8x256xf32, #tpu.memory_space<vmem>>, %arg4: memref<1x8x256xf32, #tpu.memory_space<vmem>>, %arg5: memref<40x216xbf16, #tpu.memory_space<vmem>>, %arg6: memref<40x1xf32, #tpu.memory_space<vmem>>, %arg7: memref<4x200xbf16, #tpu.memory_space<vmem>>, %arg8: memref<4x1xf32, #tpu.memory_space<vmem>>, %arg9: memref<1x4x256xf32, #tpu.memory_space<vmem>>, %arg10: memref<1x8x256xf32, #tpu.memory_space<vmem>>, %arg11: memref<1x8x256xf32, #tpu.memory_space<vmem>>, %arg12: memref<1x8x256xf32, #tpu.memory_space<vmem>>, %arg13: memref<216x256xf32, #tpu.memory_space<vmem>>, %arg14: memref<200x256xf32, #tpu.memory_space<vmem>>) attributes {dimension_semantics = [#tpu.dimension_semantics<parallel>], iteration_bounds = array<i64: 2>, scalar_prefetch = 0 : i64, scratch_operands = 2 : i64, tpu.core_type = #tpu.core_type<tc>, window_params = [{transform_indices = @transform_0, window_bounds = array<i64: 1, 4, 256>}, {transform_indices = @transform_1, window_bounds = array<i64: 1, 8, 256>}, {transform_indices = @transform_2, window_bounds = array<i64: 1, 8, 256>}, {transform_indices = @transform_3, window_bounds = array<i64: 1, 8, 256>}, {pipeline_mode = #tpu.pipeline_mode<synchronous>, transform_indices = @transform_4, window_bounds = array<i64: 40, 216>}, {pipeline_mode = #tpu.pipeline_mode<synchronous>, transform_indices = @transform_5, window_bounds = array<i64: 40, 1>}, {pipeline_mode = #tpu.pipeline_mode<synchronous>, transform_indices = @transform_6, window_bounds = array<i64: 4, 200>}, {pipeline_mode = #tpu.pipeline_mode<synchronous>, transform_indices = @transform_7, window_bounds = array<i64: 4, 1>}, {transform_indices = @transform_8, window_bounds = array<i64: 1, 4, 256>}, {transform_indices = @transform_9, window_bounds = array<i64: 1, 8, 256>}, {transform_indices = @transform_10, window_bounds = array<i64: 1, 8, 256>}, {transform_indices = @transform_11, window_bounds = array<i64: 1, 8, 256>}]} {
    %c0 = arith.constant 0 : index
    %c0_0 = arith.constant 0 : index
    %c0_1 = arith.constant 0 : index
    %0 = vector.load %arg2[%c0, %c0_0, %c0_1] : memref<1x8x256xf32, #tpu.memory_space<vmem>>, vector<1x8x239xf32>
    %1 = vector.shape_cast %0 : vector<1x8x239xf32> to vector<8x239xf32>
    %2 = tpu.iota {dimensions = array<i32: 1>} : vector<1x239xi32>
    %c17_i32 = arith.constant 17 : i32
    %3 = vector.broadcast %c17_i32 : i32 to vector<1x239xi32>
    %4 = arith.addi %2, %3 : vector<1x239xi32>
    %c16_i32 = arith.constant 16 : i32
    %5 = vector.broadcast %c16_i32 : i32 to vector<1x239xi32>
    %6 = arith.cmpi sge, %4, %5 : vector<1x239xi32>
    %c15_i32 = arith.constant 15 : i32
    %7 = vector.broadcast %c15_i32 : i32 to vector<1x239xi32>
    %8 = arith.andi %4, %7 : vector<1x239xi32>
    %c1_i32 = arith.constant 1 : i32
    %9 = vector.broadcast %c1_i32 : i32 to vector<1x239xi32>
    %10 = arith.cmpi sge, %8, %9 : vector<1x239xi32>
    %11 = arith.andi %6, %10 : vector<1x239xi1>
    %cst = arith.constant 0.000000e+00 : f32
    %12 = vector.shape_cast %11 : vector<1x239xi1> to vector<1x239xi1>
    %13 = vector.broadcast %12 : vector<1x239xi1> to vector<8x239xi1>
    %14 = vector.broadcast %cst : f32 to vector<8x239xf32>
    %15 = arith.select %13, %1, %14 : vector<8x239xi1>, vector<8x239xf32>
    %c0_2 = arith.constant 0 : index
    %c17 = arith.constant 17 : index
    %16 = vector.load %arg13[%c0_2, %c17] : memref<216x256xf32, #tpu.memory_space<vmem>>, vector<8x239xf32>
    tpu.vector_store %arg13[%c0_2, %c17], %15 {strides = array<i32>} : memref<216x256xf32, #tpu.memory_space<vmem>>, vector<8x239xf32>,
    %cst_3 = arith.constant 0.000000e+00 : f32
    %17 = vector.broadcast %cst_3 : f32 to vector<8x17xf32>
    %c0_4 = arith.constant 0 : index
    %c0_5 = arith.constant 0 : index
    %18 = vector.load %arg13[%c0_4, %c0_5] : memref<216x256xf32, #tpu.memory_space<vmem>>, vector<8x17xf32>
    tpu.vector_store %arg13[%c0_4, %c0_5], %17 {strides = array<i32>} : memref<216x256xf32, #tpu.memory_space<vmem>>, vector<8x17xf32>,
    %c0_6 = arith.constant 0 : index
    %c0_7 = arith.constant 0 : index
    %c0_8 = arith.constant 0 : index
    %19 = vector.load %arg3[%c0_6, %c0_7, %c0_8] : memref<1x8x256xf32, #tpu.memory_space<vmem>>, vector<1x8x239xf32>
    %20 = vector.shape_cast %19 : vector<1x8x239xf32> to vector<8x239xf32>
    %21 = tpu.iota {dimensions = array<i32: 1>} : vector<1x239xi32>
    %c17_i32_9 = arith.constant 17 : i32
    %22 = vector.broadcast %c17_i32_9 : i32 to vector<1x239xi32>
    %23 = arith.addi %21, %22 : vector<1x239xi32>
    %c16_i32_10 = arith.constant 16 : i32
    %24 = vector.broadcast %c16_i32_10 : i32 to vector<1x239xi32>
    %25 = arith.cmpi sge, %23, %24 : vector<1x239xi32>
    %c15_i32_11 = arith.constant 15 : i32
    %26 = vector.broadcast %c15_i32_11 : i32 to vector<1x239xi32>
    %27 = arith.andi %23, %26 : vector<1x239xi32>
    %c1_i32_12 = arith.constant 1 : i32
    %28 = vector.broadcast %c1_i32_12 : i32 to vector<1x239xi32>
    %29 = arith.cmpi sge, %27, %28 : vector<1x239xi32>
    %30 = arith.andi %25, %29 : vector<1x239xi1>
    %cst_13 = arith.constant 0.000000e+00 : f32
    %31 = vector.shape_cast %30 : vector<1x239xi1> to vector<1x239xi1>
    %32 = vector.broadcast %31 : vector<1x239xi1> to vector<8x239xi1>
    %33 = vector.broadcast %cst_13 : f32 to vector<8x239xf32>
    %34 = arith.select %32, %20, %33 : vector<8x239xi1>, vector<8x239xf32>
    %c8 = arith.constant 8 : index
    %c17_14 = arith.constant 17 : index
    %35 = vector.load %arg13[%c8, %c17_14] : memref<216x256xf32, #tpu.memory_space<vmem>>, vector<8x239xf32>
    tpu.vector_store %arg13[%c8, %c17_14], %34 {strides = array<i32>} : memref<216x256xf32, #tpu.memory_space<vmem>>, vector<8x239xf32>,
    %cst_15 = arith.constant 0.000000e+00 : f32
    %36 = vector.broadcast %cst_15 : f32 to vector<8x17xf32>
    %c8_16 = arith.constant 8 : index
    %c0_17 = arith.constant 0 : index
    %37 = vector.load %arg13[%c8_16, %c0_17] : memref<216x256xf32, #tpu.memory_space<vmem>>, vector<8x17xf32>
    tpu.vector_store %arg13[%c8_16, %c0_17], %36 {strides = array<i32>} : memref<216x256xf32, #tpu.memory_space<vmem>>, vector<8x17xf32>,
    %c0_18 = arith.constant 0 : index
    %c0_19 = arith.constant 0 : index
    %c0_20 = arith.constant 0 : index
    %38 = vector.load %arg1[%c0_18, %c0_19, %c0_20] : memref<1x4x256xf32, #tpu.memory_space<vmem>>, vector<1x4x239xf32>
    %39 = vector.shape_cast %38 : vector<1x4x239xf32> to vector<4x239xf32>
    %40 = tpu.iota {dimensions = array<i32: 1>} : vector<1x239xi32>
    %c17_i32_21 = arith.constant 17 : i32
    %41 = vector.broadcast %c17_i32_21 : i32 to vector<1x239xi32>
    %42 = arith.addi %40, %41 : vector<1x239xi32>
    %c16_i32_22 = arith.constant 16 : i32
    %43 = vector.broadcast %c16_i32_22 : i32 to vector<1x239xi32>
    %44 = arith.cmpi sge, %42, %43 : vector<1x239xi32>
    %c15_i32_23 = arith.constant 15 : i32
    %45 = vector.broadcast %c15_i32_23 : i32 to vector<1x239xi32>
    %46 = arith.andi %42, %45 : vector<1x239xi32>
    %c1_i32_24 = arith.constant 1 : i32
    %47 = vector.broadcast %c1_i32_24 : i32 to vector<1x239xi32>
    %48 = arith.cmpi sge, %46, %47 : vector<1x239xi32>
    %49 = arith.andi %44, %48 : vector<1x239xi1>
    %cst_25 = arith.constant 0.000000e+00 : f32
    %50 = vector.shape_cast %49 : vector<1x239xi1> to vector<1x239xi1>
    %51 = vector.broadcast %50 : vector<1x239xi1> to vector<4x239xi1>
    %52 = vector.broadcast %cst_25 : f32 to vector<4x239xf32>
    %53 = arith.select %51, %39, %52 : vector<4x239xi1>, vector<4x239xf32>
    %c16 = arith.constant 16 : index
    %c17_26 = arith.constant 17 : index
    %54 = vector.load %arg13[%c16, %c17_26] : memref<216x256xf32, #tpu.memory_space<vmem>>, vector<4x239xf32>
    tpu.vector_store %arg13[%c16, %c17_26], %53 {strides = array<i32>} : memref<216x256xf32, #tpu.memory_space<vmem>>, vector<4x239xf32>,
    %cst_27 = arith.constant 0.000000e+00 : f32
    %55 = vector.broadcast %cst_27 : f32 to vector<4x17xf32>
    %c16_28 = arith.constant 16 : index
    %c0_29 = arith.constant 0 : index
    %56 = vector.load %arg13[%c16_28, %c0_29] : memref<216x256xf32, #tpu.memory_space<vmem>>, vector<4x17xf32>
    tpu.vector_store %arg13[%c16_28, %c0_29], %55 {strides = array<i32>} : memref<216x256xf32, #tpu.memory_space<vmem>>, vector<4x17xf32>,
    %cst_30 = arith.constant 0.000000e+00 : f32
    %57 = vector.broadcast %cst_30 : f32 to vector<4x256xf32>
    %c20 = arith.constant 20 : index
    %c0_31 = arith.constant 0 : index
    %58 = vector.load %arg13[%c20, %c0_31] : memref<216x256xf32, #tpu.memory_space<vmem>>, vector<4x256xf32>
    tpu.vector_store %arg13[%c20, %c0_31], %57 {strides = array<i32>} : memref<216x256xf32, #tpu.memory_space<vmem>>, vector<4x256xf32>,
    %c0_32 = arith.constant 0 : index
    %c0_33 = arith.constant 0 : index
    %c0_34 = arith.constant 0 : index
    %59 = vector.load %arg2[%c0_32, %c0_33, %c0_34] : memref<1x8x256xf32, #tpu.memory_space<vmem>>, vector<1x8x240xf32>
    %60 = vector.shape_cast %59 : vector<1x8x240xf32> to vector<8x240xf32>
    %61 = tpu.iota {dimensions = array<i32: 1>} : vector<1x240xi32>
    %c16_i32_35 = arith.constant 16 : i32
    %62 = vector.broadcast %c16_i32_35 : i32 to vector<1x240xi32>
    %63 = arith.addi %61, %62 : vector<1x240xi32>
    %c16_i32_36 = arith.constant 16 : i32
    %64 = vector.broadcast %c16_i32_36 : i32 to vector<1x240xi32>
    %65 = arith.cmpi sge, %63, %64 : vector<1x240xi32>
    %cst_37 = arith.constant 0.000000e+00 : f32
    %66 = vector.shape_cast %65 : vector<1x240xi1> to vector<1x240xi1>
    %67 = vector.broadcast %66 : vector<1x240xi1> to vector<8x240xi1>
    %68 = vector.broadcast %cst_37 : f32 to vector<8x240xf32>
    %69 = arith.select %67, %60, %68 : vector<8x240xi1>, vector<8x240xf32>
    %c24 = arith.constant 24 : index
    %c16_38 = arith.constant 16 : index
    %70 = vector.load %arg13[%c24, %c16_38] : memref<216x256xf32, #tpu.memory_space<vmem>>, vector<8x240xf32>
    tpu.vector_store %arg13[%c24, %c16_38], %69 {strides = array<i32>} : memref<216x256xf32, #tpu.memory_space<vmem>>, vector<8x240xf32>,
    %cst_39 = arith.constant 0.000000e+00 : f32
    %71 = vector.broadcast %cst_39 : f32 to vector<8x16xf32>
    %c24_40 = arith.constant 24 : index
    %c0_41 = arith.constant 0 : index
    %72 = vector.load %arg13[%c24_40, %c0_41] : memref<216x256xf32, #tpu.memory_space<vmem>>, vector<8x16xf32>
    tpu.vector_store %arg13[%c24_40, %c0_41], %71 {strides = array<i32>} : memref<216x256xf32, #tpu.memory_space<vmem>>, vector<8x16xf32>,
    %c0_42 = arith.constant 0 : index
    %c0_43 = arith.constant 0 : index
    %c0_44 = arith.constant 0 : index
    %73 = vector.load %arg3[%c0_42, %c0_43, %c0_44] : memref<1x8x256xf32, #tpu.memory_space<vmem>>, vector<1x8x240xf32>
    %74 = vector.shape_cast %73 : vector<1x8x240xf32> to vector<8x240xf32>
    %75 = tpu.iota {dimensions = array<i32: 1>} : vector<1x240xi32>
    %c16_i32_45 = arith.constant 16 : i32
    %76 = vector.broadcast %c16_i32_45 : i32 to vector<1x240xi32>
    %77 = arith.addi %75, %76 : vector<1x240xi32>
    %c16_i32_46 = arith.constant 16 : i32
    %78 = vector.broadcast %c16_i32_46 : i32 to vector<1x240xi32>
    %79 = arith.cmpi sge, %77, %78 : vector<1x240xi32>
    %cst_47 = arith.constant 0.000000e+00 : f32
    %80 = vector.shape_cast %79 : vector<1x240xi1> to vector<1x240xi1>
    %81 = vector.broadcast %80 : vector<1x240xi1> to vector<8x240xi1>
    %82 = vector.broadcast %cst_47 : f32 to vector<8x240xf32>
    %83 = arith.select %81, %74, %82 : vector<8x240xi1>, vector<8x240xf32>
    %c32 = arith.constant 32 : index
    %c16_48 = arith.constant 16 : index
    %84 = vector.load %arg13[%c32, %c16_48] : memref<216x256xf32, #tpu.memory_space<vmem>>, vector<8x240xf32>
    tpu.vector_store %arg13[%c32, %c16_48], %83 {strides = array<i32>} : memref<216x256xf32, #tpu.memory_space<vmem>>, vector<8x240xf32>,
    %cst_49 = arith.constant 0.000000e+00 : f32
    %85 = vector.broadcast %cst_49 : f32 to vector<8x16xf32>
    %c32_50 = arith.constant 32 : index
    %c0_51 = arith.constant 0 : index
    %86 = vector.load %arg13[%c32_50, %c0_51] : memref<216x256xf32, #tpu.memory_space<vmem>>, vector<8x16xf32>
    tpu.vector_store %arg13[%c32_50, %c0_51], %85 {strides = array<i32>} : memref<216x256xf32, #tpu.memory_space<vmem>>, vector<8x16xf32>,
    %c0_52 = arith.constant 0 : index
    %c0_53 = arith.constant 0 : index
    %c0_54 = arith.constant 0 : index
    %87 = vector.load %arg1[%c0_52, %c0_53, %c0_54] : memref<1x4x256xf32, #tpu.memory_space<vmem>>, vector<1x4x240xf32>
    %88 = vector.shape_cast %87 : vector<1x4x240xf32> to vector<4x240xf32>
    %89 = tpu.iota {dimensions = array<i32: 1>} : vector<1x240xi32>
    %c16_i32_55 = arith.constant 16 : i32
    %90 = vector.broadcast %c16_i32_55 : i32 to vector<1x240xi32>
    %91 = arith.addi %89, %90 : vector<1x240xi32>
    %c16_i32_56 = arith.constant 16 : i32
    %92 = vector.broadcast %c16_i32_56 : i32 to vector<1x240xi32>
    %93 = arith.cmpi sge, %91, %92 : vector<1x240xi32>
    %cst_57 = arith.constant 0.000000e+00 : f32
    %94 = vector.shape_cast %93 : vector<1x240xi1> to vector<1x240xi1>
    %95 = vector.broadcast %94 : vector<1x240xi1> to vector<4x240xi1>
    %96 = vector.broadcast %cst_57 : f32 to vector<4x240xf32>
    %97 = arith.select %95, %88, %96 : vector<4x240xi1>, vector<4x240xf32>
    %c40 = arith.constant 40 : index
    %c16_58 = arith.constant 16 : index
    %98 = vector.load %arg13[%c40, %c16_58] : memref<216x256xf32, #tpu.memory_space<vmem>>, vector<4x240xf32>
    tpu.vector_store %arg13[%c40, %c16_58], %97 {strides = array<i32>} : memref<216x256xf32, #tpu.memory_space<vmem>>, vector<4x240xf32>,
    %cst_59 = arith.constant 0.000000e+00 : f32
    %99 = vector.broadcast %cst_59 : f32 to vector<4x16xf32>
    %c40_60 = arith.constant 40 : index
    %c0_61 = arith.constant 0 : index
    %100 = vector.load %arg13[%c40_60, %c0_61] : memref<216x256xf32, #tpu.memory_space<vmem>>, vector<4x16xf32>
    tpu.vector_store %arg13[%c40_60, %c0_61], %99 {strides = array<i32>} : memref<216x256xf32, #tpu.memory_space<vmem>>, vector<4x16xf32>,
    %cst_62 = arith.constant 0.000000e+00 : f32
    %101 = vector.broadcast %cst_62 : f32 to vector<4x256xf32>
    %c44 = arith.constant 44 : index
    %c0_63 = arith.constant 0 : index
    %102 = vector.load %arg13[%c44, %c0_63] : memref<216x256xf32, #tpu.memory_space<vmem>>, vector<4x256xf32>
    tpu.vector_store %arg13[%c44, %c0_63], %101 {strides = array<i32>} : memref<216x256xf32, #tpu.memory_space<vmem>>, vector<4x256xf32>,
    %c0_64 = arith.constant 0 : index
    %c0_65 = arith.constant 0 : index
    %c0_66 = arith.constant 0 : index
    %103 = vector.load %arg2[%c0_64, %c0_65, %c0_66] : memref<1x8x256xf32, #tpu.memory_space<vmem>>, vector<1x8x241xf32>
    %104 = vector.shape_cast %103 : vector<1x8x241xf32> to vector<8x241xf32>
    %105 = tpu.iota {dimensions = array<i32: 1>} : vector<1x241xi32>
    %c15_i32_67 = arith.constant 15 : i32
    %106 = vector.broadcast %c15_i32_67 : i32 to vector<1x241xi32>
    %107 = arith.addi %105, %106 : vector<1x241xi32>
    %c16_i32_68 = arith.constant 16 : i32
    %108 = vector.broadcast %c16_i32_68 : i32 to vector<1x241xi32>
    %109 = arith.cmpi sge, %107, %108 : vector<1x241xi32>
    %c15_i32_69 = arith.constant 15 : i32
    %110 = vector.broadcast %c15_i32_69 : i32 to vector<1x241xi32>
    %111 = arith.andi %107, %110 : vector<1x241xi32>
    %c15_i32_70 = arith.constant 15 : i32
    %112 = vector.broadcast %c15_i32_70 : i32 to vector<1x241xi32>
    %113 = arith.cmpi slt, %111, %112 : vector<1x241xi32>
    %114 = arith.andi %109, %113 : vector<1x241xi1>
    %cst_71 = arith.constant 0.000000e+00 : f32
    %115 = vector.shape_cast %114 : vector<1x241xi1> to vector<1x241xi1>
    %116 = vector.broadcast %115 : vector<1x241xi1> to vector<8x241xi1>
    %117 = vector.broadcast %cst_71 : f32 to vector<8x241xf32>
    %118 = arith.select %116, %104, %117 : vector<8x241xi1>, vector<8x241xf32>
    %c48 = arith.constant 48 : index
    %c15 = arith.constant 15 : index
    %119 = vector.load %arg13[%c48, %c15] : memref<216x256xf32, #tpu.memory_space<vmem>>, vector<8x241xf32>
    tpu.vector_store %arg13[%c48, %c15], %118 {strides = array<i32>} : memref<216x256xf32, #tpu.memory_space<vmem>>, vector<8x241xf32>,
    %cst_72 = arith.constant 0.000000e+00 : f32
    %120 = vector.broadcast %cst_72 : f32 to vector<8x15xf32>
    %c48_73 = arith.constant 48 : index
    %c0_74 = arith.constant 0 : index
    %121 = vector.load %arg13[%c48_73, %c0_74] : memref<216x256xf32, #tpu.memory_space<vmem>>, vector<8x15xf32>
    tpu.vector_store %arg13[%c48_73, %c0_74], %120 {strides = array<i32>} : memref<216x256xf32, #tpu.memory_space<vmem>>, vector<8x15xf32>,
    %c0_75 = arith.constant 0 : index
    %c0_76 = arith.constant 0 : index
    %c0_77 = arith.constant 0 : index
    %122 = vector.load %arg3[%c0_75, %c0_76, %c0_77] : memref<1x8x256xf32, #tpu.memory_space<vmem>>, vector<1x8x241xf32>
    %123 = vector.shape_cast %122 : vector<1x8x241xf32> to vector<8x241xf32>
    %124 = tpu.iota {dimensions = array<i32: 1>} : vector<1x241xi32>
    %c15_i32_78 = arith.constant 15 : i32
    %125 = vector.broadcast %c15_i32_78 : i32 to vector<1x241xi32>
    %126 = arith.addi %124, %125 : vector<1x241xi32>
    %c16_i32_79 = arith.constant 16 : i32
    %127 = vector.broadcast %c16_i32_79 : i32 to vector<1x241xi32>
    %128 = arith.cmpi sge, %126, %127 : vector<1x241xi32>
    %c15_i32_80 = arith.constant 15 : i32
    %129 = vector.broadcast %c15_i32_80 : i32 to vector<1x241xi32>
    %130 = arith.andi %126, %129 : vector<1x241xi32>
    %c15_i32_81 = arith.constant 15 : i32
    %131 = vector.broadcast %c15_i32_81 : i32 to vector<1x241xi32>
    %132 = arith.cmpi slt, %130, %131 : vector<1x241xi32>
    %133 = arith.andi %128, %132 : vector<1x241xi1>
    %cst_82 = arith.constant 0.000000e+00 : f32
    %134 = vector.shape_cast %133 : vector<1x241xi1> to vector<1x241xi1>
    %135 = vector.broadcast %134 : vector<1x241xi1> to vector<8x241xi1>
    %136 = vector.broadcast %cst_82 : f32 to vector<8x241xf32>
    %137 = arith.select %135, %123, %136 : vector<8x241xi1>, vector<8x241xf32>
    %c56 = arith.constant 56 : index
    %c15_83 = arith.constant 15 : index
    %138 = vector.load %arg13[%c56, %c15_83] : memref<216x256xf32, #tpu.memory_space<vmem>>, vector<8x241xf32>
    tpu.vector_store %arg13[%c56, %c15_83], %137 {strides = array<i32>} : memref<216x256xf32, #tpu.memory_space<vmem>>, vector<8x241xf32>,
    %cst_84 = arith.constant 0.000000e+00 : f32
    %139 = vector.broadcast %cst_84 : f32 to vector<8x15xf32>
    %c56_85 = arith.constant 56 : index
    %c0_86 = arith.constant 0 : index
    %140 = vector.load %arg13[%c56_85, %c0_86] : memref<216x256xf32, #tpu.memory_space<vmem>>, vector<8x15xf32>
    tpu.vector_store %arg13[%c56_85, %c0_86], %139 {strides = array<i32>} : memref<216x256xf32, #tpu.memory_space<vmem>>, vector<8x15xf32>,
    %c0_87 = arith.constant 0 : index
    %c0_88 = arith.constant 0 : index
    %c0_89 = arith.constant 0 : index
    %141 = vector.load %arg1[%c0_87, %c0_88, %c0_89] : memref<1x4x256xf32, #tpu.memory_space<vmem>>, vector<1x4x241xf32>
    %142 = vector.shape_cast %141 : vector<1x4x241xf32> to vector<4x241xf32>
    %143 = tpu.iota {dimensions = array<i32: 1>} : vector<1x241xi32>
    %c15_i32_90 = arith.constant 15 : i32
    %144 = vector.broadcast %c15_i32_90 : i32 to vector<1x241xi32>
    %145 = arith.addi %143, %144 : vector<1x241xi32>
    %c16_i32_91 = arith.constant 16 : i32
    %146 = vector.broadcast %c16_i32_91 : i32 to vector<1x241xi32>
    %147 = arith.cmpi sge, %145, %146 : vector<1x241xi32>
    %c15_i32_92 = arith.constant 15 : i32
    %148 = vector.broadcast %c15_i32_92 : i32 to vector<1x241xi32>
    %149 = arith.andi %145, %148 : vector<1x241xi32>
    %c15_i32_93 = arith.constant 15 : i32
    %150 = vector.broadcast %c15_i32_93 : i32 to vector<1x241xi32>
    %151 = arith.cmpi slt, %149, %150 : vector<1x241xi32>
    %152 = arith.andi %147, %151 : vector<1x241xi1>
    %cst_94 = arith.constant 0.000000e+00 : f32
    %153 = vector.shape_cast %152 : vector<1x241xi1> to vector<1x241xi1>
    %154 = vector.broadcast %153 : vector<1x241xi1> to vector<4x241xi1>
    %155 = vector.broadcast %cst_94 : f32 to vector<4x241xf32>
    %156 = arith.select %154, %142, %155 : vector<4x241xi1>, vector<4x241xf32>
    %c64 = arith.constant 64 : index
    %c15_95 = arith.constant 15 : index
    %157 = vector.load %arg13[%c64, %c15_95] : memref<216x256xf32, #tpu.memory_space<vmem>>, vector<4x241xf32>
    tpu.vector_store %arg13[%c64, %c15_95], %156 {strides = array<i32>} : memref<216x256xf32, #tpu.memory_space<vmem>>, vector<4x241xf32>,
    %cst_96 = arith.constant 0.000000e+00 : f32
    %158 = vector.broadcast %cst_96 : f32 to vector<4x15xf32>
    %c64_97 = arith.constant 64 : index
    %c0_98 = arith.constant 0 : index
    %159 = vector.load %arg13[%c64_97, %c0_98] : memref<216x256xf32, #tpu.memory_space<vmem>>, vector<4x15xf32>
    tpu.vector_store %arg13[%c64_97, %c0_98], %158 {strides = array<i32>} : memref<216x256xf32, #tpu.memory_space<vmem>>, vector<4x15xf32>,
    %cst_99 = arith.constant 0.000000e+00 : f32
    %160 = vector.broadcast %cst_99 : f32 to vector<4x256xf32>
    %c68 = arith.constant 68 : index
    %c0_100 = arith.constant 0 : index
    %161 = vector.load %arg13[%c68, %c0_100] : memref<216x256xf32, #tpu.memory_space<vmem>>, vector<4x256xf32>
    tpu.vector_store %arg13[%c68, %c0_100], %160 {strides = array<i32>} : memref<216x256xf32, #tpu.memory_space<vmem>>, vector<4x256xf32>,
    %c0_101 = arith.constant 0 : index
    %c0_102 = arith.constant 0 : index
    %c0_103 = arith.constant 0 : index
    %162 = vector.load %arg2[%c0_101, %c0_102, %c0_103] : memref<1x8x256xf32, #tpu.memory_space<vmem>>, vector<1x8x255xf32>
    %163 = vector.shape_cast %162 : vector<1x8x255xf32> to vector<8x255xf32>
    %164 = tpu.iota {dimensions = array<i32: 1>} : vector<1x255xi32>
    %c1_i32_104 = arith.constant 1 : i32
    %165 = vector.broadcast %c1_i32_104 : i32 to vector<1x255xi32>
    %166 = arith.addi %164, %165 : vector<1x255xi32>
    %c15_i32_105 = arith.constant 15 : i32
    %167 = vector.broadcast %c15_i32_105 : i32 to vector<1x255xi32>
    %168 = arith.andi %166, %167 : vector<1x255xi32>
    %c1_i32_106 = arith.constant 1 : i32
    %169 = vector.broadcast %c1_i32_106 : i32 to vector<1x255xi32>
    %170 = arith.cmpi sge, %168, %169 : vector<1x255xi32>
    %cst_107 = arith.constant 0.000000e+00 : f32
    %171 = vector.shape_cast %170 : vector<1x255xi1> to vector<1x255xi1>
    %172 = vector.broadcast %171 : vector<1x255xi1> to vector<8x255xi1>
    %173 = vector.broadcast %cst_107 : f32 to vector<8x255xf32>
    %174 = arith.select %172, %163, %173 : vector<8x255xi1>, vector<8x255xf32>
    %c72 = arith.constant 72 : index
    %c1 = arith.constant 1 : index
    %175 = vector.load %arg13[%c72, %c1] : memref<216x256xf32, #tpu.memory_space<vmem>>, vector<8x255xf32>
    tpu.vector_store %arg13[%c72, %c1], %174 {strides = array<i32>} : memref<216x256xf32, #tpu.memory_space<vmem>>, vector<8x255xf32>,
    %cst_108 = arith.constant 0.000000e+00 : f32
    %176 = vector.broadcast %cst_108 : f32 to vector<8x1xf32>
    %c72_109 = arith.constant 72 : index
    %c0_110 = arith.constant 0 : index
    %177 = vector.load %arg13[%c72_109, %c0_110] : memref<216x256xf32, #tpu.memory_space<vmem>>, vector<8x1xf32>
    tpu.vector_store %arg13[%c72_109, %c0_110], %176 {strides = array<i32>} : memref<216x256xf32, #tpu.memory_space<vmem>>, vector<8x1xf32>,
    %c0_111 = arith.constant 0 : index
    %c0_112 = arith.constant 0 : index
    %c0_113 = arith.constant 0 : index
    %178 = vector.load %arg3[%c0_111, %c0_112, %c0_113] : memref<1x8x256xf32, #tpu.memory_space<vmem>>, vector<1x8x255xf32>
    %179 = vector.shape_cast %178 : vector<1x8x255xf32> to vector<8x255xf32>
    %180 = tpu.iota {dimensions = array<i32: 1>} : vector<1x255xi32>
    %c1_i32_114 = arith.constant 1 : i32
    %181 = vector.broadcast %c1_i32_114 : i32 to vector<1x255xi32>
    %182 = arith.addi %180, %181 : vector<1x255xi32>
    %c15_i32_115 = arith.constant 15 : i32
    %183 = vector.broadcast %c15_i32_115 : i32 to vector<1x255xi32>
    %184 = arith.andi %182, %183 : vector<1x255xi32>
    %c1_i32_116 = arith.constant 1 : i32
    %185 = vector.broadcast %c1_i32_116 : i32 to vector<1x255xi32>
    %186 = arith.cmpi sge, %184, %185 : vector<1x255xi32>
    %cst_117 = arith.constant 0.000000e+00 : f32
    %187 = vector.shape_cast %186 : vector<1x255xi1> to vector<1x255xi1>
    %188 = vector.broadcast %187 : vector<1x255xi1> to vector<8x255xi1>
    %189 = vector.broadcast %cst_117 : f32 to vector<8x255xf32>
    %190 = arith.select %188, %179, %189 : vector<8x255xi1>, vector<8x255xf32>
    %c80 = arith.constant 80 : index
    %c1_118 = arith.constant 1 : index
    %191 = vector.load %arg13[%c80, %c1_118] : memref<216x256xf32, #tpu.memory_space<vmem>>, vector<8x255xf32>
    tpu.vector_store %arg13[%c80, %c1_118], %190 {strides = array<i32>} : memref<216x256xf32, #tpu.memory_space<vmem>>, vector<8x255xf32>,
    %cst_119 = arith.constant 0.000000e+00 : f32
    %192 = vector.broadcast %cst_119 : f32 to vector<8x1xf32>
    %c80_120 = arith.constant 80 : index
    %c0_121 = arith.constant 0 : index
    %193 = vector.load %arg13[%c80_120, %c0_121] : memref<216x256xf32, #tpu.memory_space<vmem>>, vector<8x1xf32>
    tpu.vector_store %arg13[%c80_120, %c0_121], %192 {strides = array<i32>} : memref<216x256xf32, #tpu.memory_space<vmem>>, vector<8x1xf32>,
    %c0_122 = arith.constant 0 : index
    %c0_123 = arith.constant 0 : index
    %c0_124 = arith.constant 0 : index
    %194 = vector.load %arg1[%c0_122, %c0_123, %c0_124] : memref<1x4x256xf32, #tpu.memory_space<vmem>>, vector<1x4x255xf32>
    %195 = vector.shape_cast %194 : vector<1x4x255xf32> to vector<4x255xf32>
    %196 = tpu.iota {dimensions = array<i32: 1>} : vector<1x255xi32>
    %c1_i32_125 = arith.constant 1 : i32
    %197 = vector.broadcast %c1_i32_125 : i32 to vector<1x255xi32>
    %198 = arith.addi %196, %197 : vector<1x255xi32>
    %c15_i32_126 = arith.constant 15 : i32
    %199 = vector.broadcast %c15_i32_126 : i32 to vector<1x255xi32>
    %200 = arith.andi %198, %199 : vector<1x255xi32>
    %c1_i32_127 = arith.constant 1 : i32
    %201 = vector.broadcast %c1_i32_127 : i32 to vector<1x255xi32>
    %202 = arith.cmpi sge, %200, %201 : vector<1x255xi32>
    %cst_128 = arith.constant 0.000000e+00 : f32
    %203 = vector.shape_cast %202 : vector<1x255xi1> to vector<1x255xi1>
    %204 = vector.broadcast %203 : vector<1x255xi1> to vector<4x255xi1>
    %205 = vector.broadcast %cst_128 : f32 to vector<4x255xf32>
    %206 = arith.select %204, %195, %205 : vector<4x255xi1>, vector<4x255xf32>
    %c88 = arith.constant 88 : index
    %c1_129 = arith.constant 1 : index
    %207 = vector.load %arg13[%c88, %c1_129] : memref<216x256xf32, #tpu.memory_space<vmem>>, vector<4x255xf32>
    tpu.vector_store %arg13[%c88, %c1_129], %206 {strides = array<i32>} : memref<216x256xf32, #tpu.memory_space<vmem>>, vector<4x255xf32>,
    %cst_130 = arith.constant 0.000000e+00 : f32
    %208 = vector.broadcast %cst_130 : f32 to vector<4x1xf32>
    %c88_131 = arith.constant 88 : index
    %c0_132 = arith.constant 0 : index
    %209 = vector.load %arg13[%c88_131, %c0_132] : memref<216x256xf32, #tpu.memory_space<vmem>>, vector<4x1xf32>
    tpu.vector_store %arg13[%c88_131, %c0_132], %208 {strides = array<i32>} : memref<216x256xf32, #tpu.memory_space<vmem>>, vector<4x1xf32>,
    %cst_133 = arith.constant 0.000000e+00 : f32
    %210 = vector.broadcast %cst_133 : f32 to vector<4x256xf32>
    %c92 = arith.constant 92 : index
    %c0_134 = arith.constant 0 : index
    %211 = vector.load %arg13[%c92, %c0_134] : memref<216x256xf32, #tpu.memory_space<vmem>>, vector<4x256xf32>
    tpu.vector_store %arg13[%c92, %c0_134], %210 {strides = array<i32>} : memref<216x256xf32, #tpu.memory_space<vmem>>, vector<4x256xf32>,
    %c0_135 = arith.constant 0 : index
    %c0_136 = arith.constant 0 : index
    %c0_137 = arith.constant 0 : index
    %212 = vector.load %arg2[%c0_135, %c0_136, %c0_137] : memref<1x8x256xf32, #tpu.memory_space<vmem>>, vector<1x8x256xf32>
    %213 = vector.shape_cast %212 : vector<1x8x256xf32> to vector<8x256xf32>
    %c96 = arith.constant 96 : index
    %c0_138 = arith.constant 0 : index
    %214 = vector.load %arg13[%c96, %c0_138] : memref<216x256xf32, #tpu.memory_space<vmem>>, vector<8x256xf32>
    tpu.vector_store %arg13[%c96, %c0_138], %213 {strides = array<i32>} : memref<216x256xf32, #tpu.memory_space<vmem>>, vector<8x256xf32>,
    %c0_139 = arith.constant 0 : index
    %c0_140 = arith.constant 0 : index
    %c0_141 = arith.constant 0 : index
    %215 = vector.load %arg3[%c0_139, %c0_140, %c0_141] : memref<1x8x256xf32, #tpu.memory_space<vmem>>, vector<1x8x256xf32>
    %216 = vector.shape_cast %215 : vector<1x8x256xf32> to vector<8x256xf32>
    %c104 = arith.constant 104 : index
    %c0_142 = arith.constant 0 : index
    %217 = vector.load %arg13[%c104, %c0_142] : memref<216x256xf32, #tpu.memory_space<vmem>>, vector<8x256xf32>
    tpu.vector_store %arg13[%c104, %c0_142], %216 {strides = array<i32>} : memref<216x256xf32, #tpu.memory_space<vmem>>, vector<8x256xf32>,
    %c0_143 = arith.constant 0 : index
    %c0_144 = arith.constant 0 : index
    %c0_145 = arith.constant 0 : index
    %218 = vector.load %arg1[%c0_143, %c0_144, %c0_145] : memref<1x4x256xf32, #tpu.memory_space<vmem>>, vector<1x4x256xf32>
    %219 = vector.shape_cast %218 : vector<1x4x256xf32> to vector<4x256xf32>
    %c112 = arith.constant 112 : index
    %c0_146 = arith.constant 0 : index
    %220 = vector.load %arg13[%c112, %c0_146] : memref<216x256xf32, #tpu.memory_space<vmem>>, vector<4x256xf32>
    tpu.vector_store %arg13[%c112, %c0_146], %219 {strides = array<i32>} : memref<216x256xf32, #tpu.memory_space<vmem>>, vector<4x256xf32>,
    %cst_147 = arith.constant 0.000000e+00 : f32
    %221 = vector.broadcast %cst_147 : f32 to vector<4x256xf32>
    %c116 = arith.constant 116 : index
    %c0_148 = arith.constant 0 : index
    %222 = vector.load %arg13[%c116, %c0_148] : memref<216x256xf32, #tpu.memory_space<vmem>>, vector<4x256xf32>
    tpu.vector_store %arg13[%c116, %c0_148], %221 {strides = array<i32>} : memref<216x256xf32, #tpu.memory_space<vmem>>, vector<4x256xf32>,
    %c0_149 = arith.constant 0 : index
    %c0_150 = arith.constant 0 : index
    %c1_151 = arith.constant 1 : index
    %223 = vector.load %arg2[%c0_149, %c0_150, %c1_151] : memref<1x8x256xf32, #tpu.memory_space<vmem>>, vector<1x8x255xf32>
    %224 = vector.shape_cast %223 : vector<1x8x255xf32> to vector<8x255xf32>
    %225 = tpu.iota {dimensions = array<i32: 1>} : vector<1x255xi32>
    %c0_i32 = arith.constant 0 : i32
    %226 = vector.broadcast %c0_i32 : i32 to vector<1x255xi32>
    %227 = arith.addi %225, %226 : vector<1x255xi32>
    %c15_i32_152 = arith.constant 15 : i32
    %228 = vector.broadcast %c15_i32_152 : i32 to vector<1x255xi32>
    %229 = arith.andi %227, %228 : vector<1x255xi32>
    %c15_i32_153 = arith.constant 15 : i32
    %230 = vector.broadcast %c15_i32_153 : i32 to vector<1x255xi32>
    %231 = arith.cmpi slt, %229, %230 : vector<1x255xi32>
    %cst_154 = arith.constant 0.000000e+00 : f32
    %232 = vector.shape_cast %231 : vector<1x255xi1> to vector<1x255xi1>
    %233 = vector.broadcast %232 : vector<1x255xi1> to vector<8x255xi1>
    %234 = vector.broadcast %cst_154 : f32 to vector<8x255xf32>
    %235 = arith.select %233, %224, %234 : vector<8x255xi1>, vector<8x255xf32>
    %c120 = arith.constant 120 : index
    %c0_155 = arith.constant 0 : index
    %236 = vector.load %arg13[%c120, %c0_155] : memref<216x256xf32, #tpu.memory_space<vmem>>, vector<8x255xf32>
    tpu.vector_store %arg13[%c120, %c0_155], %235 {strides = array<i32>} : memref<216x256xf32, #tpu.memory_space<vmem>>, vector<8x255xf32>,
    %cst_156 = arith.constant 0.000000e+00 : f32
    %237 = vector.broadcast %cst_156 : f32 to vector<8x1xf32>
    %c120_157 = arith.constant 120 : index
    %c255 = arith.constant 255 : index
    %238 = vector.load %arg13[%c120_157, %c255] : memref<216x256xf32, #tpu.memory_space<vmem>>, vector<8x1xf32>
    tpu.vector_store %arg13[%c120_157, %c255], %237 {strides = array<i32>} : memref<216x256xf32, #tpu.memory_space<vmem>>, vector<8x1xf32>,
    %c0_158 = arith.constant 0 : index
    %c0_159 = arith.constant 0 : index
    %c1_160 = arith.constant 1 : index
    %239 = vector.load %arg3[%c0_158, %c0_159, %c1_160] : memref<1x8x256xf32, #tpu.memory_space<vmem>>, vector<1x8x255xf32>
    %240 = vector.shape_cast %239 : vector<1x8x255xf32> to vector<8x255xf32>
    %241 = tpu.iota {dimensions = array<i32: 1>} : vector<1x255xi32>
    %c0_i32_161 = arith.constant 0 : i32
    %242 = vector.broadcast %c0_i32_161 : i32 to vector<1x255xi32>
    %243 = arith.addi %241, %242 : vector<1x255xi32>
    %c15_i32_162 = arith.constant 15 : i32
    %244 = vector.broadcast %c15_i32_162 : i32 to vector<1x255xi32>
    %245 = arith.andi %243, %244 : vector<1x255xi32>
    %c15_i32_163 = arith.constant 15 : i32
    %246 = vector.broadcast %c15_i32_163 : i32 to vector<1x255xi32>
    %247 = arith.cmpi slt, %245, %246 : vector<1x255xi32>
    %cst_164 = arith.constant 0.000000e+00 : f32
    %248 = vector.shape_cast %247 : vector<1x255xi1> to vector<1x255xi1>
    %249 = vector.broadcast %248 : vector<1x255xi1> to vector<8x255xi1>
    %250 = vector.broadcast %cst_164 : f32 to vector<8x255xf32>
    %251 = arith.select %249, %240, %250 : vector<8x255xi1>, vector<8x255xf32>
    %c128 = arith.constant 128 : index
    %c0_165 = arith.constant 0 : index
    %252 = vector.load %arg13[%c128, %c0_165] : memref<216x256xf32, #tpu.memory_space<vmem>>, vector<8x255xf32>
    tpu.vector_store %arg13[%c128, %c0_165], %251 {strides = array<i32>} : memref<216x256xf32, #tpu.memory_space<vmem>>, vector<8x255xf32>,
    %cst_166 = arith.constant 0.000000e+00 : f32
    %253 = vector.broadcast %cst_166 : f32 to vector<8x1xf32>
    %c128_167 = arith.constant 128 : index
    %c255_168 = arith.constant 255 : index
    %254 = vector.load %arg13[%c128_167, %c255_168] : memref<216x256xf32, #tpu.memory_space<vmem>>, vector<8x1xf32>
    tpu.vector_store %arg13[%c128_167, %c255_168], %253 {strides = array<i32>} : memref<216x256xf32, #tpu.memory_space<vmem>>, vector<8x1xf32>,
    %c0_169 = arith.constant 0 : index
    %c0_170 = arith.constant 0 : index
    %c1_171 = arith.constant 1 : index
    %255 = vector.load %arg1[%c0_169, %c0_170, %c1_171] : memref<1x4x256xf32, #tpu.memory_space<vmem>>, vector<1x4x255xf32>
    %256 = vector.shape_cast %255 : vector<1x4x255xf32> to vector<4x255xf32>
    %257 = tpu.iota {dimensions = array<i32: 1>} : vector<1x255xi32>
    %c0_i32_172 = arith.constant 0 : i32
    %258 = vector.broadcast %c0_i32_172 : i32 to vector<1x255xi32>
    %259 = arith.addi %257, %258 : vector<1x255xi32>
    %c15_i32_173 = arith.constant 15 : i32
    %260 = vector.broadcast %c15_i32_173 : i32 to vector<1x255xi32>
    %261 = arith.andi %259, %260 : vector<1x255xi32>
    %c15_i32_174 = arith.constant 15 : i32
    %262 = vector.broadcast %c15_i32_174 : i32 to vector<1x255xi32>
    %263 = arith.cmpi slt, %261, %262 : vector<1x255xi32>
    %cst_175 = arith.constant 0.000000e+00 : f32
    %264 = vector.shape_cast %263 : vector<1x255xi1> to vector<1x255xi1>
    %265 = vector.broadcast %264 : vector<1x255xi1> to vector<4x255xi1>
    %266 = vector.broadcast %cst_175 : f32 to vector<4x255xf32>
    %267 = arith.select %265, %256, %266 : vector<4x255xi1>, vector<4x255xf32>
    %c136 = arith.constant 136 : index
    %c0_176 = arith.constant 0 : index
    %268 = vector.load %arg13[%c136, %c0_176] : memref<216x256xf32, #tpu.memory_space<vmem>>, vector<4x255xf32>
    tpu.vector_store %arg13[%c136, %c0_176], %267 {strides = array<i32>} : memref<216x256xf32, #tpu.memory_space<vmem>>, vector<4x255xf32>,
    %cst_177 = arith.constant 0.000000e+00 : f32
    %269 = vector.broadcast %cst_177 : f32 to vector<4x1xf32>
    %c136_178 = arith.constant 136 : index
    %c255_179 = arith.constant 255 : index
    %270 = vector.load %arg13[%c136_178, %c255_179] : memref<216x256xf32, #tpu.memory_space<vmem>>, vector<4x1xf32>
    tpu.vector_store %arg13[%c136_178, %c255_179], %269 {strides = array<i32>} : memref<216x256xf32, #tpu.memory_space<vmem>>, vector<4x1xf32>,
    %cst_180 = arith.constant 0.000000e+00 : f32
    %271 = vector.broadcast %cst_180 : f32 to vector<4x256xf32>
    %c140 = arith.constant 140 : index
    %c0_181 = arith.constant 0 : index
    %272 = vector.load %arg13[%c140, %c0_181] : memref<216x256xf32, #tpu.memory_space<vmem>>, vector<4x256xf32>
    tpu.vector_store %arg13[%c140, %c0_181], %271 {strides = array<i32>} : memref<216x256xf32, #tpu.memory_space<vmem>>, vector<4x256xf32>,
    %c0_182 = arith.constant 0 : index
    %c0_183 = arith.constant 0 : index
    %c15_184 = arith.constant 15 : index
    %273 = vector.load %arg2[%c0_182, %c0_183, %c15_184] : memref<1x8x256xf32, #tpu.memory_space<vmem>>, vector<1x8x241xf32>
    %274 = vector.shape_cast %273 : vector<1x8x241xf32> to vector<8x241xf32>
    %275 = tpu.iota {dimensions = array<i32: 1>} : vector<1x241xi32>
    %c0_i32_185 = arith.constant 0 : i32
    %276 = vector.broadcast %c0_i32_185 : i32 to vector<1x241xi32>
    %277 = arith.addi %275, %276 : vector<1x241xi32>
    %c240_i32 = arith.constant 240 : i32
    %278 = vector.broadcast %c240_i32 : i32 to vector<1x241xi32>
    %279 = arith.cmpi slt, %277, %278 : vector<1x241xi32>
    %c15_i32_186 = arith.constant 15 : i32
    %280 = vector.broadcast %c15_i32_186 : i32 to vector<1x241xi32>
    %281 = arith.andi %277, %280 : vector<1x241xi32>
    %c1_i32_187 = arith.constant 1 : i32
    %282 = vector.broadcast %c1_i32_187 : i32 to vector<1x241xi32>
    %283 = arith.cmpi sge, %281, %282 : vector<1x241xi32>
    %284 = arith.andi %279, %283 : vector<1x241xi1>
    %cst_188 = arith.constant 0.000000e+00 : f32
    %285 = vector.shape_cast %284 : vector<1x241xi1> to vector<1x241xi1>
    %286 = vector.broadcast %285 : vector<1x241xi1> to vector<8x241xi1>
    %287 = vector.broadcast %cst_188 : f32 to vector<8x241xf32>
    %288 = arith.select %286, %274, %287 : vector<8x241xi1>, vector<8x241xf32>
    %c144 = arith.constant 144 : index
    %c0_189 = arith.constant 0 : index
    %289 = vector.load %arg13[%c144, %c0_189] : memref<216x256xf32, #tpu.memory_space<vmem>>, vector<8x241xf32>
    tpu.vector_store %arg13[%c144, %c0_189], %288 {strides = array<i32>} : memref<216x256xf32, #tpu.memory_space<vmem>>, vector<8x241xf32>,
    %cst_190 = arith.constant 0.000000e+00 : f32
    %290 = vector.broadcast %cst_190 : f32 to vector<8x15xf32>
    %c144_191 = arith.constant 144 : index
    %c241 = arith.constant 241 : index
    %291 = vector.load %arg13[%c144_191, %c241] : memref<216x256xf32, #tpu.memory_space<vmem>>, vector<8x15xf32>
    tpu.vector_store %arg13[%c144_191, %c241], %290 {strides = array<i32>} : memref<216x256xf32, #tpu.memory_space<vmem>>, vector<8x15xf32>,
    %c0_192 = arith.constant 0 : index
    %c0_193 = arith.constant 0 : index
    %c15_194 = arith.constant 15 : index
    %292 = vector.load %arg3[%c0_192, %c0_193, %c15_194] : memref<1x8x256xf32, #tpu.memory_space<vmem>>, vector<1x8x241xf32>
    %293 = vector.shape_cast %292 : vector<1x8x241xf32> to vector<8x241xf32>
    %294 = tpu.iota {dimensions = array<i32: 1>} : vector<1x241xi32>
    %c0_i32_195 = arith.constant 0 : i32
    %295 = vector.broadcast %c0_i32_195 : i32 to vector<1x241xi32>
    %296 = arith.addi %294, %295 : vector<1x241xi32>
    %c240_i32_196 = arith.constant 240 : i32
    %297 = vector.broadcast %c240_i32_196 : i32 to vector<1x241xi32>
    %298 = arith.cmpi slt, %296, %297 : vector<1x241xi32>
    %c15_i32_197 = arith.constant 15 : i32
    %299 = vector.broadcast %c15_i32_197 : i32 to vector<1x241xi32>
    %300 = arith.andi %296, %299 : vector<1x241xi32>
    %c1_i32_198 = arith.constant 1 : i32
    %301 = vector.broadcast %c1_i32_198 : i32 to vector<1x241xi32>
    %302 = arith.cmpi sge, %300, %301 : vector<1x241xi32>
    %303 = arith.andi %298, %302 : vector<1x241xi1>
    %cst_199 = arith.constant 0.000000e+00 : f32
    %304 = vector.shape_cast %303 : vector<1x241xi1> to vector<1x241xi1>
    %305 = vector.broadcast %304 : vector<1x241xi1> to vector<8x241xi1>
    %306 = vector.broadcast %cst_199 : f32 to vector<8x241xf32>
    %307 = arith.select %305, %293, %306 : vector<8x241xi1>, vector<8x241xf32>
    %c152 = arith.constant 152 : index
    %c0_200 = arith.constant 0 : index
    %308 = vector.load %arg13[%c152, %c0_200] : memref<216x256xf32, #tpu.memory_space<vmem>>, vector<8x241xf32>
    tpu.vector_store %arg13[%c152, %c0_200], %307 {strides = array<i32>} : memref<216x256xf32, #tpu.memory_space<vmem>>, vector<8x241xf32>,
    %cst_201 = arith.constant 0.000000e+00 : f32
    %309 = vector.broadcast %cst_201 : f32 to vector<8x15xf32>
    %c152_202 = arith.constant 152 : index
    %c241_203 = arith.constant 241 : index
    %310 = vector.load %arg13[%c152_202, %c241_203] : memref<216x256xf32, #tpu.memory_space<vmem>>, vector<8x15xf32>
    tpu.vector_store %arg13[%c152_202, %c241_203], %309 {strides = array<i32>} : memref<216x256xf32, #tpu.memory_space<vmem>>, vector<8x15xf32>,
    %c0_204 = arith.constant 0 : index
    %c0_205 = arith.constant 0 : index
    %c15_206 = arith.constant 15 : index
    %311 = vector.load %arg1[%c0_204, %c0_205, %c15_206] : memref<1x4x256xf32, #tpu.memory_space<vmem>>, vector<1x4x241xf32>
    %312 = vector.shape_cast %311 : vector<1x4x241xf32> to vector<4x241xf32>
    %313 = tpu.iota {dimensions = array<i32: 1>} : vector<1x241xi32>
    %c0_i32_207 = arith.constant 0 : i32
    %314 = vector.broadcast %c0_i32_207 : i32 to vector<1x241xi32>
    %315 = arith.addi %313, %314 : vector<1x241xi32>
    %c240_i32_208 = arith.constant 240 : i32
    %316 = vector.broadcast %c240_i32_208 : i32 to vector<1x241xi32>
    %317 = arith.cmpi slt, %315, %316 : vector<1x241xi32>
    %c15_i32_209 = arith.constant 15 : i32
    %318 = vector.broadcast %c15_i32_209 : i32 to vector<1x241xi32>
    %319 = arith.andi %315, %318 : vector<1x241xi32>
    %c1_i32_210 = arith.constant 1 : i32
    %320 = vector.broadcast %c1_i32_210 : i32 to vector<1x241xi32>
    %321 = arith.cmpi sge, %319, %320 : vector<1x241xi32>
    %322 = arith.andi %317, %321 : vector<1x241xi1>
    %cst_211 = arith.constant 0.000000e+00 : f32
    %323 = vector.shape_cast %322 : vector<1x241xi1> to vector<1x241xi1>
    %324 = vector.broadcast %323 : vector<1x241xi1> to vector<4x241xi1>
    %325 = vector.broadcast %cst_211 : f32 to vector<4x241xf32>
    %326 = arith.select %324, %312, %325 : vector<4x241xi1>, vector<4x241xf32>
    %c160 = arith.constant 160 : index
    %c0_212 = arith.constant 0 : index
    %327 = vector.load %arg13[%c160, %c0_212] : memref<216x256xf32, #tpu.memory_space<vmem>>, vector<4x241xf32>
    tpu.vector_store %arg13[%c160, %c0_212], %326 {strides = array<i32>} : memref<216x256xf32, #tpu.memory_space<vmem>>, vector<4x241xf32>,
    %cst_213 = arith.constant 0.000000e+00 : f32
    %328 = vector.broadcast %cst_213 : f32 to vector<4x15xf32>
    %c160_214 = arith.constant 160 : index
    %c241_215 = arith.constant 241 : index
    %329 = vector.load %arg13[%c160_214, %c241_215] : memref<216x256xf32, #tpu.memory_space<vmem>>, vector<4x15xf32>
    tpu.vector_store %arg13[%c160_214, %c241_215], %328 {strides = array<i32>} : memref<216x256xf32, #tpu.memory_space<vmem>>, vector<4x15xf32>,
    %cst_216 = arith.constant 0.000000e+00 : f32
    %330 = vector.broadcast %cst_216 : f32 to vector<4x256xf32>
    %c164 = arith.constant 164 : index
    %c0_217 = arith.constant 0 : index
    %331 = vector.load %arg13[%c164, %c0_217] : memref<216x256xf32, #tpu.memory_space<vmem>>, vector<4x256xf32>
    tpu.vector_store %arg13[%c164, %c0_217], %330 {strides = array<i32>} : memref<216x256xf32, #tpu.memory_space<vmem>>, vector<4x256xf32>,
    %c0_218 = arith.constant 0 : index
    %c0_219 = arith.constant 0 : index
    %c16_220 = arith.constant 16 : index
    %332 = vector.load %arg2[%c0_218, %c0_219, %c16_220] : memref<1x8x256xf32, #tpu.memory_space<vmem>>, vector<1x8x240xf32>
    %333 = vector.shape_cast %332 : vector<1x8x240xf32> to vector<8x240xf32>
    %334 = tpu.iota {dimensions = array<i32: 1>} : vector<1x240xi32>
    %c0_i32_221 = arith.constant 0 : i32
    %335 = vector.broadcast %c0_i32_221 : i32 to vector<1x240xi32>
    %336 = arith.addi %334, %335 : vector<1x240xi32>
    %c240_i32_222 = arith.constant 240 : i32
    %337 = vector.broadcast %c240_i32_222 : i32 to vector<1x240xi32>
    %338 = arith.cmpi slt, %336, %337 : vector<1x240xi32>
    %cst_223 = arith.constant 0.000000e+00 : f32
    %339 = vector.shape_cast %338 : vector<1x240xi1> to vector<1x240xi1>
    %340 = vector.broadcast %339 : vector<1x240xi1> to vector<8x240xi1>
    %341 = vector.broadcast %cst_223 : f32 to vector<8x240xf32>
    %342 = arith.select %340, %333, %341 : vector<8x240xi1>, vector<8x240xf32>
    %c168 = arith.constant 168 : index
    %c0_224 = arith.constant 0 : index
    %343 = vector.load %arg13[%c168, %c0_224] : memref<216x256xf32, #tpu.memory_space<vmem>>, vector<8x240xf32>
    tpu.vector_store %arg13[%c168, %c0_224], %342 {strides = array<i32>} : memref<216x256xf32, #tpu.memory_space<vmem>>, vector<8x240xf32>,
    %cst_225 = arith.constant 0.000000e+00 : f32
    %344 = vector.broadcast %cst_225 : f32 to vector<8x16xf32>
    %c168_226 = arith.constant 168 : index
    %c240 = arith.constant 240 : index
    %345 = vector.load %arg13[%c168_226, %c240] : memref<216x256xf32, #tpu.memory_space<vmem>>, vector<8x16xf32>
    tpu.vector_store %arg13[%c168_226, %c240], %344 {strides = array<i32>} : memref<216x256xf32, #tpu.memory_space<vmem>>, vector<8x16xf32>,
    %c0_227 = arith.constant 0 : index
    %c0_228 = arith.constant 0 : index
    %c16_229 = arith.constant 16 : index
    %346 = vector.load %arg3[%c0_227, %c0_228, %c16_229] : memref<1x8x256xf32, #tpu.memory_space<vmem>>, vector<1x8x240xf32>
    %347 = vector.shape_cast %346 : vector<1x8x240xf32> to vector<8x240xf32>
    %348 = tpu.iota {dimensions = array<i32: 1>} : vector<1x240xi32>
    %c0_i32_230 = arith.constant 0 : i32
    %349 = vector.broadcast %c0_i32_230 : i32 to vector<1x240xi32>
    %350 = arith.addi %348, %349 : vector<1x240xi32>
    %c240_i32_231 = arith.constant 240 : i32
    %351 = vector.broadcast %c240_i32_231 : i32 to vector<1x240xi32>
    %352 = arith.cmpi slt, %350, %351 : vector<1x240xi32>
    %cst_232 = arith.constant 0.000000e+00 : f32
    %353 = vector.shape_cast %352 : vector<1x240xi1> to vector<1x240xi1>
    %354 = vector.broadcast %353 : vector<1x240xi1> to vector<8x240xi1>
    %355 = vector.broadcast %cst_232 : f32 to vector<8x240xf32>
    %356 = arith.select %354, %347, %355 : vector<8x240xi1>, vector<8x240xf32>
    %c176 = arith.constant 176 : index
    %c0_233 = arith.constant 0 : index
    %357 = vector.load %arg13[%c176, %c0_233] : memref<216x256xf32, #tpu.memory_space<vmem>>, vector<8x240xf32>
    tpu.vector_store %arg13[%c176, %c0_233], %356 {strides = array<i32>} : memref<216x256xf32, #tpu.memory_space<vmem>>, vector<8x240xf32>,
    %cst_234 = arith.constant 0.000000e+00 : f32
    %358 = vector.broadcast %cst_234 : f32 to vector<8x16xf32>
    %c176_235 = arith.constant 176 : index
    %c240_236 = arith.constant 240 : index
    %359 = vector.load %arg13[%c176_235, %c240_236] : memref<216x256xf32, #tpu.memory_space<vmem>>, vector<8x16xf32>
    tpu.vector_store %arg13[%c176_235, %c240_236], %358 {strides = array<i32>} : memref<216x256xf32, #tpu.memory_space<vmem>>, vector<8x16xf32>,
    %c0_237 = arith.constant 0 : index
    %c0_238 = arith.constant 0 : index
    %c16_239 = arith.constant 16 : index
    %360 = vector.load %arg1[%c0_237, %c0_238, %c16_239] : memref<1x4x256xf32, #tpu.memory_space<vmem>>, vector<1x4x240xf32>
    %361 = vector.shape_cast %360 : vector<1x4x240xf32> to vector<4x240xf32>
    %362 = tpu.iota {dimensions = array<i32: 1>} : vector<1x240xi32>
    %c0_i32_240 = arith.constant 0 : i32
    %363 = vector.broadcast %c0_i32_240 : i32 to vector<1x240xi32>
    %364 = arith.addi %362, %363 : vector<1x240xi32>
    %c240_i32_241 = arith.constant 240 : i32
    %365 = vector.broadcast %c240_i32_241 : i32 to vector<1x240xi32>
    %366 = arith.cmpi slt, %364, %365 : vector<1x240xi32>
    %cst_242 = arith.constant 0.000000e+00 : f32
    %367 = vector.shape_cast %366 : vector<1x240xi1> to vector<1x240xi1>
    %368 = vector.broadcast %367 : vector<1x240xi1> to vector<4x240xi1>
    %369 = vector.broadcast %cst_242 : f32 to vector<4x240xf32>
    %370 = arith.select %368, %361, %369 : vector<4x240xi1>, vector<4x240xf32>
    %c184 = arith.constant 184 : index
    %c0_243 = arith.constant 0 : index
    %371 = vector.load %arg13[%c184, %c0_243] : memref<216x256xf32, #tpu.memory_space<vmem>>, vector<4x240xf32>
    tpu.vector_store %arg13[%c184, %c0_243], %370 {strides = array<i32>} : memref<216x256xf32, #tpu.memory_space<vmem>>, vector<4x240xf32>,
    %cst_244 = arith.constant 0.000000e+00 : f32
    %372 = vector.broadcast %cst_244 : f32 to vector<4x16xf32>
    %c184_245 = arith.constant 184 : index
    %c240_246 = arith.constant 240 : index
    %373 = vector.load %arg13[%c184_245, %c240_246] : memref<216x256xf32, #tpu.memory_space<vmem>>, vector<4x16xf32>
    tpu.vector_store %arg13[%c184_245, %c240_246], %372 {strides = array<i32>} : memref<216x256xf32, #tpu.memory_space<vmem>>, vector<4x16xf32>,
    %cst_247 = arith.constant 0.000000e+00 : f32
    %374 = vector.broadcast %cst_247 : f32 to vector<4x256xf32>
    %c188 = arith.constant 188 : index
    %c0_248 = arith.constant 0 : index
    %375 = vector.load %arg13[%c188, %c0_248] : memref<216x256xf32, #tpu.memory_space<vmem>>, vector<4x256xf32>
    tpu.vector_store %arg13[%c188, %c0_248], %374 {strides = array<i32>} : memref<216x256xf32, #tpu.memory_space<vmem>>, vector<4x256xf32>,
    %c0_249 = arith.constant 0 : index
    %c0_250 = arith.constant 0 : index
    %c17_251 = arith.constant 17 : index
    %376 = vector.load %arg2[%c0_249, %c0_250, %c17_251] : memref<1x8x256xf32, #tpu.memory_space<vmem>>, vector<1x8x239xf32>
    %377 = vector.shape_cast %376 : vector<1x8x239xf32> to vector<8x239xf32>
    %378 = tpu.iota {dimensions = array<i32: 1>} : vector<1x239xi32>
    %c0_i32_252 = arith.constant 0 : i32
    %379 = vector.broadcast %c0_i32_252 : i32 to vector<1x239xi32>
    %380 = arith.addi %378, %379 : vector<1x239xi32>
    %c240_i32_253 = arith.constant 240 : i32
    %381 = vector.broadcast %c240_i32_253 : i32 to vector<1x239xi32>
    %382 = arith.cmpi slt, %380, %381 : vector<1x239xi32>
    %c15_i32_254 = arith.constant 15 : i32
    %383 = vector.broadcast %c15_i32_254 : i32 to vector<1x239xi32>
    %384 = arith.andi %380, %383 : vector<1x239xi32>
    %c15_i32_255 = arith.constant 15 : i32
    %385 = vector.broadcast %c15_i32_255 : i32 to vector<1x239xi32>
    %386 = arith.cmpi slt, %384, %385 : vector<1x239xi32>
    %387 = arith.andi %382, %386 : vector<1x239xi1>
    %cst_256 = arith.constant 0.000000e+00 : f32
    %388 = vector.shape_cast %387 : vector<1x239xi1> to vector<1x239xi1>
    %389 = vector.broadcast %388 : vector<1x239xi1> to vector<8x239xi1>
    %390 = vector.broadcast %cst_256 : f32 to vector<8x239xf32>
    %391 = arith.select %389, %377, %390 : vector<8x239xi1>, vector<8x239xf32>
    %c192 = arith.constant 192 : index
    %c0_257 = arith.constant 0 : index
    %392 = vector.load %arg13[%c192, %c0_257] : memref<216x256xf32, #tpu.memory_space<vmem>>, vector<8x239xf32>
    tpu.vector_store %arg13[%c192, %c0_257], %391 {strides = array<i32>} : memref<216x256xf32, #tpu.memory_space<vmem>>, vector<8x239xf32>,
    %cst_258 = arith.constant 0.000000e+00 : f32
    %393 = vector.broadcast %cst_258 : f32 to vector<8x17xf32>
    %c192_259 = arith.constant 192 : index
    %c239 = arith.constant 239 : index
    %394 = vector.load %arg13[%c192_259, %c239] : memref<216x256xf32, #tpu.memory_space<vmem>>, vector<8x17xf32>
    tpu.vector_store %arg13[%c192_259, %c239], %393 {strides = array<i32>} : memref<216x256xf32, #tpu.memory_space<vmem>>, vector<8x17xf32>,
    %c0_260 = arith.constant 0 : index
    %c0_261 = arith.constant 0 : index
    %c17_262 = arith.constant 17 : index
    %395 = vector.load %arg3[%c0_260, %c0_261, %c17_262] : memref<1x8x256xf32, #tpu.memory_space<vmem>>, vector<1x8x239xf32>
    %396 = vector.shape_cast %395 : vector<1x8x239xf32> to vector<8x239xf32>
    %397 = tpu.iota {dimensions = array<i32: 1>} : vector<1x239xi32>
    %c0_i32_263 = arith.constant 0 : i32
    %398 = vector.broadcast %c0_i32_263 : i32 to vector<1x239xi32>
    %399 = arith.addi %397, %398 : vector<1x239xi32>
    %c240_i32_264 = arith.constant 240 : i32
    %400 = vector.broadcast %c240_i32_264 : i32 to vector<1x239xi32>
    %401 = arith.cmpi slt, %399, %400 : vector<1x239xi32>
    %c15_i32_265 = arith.constant 15 : i32
    %402 = vector.broadcast %c15_i32_265 : i32 to vector<1x239xi32>
    %403 = arith.andi %399, %402 : vector<1x239xi32>
    %c15_i32_266 = arith.constant 15 : i32
    %404 = vector.broadcast %c15_i32_266 : i32 to vector<1x239xi32>
    %405 = arith.cmpi slt, %403, %404 : vector<1x239xi32>
    %406 = arith.andi %401, %405 : vector<1x239xi1>
    %cst_267 = arith.constant 0.000000e+00 : f32
    %407 = vector.shape_cast %406 : vector<1x239xi1> to vector<1x239xi1>
    %408 = vector.broadcast %407 : vector<1x239xi1> to vector<8x239xi1>
    %409 = vector.broadcast %cst_267 : f32 to vector<8x239xf32>
    %410 = arith.select %408, %396, %409 : vector<8x239xi1>, vector<8x239xf32>
    %c200 = arith.constant 200 : index
    %c0_268 = arith.constant 0 : index
    %411 = vector.load %arg13[%c200, %c0_268] : memref<216x256xf32, #tpu.memory_space<vmem>>, vector<8x239xf32>
    tpu.vector_store %arg13[%c200, %c0_268], %410 {strides = array<i32>} : memref<216x256xf32, #tpu.memory_space<vmem>>, vector<8x239xf32>,
    %cst_269 = arith.constant 0.000000e+00 : f32
    %412 = vector.broadcast %cst_269 : f32 to vector<8x17xf32>
    %c200_270 = arith.constant 200 : index
    %c239_271 = arith.constant 239 : index
    %413 = vector.load %arg13[%c200_270, %c239_271] : memref<216x256xf32, #tpu.memory_space<vmem>>, vector<8x17xf32>
    tpu.vector_store %arg13[%c200_270, %c239_271], %412 {strides = array<i32>} : memref<216x256xf32, #tpu.memory_space<vmem>>, vector<8x17xf32>,
    %c0_272 = arith.constant 0 : index
    %c0_273 = arith.constant 0 : index
    %c17_274 = arith.constant 17 : index
    %414 = vector.load %arg1[%c0_272, %c0_273, %c17_274] : memref<1x4x256xf32, #tpu.memory_space<vmem>>, vector<1x4x239xf32>
    %415 = vector.shape_cast %414 : vector<1x4x239xf32> to vector<4x239xf32>
    %416 = tpu.iota {dimensions = array<i32: 1>} : vector<1x239xi32>
    %c0_i32_275 = arith.constant 0 : i32
    %417 = vector.broadcast %c0_i32_275 : i32 to vector<1x239xi32>
    %418 = arith.addi %416, %417 : vector<1x239xi32>
    %c240_i32_276 = arith.constant 240 : i32
    %419 = vector.broadcast %c240_i32_276 : i32 to vector<1x239xi32>
    %420 = arith.cmpi slt, %418, %419 : vector<1x239xi32>
    %c15_i32_277 = arith.constant 15 : i32
    %421 = vector.broadcast %c15_i32_277 : i32 to vector<1x239xi32>
    %422 = arith.andi %418, %421 : vector<1x239xi32>
    %c15_i32_278 = arith.constant 15 : i32
    %423 = vector.broadcast %c15_i32_278 : i32 to vector<1x239xi32>
    %424 = arith.cmpi slt, %422, %423 : vector<1x239xi32>
    %425 = arith.andi %420, %424 : vector<1x239xi1>
    %cst_279 = arith.constant 0.000000e+00 : f32
    %426 = vector.shape_cast %425 : vector<1x239xi1> to vector<1x239xi1>
    %427 = vector.broadcast %426 : vector<1x239xi1> to vector<4x239xi1>
    %428 = vector.broadcast %cst_279 : f32 to vector<4x239xf32>
    %429 = arith.select %427, %415, %428 : vector<4x239xi1>, vector<4x239xf32>
    %c208 = arith.constant 208 : index
    %c0_280 = arith.constant 0 : index
    %430 = vector.load %arg13[%c208, %c0_280] : memref<216x256xf32, #tpu.memory_space<vmem>>, vector<4x239xf32>
    tpu.vector_store %arg13[%c208, %c0_280], %429 {strides = array<i32>} : memref<216x256xf32, #tpu.memory_space<vmem>>, vector<4x239xf32>,
    %cst_281 = arith.constant 0.000000e+00 : f32
    %431 = vector.broadcast %cst_281 : f32 to vector<4x17xf32>
    %c208_282 = arith.constant 208 : index
    %c239_283 = arith.constant 239 : index
    %432 = vector.load %arg13[%c208_282, %c239_283] : memref<216x256xf32, #tpu.memory_space<vmem>>, vector<4x17xf32>
    tpu.vector_store %arg13[%c208_282, %c239_283], %431 {strides = array<i32>} : memref<216x256xf32, #tpu.memory_space<vmem>>, vector<4x17xf32>,
    %cst_284 = arith.constant 0.000000e+00 : f32
    %433 = vector.broadcast %cst_284 : f32 to vector<4x256xf32>
    %c212 = arith.constant 212 : index
    %c0_285 = arith.constant 0 : index
    %434 = vector.load %arg13[%c212, %c0_285] : memref<216x256xf32, #tpu.memory_space<vmem>>, vector<4x256xf32>
    tpu.vector_store %arg13[%c212, %c0_285], %433 {strides = array<i32>} : memref<216x256xf32, #tpu.memory_space<vmem>>, vector<4x256xf32>,
    %c0_286 = arith.constant 0 : index
    %c0_287 = arith.constant 0 : index
    %435 = vector.load %arg5[%c0_286, %c0_287] : memref<40x216xbf16, #tpu.memory_space<vmem>>, vector<40x216xbf16>
    %c0_288 = arith.constant 0 : index
    %c0_289 = arith.constant 0 : index
    %436 = vector.load %arg13[%c0_288, %c0_289] : memref<216x256xf32, #tpu.memory_space<vmem>>, vector<216x256xf32>
    %437 = arith.truncf %436 : vector<216x256xf32> to vector<216x256xbf16>
    %cst_290 = arith.constant dense<0.000000e+00> : vector<40x256xf32>
    %438 = tpu.matmul %435, %437, %cst_290 {dimension_numbers = #tpu.dot_dimension_numbers<[1], [0], [0], [1], [0, 0, 1, 1], [], []>} : vector<40x216xbf16>, vector<216x256xbf16>, vector<40x256xf32> -> vector<40x256xf32>
    %c0_291 = arith.constant 0 : index
    %c0_292 = arith.constant 0 : index
    %439 = vector.load %arg6[%c0_291, %c0_292] : memref<40x1xf32, #tpu.memory_space<vmem>>, vector<40x1xf32>
    %440 = vector.broadcast %439 : vector<40x1xf32> to vector<40x256xf32>
    %441 = arith.addf %438, %440 : vector<40x256xf32>
    %442 = vector.extract_strided_slice %441 {offsets = [0, 0], sizes = [24, 256], strides = [1, 1]} : vector<40x256xf32> to vector<24x256xf32>
    %443 = arith.negf %442 : vector<24x256xf32>
    %444 = math.exp %443 : vector<24x256xf32>
    %cst_293 = arith.constant 1.000000e+00 : f32
    %445 = vector.broadcast %cst_293 : f32 to vector<24x256xf32>
    %446 = arith.addf %445, %444 : vector<24x256xf32>
    %447 = arith.divf %445, %446 : vector<24x256xf32>
    %448 = vector.extract_strided_slice %441 {offsets = [24, 0], sizes = [8, 256], strides = [1, 1]} : vector<40x256xf32> to vector<8x256xf32>
    %449 = math.tanh %448 : vector<8x256xf32>
    %450 = vector.extract_strided_slice %447 {offsets = [0, 0], sizes = [8, 256], strides = [1, 1]} : vector<24x256xf32> to vector<8x256xf32>
    %451 = vector.extract_strided_slice %447 {offsets = [8, 0], sizes = [8, 256], strides = [1, 1]} : vector<24x256xf32> to vector<8x256xf32>
    %452 = vector.extract_strided_slice %447 {offsets = [16, 0], sizes = [8, 256], strides = [1, 1]} : vector<24x256xf32> to vector<8x256xf32>
    %c0_294 = arith.constant 0 : index
    %c0_295 = arith.constant 0 : index
    %c0_296 = arith.constant 0 : index
    %453 = vector.load %arg4[%c0_294, %c0_295, %c0_296] : memref<1x8x256xf32, #tpu.memory_space<vmem>>, vector<1x8x256xf32>
    %454 = vector.shape_cast %453 : vector<1x8x256xf32> to vector<8x256xf32>
    %455 = arith.mulf %451, %454 : vector<8x256xf32>
    %456 = arith.mulf %450, %449 : vector<8x256xf32>
    %457 = arith.addf %455, %456 : vector<8x256xf32>
    %458 = math.tanh %457 : vector<8x256xf32>
    %459 = arith.mulf %452, %458 : vector<8x256xf32>
    %c0_297 = arith.constant 0 : index
    %c0_298 = arith.constant 0 : index
    %c0_299 = arith.constant 0 : index
    %460 = vector.load %arg10[%c0_297, %c0_298, %c0_299] : memref<1x8x256xf32, #tpu.memory_space<vmem>>, vector<1x8x256xf32>
    %461 = vector.shape_cast %460 : vector<1x8x256xf32> to vector<8x256xf32>
    %462 = vector.shape_cast %459 : vector<8x256xf32> to vector<1x8x256xf32>
    tpu.vector_store %arg10[%c0_297, %c0_298, %c0_299], %462 {strides = array<i32>} : memref<1x8x256xf32, #tpu.memory_space<vmem>>, vector<1x8x256xf32>,
    %c0_300 = arith.constant 0 : index
    %c0_301 = arith.constant 0 : index
    %c0_302 = arith.constant 0 : index
    %463 = vector.load %arg11[%c0_300, %c0_301, %c0_302] : memref<1x8x256xf32, #tpu.memory_space<vmem>>, vector<1x8x256xf32>
    %464 = vector.shape_cast %463 : vector<1x8x256xf32> to vector<8x256xf32>
    %465 = vector.shape_cast %457 : vector<8x256xf32> to vector<1x8x256xf32>
    tpu.vector_store %arg11[%c0_300, %c0_301, %c0_302], %465 {strides = array<i32>} : memref<1x8x256xf32, #tpu.memory_space<vmem>>, vector<1x8x256xf32>,
    %466 = vector.extract_strided_slice %441 {offsets = [32, 0], sizes = [8, 256], strides = [1, 1]} : vector<40x256xf32> to vector<8x256xf32>
    %c0_303 = arith.constant 0 : index
    %c0_304 = arith.constant 0 : index
    %c0_305 = arith.constant 0 : index
    %467 = vector.load %arg12[%c0_303, %c0_304, %c0_305] : memref<1x8x256xf32, #tpu.memory_space<vmem>>, vector<1x8x256xf32>
    %468 = vector.shape_cast %467 : vector<1x8x256xf32> to vector<8x256xf32>
    %469 = vector.shape_cast %466 : vector<8x256xf32> to vector<1x8x256xf32>
    tpu.vector_store %arg12[%c0_303, %c0_304, %c0_305], %469 {strides = array<i32>} : memref<1x8x256xf32, #tpu.memory_space<vmem>>, vector<1x8x256xf32>,
    %c0_306 = arith.constant 0 : index
    %c0_307 = arith.constant 0 : index
    %c0_308 = arith.constant 0 : index
    %470 = vector.load %arg10[%c0_306, %c0_307, %c0_308] : memref<1x8x256xf32, #tpu.memory_space<vmem>>, vector<1x8x222xf32>
    %471 = vector.shape_cast %470 : vector<1x8x222xf32> to vector<8x222xf32>
    %472 = tpu.iota {dimensions = array<i32: 1>} : vector<1x222xi32>
    %c34_i32 = arith.constant 34 : i32
    %473 = vector.broadcast %c34_i32 : i32 to vector<1x222xi32>
    %474 = arith.addi %472, %473 : vector<1x222xi32>
    %c32_i32 = arith.constant 32 : i32
    %475 = vector.broadcast %c32_i32 : i32 to vector<1x222xi32>
    %476 = arith.cmpi sge, %474, %475 : vector<1x222xi32>
    %c15_i32_309 = arith.constant 15 : i32
    %477 = vector.broadcast %c15_i32_309 : i32 to vector<1x222xi32>
    %478 = arith.andi %474, %477 : vector<1x222xi32>
    %c2_i32 = arith.constant 2 : i32
    %479 = vector.broadcast %c2_i32 : i32 to vector<1x222xi32>
    %480 = arith.cmpi sge, %478, %479 : vector<1x222xi32>
    %481 = arith.andi %476, %480 : vector<1x222xi1>
    %cst_310 = arith.constant 0.000000e+00 : f32
    %482 = vector.shape_cast %481 : vector<1x222xi1> to vector<1x222xi1>
    %483 = vector.broadcast %482 : vector<1x222xi1> to vector<8x222xi1>
    %484 = vector.broadcast %cst_310 : f32 to vector<8x222xf32>
    %485 = arith.select %483, %471, %484 : vector<8x222xi1>, vector<8x222xf32>
    %c0_311 = arith.constant 0 : index
    %c34 = arith.constant 34 : index
    %486 = vector.load %arg14[%c0_311, %c34] : memref<200x256xf32, #tpu.memory_space<vmem>>, vector<8x222xf32>
    tpu.vector_store %arg14[%c0_311, %c34], %485 {strides = array<i32>} : memref<200x256xf32, #tpu.memory_space<vmem>>, vector<8x222xf32>,
    %cst_312 = arith.constant 0.000000e+00 : f32
    %487 = vector.broadcast %cst_312 : f32 to vector<8x34xf32>
    %c0_313 = arith.constant 0 : index
    %c0_314 = arith.constant 0 : index
    %488 = vector.load %arg14[%c0_313, %c0_314] : memref<200x256xf32, #tpu.memory_space<vmem>>, vector<8x34xf32>
    tpu.vector_store %arg14[%c0_313, %c0_314], %487 {strides = array<i32>} : memref<200x256xf32, #tpu.memory_space<vmem>>, vector<8x34xf32>,
    %c0_315 = arith.constant 0 : index
    %c0_316 = arith.constant 0 : index
    %c0_317 = arith.constant 0 : index
    %489 = vector.load %arg10[%c0_315, %c0_316, %c0_317] : memref<1x8x256xf32, #tpu.memory_space<vmem>>, vector<1x8x223xf32>
    %490 = vector.shape_cast %489 : vector<1x8x223xf32> to vector<8x223xf32>
    %491 = tpu.iota {dimensions = array<i32: 1>} : vector<1x223xi32>
    %c33_i32 = arith.constant 33 : i32
    %492 = vector.broadcast %c33_i32 : i32 to vector<1x223xi32>
    %493 = arith.addi %491, %492 : vector<1x223xi32>
    %c32_i32_318 = arith.constant 32 : i32
    %494 = vector.broadcast %c32_i32_318 : i32 to vector<1x223xi32>
    %495 = arith.cmpi sge, %493, %494 : vector<1x223xi32>
    %c15_i32_319 = arith.constant 15 : i32
    %496 = vector.broadcast %c15_i32_319 : i32 to vector<1x223xi32>
    %497 = arith.andi %493, %496 : vector<1x223xi32>
    %c1_i32_320 = arith.constant 1 : i32
    %498 = vector.broadcast %c1_i32_320 : i32 to vector<1x223xi32>
    %499 = arith.cmpi sge, %497, %498 : vector<1x223xi32>
    %500 = arith.andi %495, %499 : vector<1x223xi1>
    %cst_321 = arith.constant 0.000000e+00 : f32
    %501 = vector.shape_cast %500 : vector<1x223xi1> to vector<1x223xi1>
    %502 = vector.broadcast %501 : vector<1x223xi1> to vector<8x223xi1>
    %503 = vector.broadcast %cst_321 : f32 to vector<8x223xf32>
    %504 = arith.select %502, %490, %503 : vector<8x223xi1>, vector<8x223xf32>
    %c8_322 = arith.constant 8 : index
    %c33 = arith.constant 33 : index
    %505 = vector.load %arg14[%c8_322, %c33] : memref<200x256xf32, #tpu.memory_space<vmem>>, vector<8x223xf32>
    tpu.vector_store %arg14[%c8_322, %c33], %504 {strides = array<i32>} : memref<200x256xf32, #tpu.memory_space<vmem>>, vector<8x223xf32>,
    %cst_323 = arith.constant 0.000000e+00 : f32
    %506 = vector.broadcast %cst_323 : f32 to vector<8x33xf32>
    %c8_324 = arith.constant 8 : index
    %c0_325 = arith.constant 0 : index
    %507 = vector.load %arg14[%c8_324, %c0_325] : memref<200x256xf32, #tpu.memory_space<vmem>>, vector<8x33xf32>
    tpu.vector_store %arg14[%c8_324, %c0_325], %506 {strides = array<i32>} : memref<200x256xf32, #tpu.memory_space<vmem>>, vector<8x33xf32>,
    %c0_326 = arith.constant 0 : index
    %c0_327 = arith.constant 0 : index
    %c0_328 = arith.constant 0 : index
    %508 = vector.load %arg10[%c0_326, %c0_327, %c0_328] : memref<1x8x256xf32, #tpu.memory_space<vmem>>, vector<1x8x224xf32>
    %509 = vector.shape_cast %508 : vector<1x8x224xf32> to vector<8x224xf32>
    %510 = tpu.iota {dimensions = array<i32: 1>} : vector<1x224xi32>
    %c32_i32_329 = arith.constant 32 : i32
    %511 = vector.broadcast %c32_i32_329 : i32 to vector<1x224xi32>
    %512 = arith.addi %510, %511 : vector<1x224xi32>
    %c32_i32_330 = arith.constant 32 : i32
    %513 = vector.broadcast %c32_i32_330 : i32 to vector<1x224xi32>
    %514 = arith.cmpi sge, %512, %513 : vector<1x224xi32>
    %cst_331 = arith.constant 0.000000e+00 : f32
    %515 = vector.shape_cast %514 : vector<1x224xi1> to vector<1x224xi1>
    %516 = vector.broadcast %515 : vector<1x224xi1> to vector<8x224xi1>
    %517 = vector.broadcast %cst_331 : f32 to vector<8x224xf32>
    %518 = arith.select %516, %509, %517 : vector<8x224xi1>, vector<8x224xf32>
    %c16_332 = arith.constant 16 : index
    %c32_333 = arith.constant 32 : index
    %519 = vector.load %arg14[%c16_332, %c32_333] : memref<200x256xf32, #tpu.memory_space<vmem>>, vector<8x224xf32>
    tpu.vector_store %arg14[%c16_332, %c32_333], %518 {strides = array<i32>} : memref<200x256xf32, #tpu.memory_space<vmem>>, vector<8x224xf32>,
    %cst_334 = arith.constant 0.000000e+00 : f32
    %520 = vector.broadcast %cst_334 : f32 to vector<8x32xf32>
    %c16_335 = arith.constant 16 : index
    %c0_336 = arith.constant 0 : index
    %521 = vector.load %arg14[%c16_335, %c0_336] : memref<200x256xf32, #tpu.memory_space<vmem>>, vector<8x32xf32>
    tpu.vector_store %arg14[%c16_335, %c0_336], %520 {strides = array<i32>} : memref<200x256xf32, #tpu.memory_space<vmem>>, vector<8x32xf32>,
    %c0_337 = arith.constant 0 : index
    %c0_338 = arith.constant 0 : index
    %c0_339 = arith.constant 0 : index
    %522 = vector.load %arg10[%c0_337, %c0_338, %c0_339] : memref<1x8x256xf32, #tpu.memory_space<vmem>>, vector<1x8x225xf32>
    %523 = vector.shape_cast %522 : vector<1x8x225xf32> to vector<8x225xf32>
    %524 = tpu.iota {dimensions = array<i32: 1>} : vector<1x225xi32>
    %c31_i32 = arith.constant 31 : i32
    %525 = vector.broadcast %c31_i32 : i32 to vector<1x225xi32>
    %526 = arith.addi %524, %525 : vector<1x225xi32>
    %c32_i32_340 = arith.constant 32 : i32
    %527 = vector.broadcast %c32_i32_340 : i32 to vector<1x225xi32>
    %528 = arith.cmpi sge, %526, %527 : vector<1x225xi32>
    %c15_i32_341 = arith.constant 15 : i32
    %529 = vector.broadcast %c15_i32_341 : i32 to vector<1x225xi32>
    %530 = arith.andi %526, %529 : vector<1x225xi32>
    %c15_i32_342 = arith.constant 15 : i32
    %531 = vector.broadcast %c15_i32_342 : i32 to vector<1x225xi32>
    %532 = arith.cmpi slt, %530, %531 : vector<1x225xi32>
    %533 = arith.andi %528, %532 : vector<1x225xi1>
    %cst_343 = arith.constant 0.000000e+00 : f32
    %534 = vector.shape_cast %533 : vector<1x225xi1> to vector<1x225xi1>
    %535 = vector.broadcast %534 : vector<1x225xi1> to vector<8x225xi1>
    %536 = vector.broadcast %cst_343 : f32 to vector<8x225xf32>
    %537 = arith.select %535, %523, %536 : vector<8x225xi1>, vector<8x225xf32>
    %c24_344 = arith.constant 24 : index
    %c31 = arith.constant 31 : index
    %538 = vector.load %arg14[%c24_344, %c31] : memref<200x256xf32, #tpu.memory_space<vmem>>, vector<8x225xf32>
    tpu.vector_store %arg14[%c24_344, %c31], %537 {strides = array<i32>} : memref<200x256xf32, #tpu.memory_space<vmem>>, vector<8x225xf32>,
    %cst_345 = arith.constant 0.000000e+00 : f32
    %539 = vector.broadcast %cst_345 : f32 to vector<8x31xf32>
    %c24_346 = arith.constant 24 : index
    %c0_347 = arith.constant 0 : index
    %540 = vector.load %arg14[%c24_346, %c0_347] : memref<200x256xf32, #tpu.memory_space<vmem>>, vector<8x31xf32>
    tpu.vector_store %arg14[%c24_346, %c0_347], %539 {strides = array<i32>} : memref<200x256xf32, #tpu.memory_space<vmem>>, vector<8x31xf32>,
    %c0_348 = arith.constant 0 : index
    %c0_349 = arith.constant 0 : index
    %c0_350 = arith.constant 0 : index
    %541 = vector.load %arg10[%c0_348, %c0_349, %c0_350] : memref<1x8x256xf32, #tpu.memory_space<vmem>>, vector<1x8x226xf32>
    %542 = vector.shape_cast %541 : vector<1x8x226xf32> to vector<8x226xf32>
    %543 = tpu.iota {dimensions = array<i32: 1>} : vector<1x226xi32>
    %c30_i32 = arith.constant 30 : i32
    %544 = vector.broadcast %c30_i32 : i32 to vector<1x226xi32>
    %545 = arith.addi %543, %544 : vector<1x226xi32>
    %c32_i32_351 = arith.constant 32 : i32
    %546 = vector.broadcast %c32_i32_351 : i32 to vector<1x226xi32>
    %547 = arith.cmpi sge, %545, %546 : vector<1x226xi32>
    %c15_i32_352 = arith.constant 15 : i32
    %548 = vector.broadcast %c15_i32_352 : i32 to vector<1x226xi32>
    %549 = arith.andi %545, %548 : vector<1x226xi32>
    %c14_i32 = arith.constant 14 : i32
    %550 = vector.broadcast %c14_i32 : i32 to vector<1x226xi32>
    %551 = arith.cmpi slt, %549, %550 : vector<1x226xi32>
    %552 = arith.andi %547, %551 : vector<1x226xi1>
    %cst_353 = arith.constant 0.000000e+00 : f32
    %553 = vector.shape_cast %552 : vector<1x226xi1> to vector<1x226xi1>
    %554 = vector.broadcast %553 : vector<1x226xi1> to vector<8x226xi1>
    %555 = vector.broadcast %cst_353 : f32 to vector<8x226xf32>
    %556 = arith.select %554, %542, %555 : vector<8x226xi1>, vector<8x226xf32>
    %c32_354 = arith.constant 32 : index
    %c30 = arith.constant 30 : index
    %557 = vector.load %arg14[%c32_354, %c30] : memref<200x256xf32, #tpu.memory_space<vmem>>, vector<8x226xf32>
    tpu.vector_store %arg14[%c32_354, %c30], %556 {strides = array<i32>} : memref<200x256xf32, #tpu.memory_space<vmem>>, vector<8x226xf32>,
    %cst_355 = arith.constant 0.000000e+00 : f32
    %558 = vector.broadcast %cst_355 : f32 to vector<8x30xf32>
    %c32_356 = arith.constant 32 : index
    %c0_357 = arith.constant 0 : index
    %559 = vector.load %arg14[%c32_356, %c0_357] : memref<200x256xf32, #tpu.memory_space<vmem>>, vector<8x30xf32>
    tpu.vector_store %arg14[%c32_356, %c0_357], %558 {strides = array<i32>} : memref<200x256xf32, #tpu.memory_space<vmem>>, vector<8x30xf32>,
    %c0_358 = arith.constant 0 : index
    %c0_359 = arith.constant 0 : index
    %c0_360 = arith.constant 0 : index
    %560 = vector.load %arg10[%c0_358, %c0_359, %c0_360] : memref<1x8x256xf32, #tpu.memory_space<vmem>>, vector<1x8x238xf32>
    %561 = vector.shape_cast %560 : vector<1x8x238xf32> to vector<8x238xf32>
    %562 = tpu.iota {dimensions = array<i32: 1>} : vector<1x238xi32>
    %c18_i32 = arith.constant 18 : i32
    %563 = vector.broadcast %c18_i32 : i32 to vector<1x238xi32>
    %564 = arith.addi %562, %563 : vector<1x238xi32>
    %c16_i32_361 = arith.constant 16 : i32
    %565 = vector.broadcast %c16_i32_361 : i32 to vector<1x238xi32>
    %566 = arith.cmpi sge, %564, %565 : vector<1x238xi32>
    %c15_i32_362 = arith.constant 15 : i32
    %567 = vector.broadcast %c15_i32_362 : i32 to vector<1x238xi32>
    %568 = arith.andi %564, %567 : vector<1x238xi32>
    %c2_i32_363 = arith.constant 2 : i32
    %569 = vector.broadcast %c2_i32_363 : i32 to vector<1x238xi32>
    %570 = arith.cmpi sge, %568, %569 : vector<1x238xi32>
    %571 = arith.andi %566, %570 : vector<1x238xi1>
    %cst_364 = arith.constant 0.000000e+00 : f32
    %572 = vector.shape_cast %571 : vector<1x238xi1> to vector<1x238xi1>
    %573 = vector.broadcast %572 : vector<1x238xi1> to vector<8x238xi1>
    %574 = vector.broadcast %cst_364 : f32 to vector<8x238xf32>
    %575 = arith.select %573, %561, %574 : vector<8x238xi1>, vector<8x238xf32>
    %c40_365 = arith.constant 40 : index
    %c18 = arith.constant 18 : index
    %576 = vector.load %arg14[%c40_365, %c18] : memref<200x256xf32, #tpu.memory_space<vmem>>, vector<8x238xf32>
    tpu.vector_store %arg14[%c40_365, %c18], %575 {strides = array<i32>} : memref<200x256xf32, #tpu.memory_space<vmem>>, vector<8x238xf32>,
    %cst_366 = arith.constant 0.000000e+00 : f32
    %577 = vector.broadcast %cst_366 : f32 to vector<8x18xf32>
    %c40_367 = arith.constant 40 : index
    %c0_368 = arith.constant 0 : index
    %578 = vector.load %arg14[%c40_367, %c0_368] : memref<200x256xf32, #tpu.memory_space<vmem>>, vector<8x18xf32>
    tpu.vector_store %arg14[%c40_367, %c0_368], %577 {strides = array<i32>} : memref<200x256xf32, #tpu.memory_space<vmem>>, vector<8x18xf32>,
    %c0_369 = arith.constant 0 : index
    %c0_370 = arith.constant 0 : index
    %c0_371 = arith.constant 0 : index
    %579 = vector.load %arg10[%c0_369, %c0_370, %c0_371] : memref<1x8x256xf32, #tpu.memory_space<vmem>>, vector<1x8x239xf32>
    %580 = vector.shape_cast %579 : vector<1x8x239xf32> to vector<8x239xf32>
    %581 = tpu.iota {dimensions = array<i32: 1>} : vector<1x239xi32>
    %c17_i32_372 = arith.constant 17 : i32
    %582 = vector.broadcast %c17_i32_372 : i32 to vector<1x239xi32>
    %583 = arith.addi %581, %582 : vector<1x239xi32>
    %c16_i32_373 = arith.constant 16 : i32
    %584 = vector.broadcast %c16_i32_373 : i32 to vector<1x239xi32>
    %585 = arith.cmpi sge, %583, %584 : vector<1x239xi32>
    %c15_i32_374 = arith.constant 15 : i32
    %586 = vector.broadcast %c15_i32_374 : i32 to vector<1x239xi32>
    %587 = arith.andi %583, %586 : vector<1x239xi32>
    %c1_i32_375 = arith.constant 1 : i32
    %588 = vector.broadcast %c1_i32_375 : i32 to vector<1x239xi32>
    %589 = arith.cmpi sge, %587, %588 : vector<1x239xi32>
    %590 = arith.andi %585, %589 : vector<1x239xi1>
    %cst_376 = arith.constant 0.000000e+00 : f32
    %591 = vector.shape_cast %590 : vector<1x239xi1> to vector<1x239xi1>
    %592 = vector.broadcast %591 : vector<1x239xi1> to vector<8x239xi1>
    %593 = vector.broadcast %cst_376 : f32 to vector<8x239xf32>
    %594 = arith.select %592, %580, %593 : vector<8x239xi1>, vector<8x239xf32>
    %c48_377 = arith.constant 48 : index
    %c17_378 = arith.constant 17 : index
    %595 = vector.load %arg14[%c48_377, %c17_378] : memref<200x256xf32, #tpu.memory_space<vmem>>, vector<8x239xf32>
    tpu.vector_store %arg14[%c48_377, %c17_378], %594 {strides = array<i32>} : memref<200x256xf32, #tpu.memory_space<vmem>>, vector<8x239xf32>,
    %cst_379 = arith.constant 0.000000e+00 : f32
    %596 = vector.broadcast %cst_379 : f32 to vector<8x17xf32>
    %c48_380 = arith.constant 48 : index
    %c0_381 = arith.constant 0 : index
    %597 = vector.load %arg14[%c48_380, %c0_381] : memref<200x256xf32, #tpu.memory_space<vmem>>, vector<8x17xf32>
    tpu.vector_store %arg14[%c48_380, %c0_381], %596 {strides = array<i32>} : memref<200x256xf32, #tpu.memory_space<vmem>>, vector<8x17xf32>,
    %c0_382 = arith.constant 0 : index
    %c0_383 = arith.constant 0 : index
    %c0_384 = arith.constant 0 : index
    %598 = vector.load %arg10[%c0_382, %c0_383, %c0_384] : memref<1x8x256xf32, #tpu.memory_space<vmem>>, vector<1x8x240xf32>
    %599 = vector.shape_cast %598 : vector<1x8x240xf32> to vector<8x240xf32>
    %600 = tpu.iota {dimensions = array<i32: 1>} : vector<1x240xi32>
    %c16_i32_385 = arith.constant 16 : i32
    %601 = vector.broadcast %c16_i32_385 : i32 to vector<1x240xi32>
    %602 = arith.addi %600, %601 : vector<1x240xi32>
    %c16_i32_386 = arith.constant 16 : i32
    %603 = vector.broadcast %c16_i32_386 : i32 to vector<1x240xi32>
    %604 = arith.cmpi sge, %602, %603 : vector<1x240xi32>
    %cst_387 = arith.constant 0.000000e+00 : f32
    %605 = vector.shape_cast %604 : vector<1x240xi1> to vector<1x240xi1>
    %606 = vector.broadcast %605 : vector<1x240xi1> to vector<8x240xi1>
    %607 = vector.broadcast %cst_387 : f32 to vector<8x240xf32>
    %608 = arith.select %606, %599, %607 : vector<8x240xi1>, vector<8x240xf32>
    %c56_388 = arith.constant 56 : index
    %c16_389 = arith.constant 16 : index
    %609 = vector.load %arg14[%c56_388, %c16_389] : memref<200x256xf32, #tpu.memory_space<vmem>>, vector<8x240xf32>
    tpu.vector_store %arg14[%c56_388, %c16_389], %608 {strides = array<i32>} : memref<200x256xf32, #tpu.memory_space<vmem>>, vector<8x240xf32>,
    %cst_390 = arith.constant 0.000000e+00 : f32
    %610 = vector.broadcast %cst_390 : f32 to vector<8x16xf32>
    %c56_391 = arith.constant 56 : index
    %c0_392 = arith.constant 0 : index
    %611 = vector.load %arg14[%c56_391, %c0_392] : memref<200x256xf32, #tpu.memory_space<vmem>>, vector<8x16xf32>
    tpu.vector_store %arg14[%c56_391, %c0_392], %610 {strides = array<i32>} : memref<200x256xf32, #tpu.memory_space<vmem>>, vector<8x16xf32>,
    %c0_393 = arith.constant 0 : index
    %c0_394 = arith.constant 0 : index
    %c0_395 = arith.constant 0 : index
    %612 = vector.load %arg10[%c0_393, %c0_394, %c0_395] : memref<1x8x256xf32, #tpu.memory_space<vmem>>, vector<1x8x241xf32>
    %613 = vector.shape_cast %612 : vector<1x8x241xf32> to vector<8x241xf32>
    %614 = tpu.iota {dimensions = array<i32: 1>} : vector<1x241xi32>
    %c15_i32_396 = arith.constant 15 : i32
    %615 = vector.broadcast %c15_i32_396 : i32 to vector<1x241xi32>
    %616 = arith.addi %614, %615 : vector<1x241xi32>
    %c16_i32_397 = arith.constant 16 : i32
    %617 = vector.broadcast %c16_i32_397 : i32 to vector<1x241xi32>
    %618 = arith.cmpi sge, %616, %617 : vector<1x241xi32>
    %c15_i32_398 = arith.constant 15 : i32
    %619 = vector.broadcast %c15_i32_398 : i32 to vector<1x241xi32>
    %620 = arith.andi %616, %619 : vector<1x241xi32>
    %c15_i32_399 = arith.constant 15 : i32
    %621 = vector.broadcast %c15_i32_399 : i32 to vector<1x241xi32>
    %622 = arith.cmpi slt, %620, %621 : vector<1x241xi32>
    %623 = arith.andi %618, %622 : vector<1x241xi1>
    %cst_400 = arith.constant 0.000000e+00 : f32
    %624 = vector.shape_cast %623 : vector<1x241xi1> to vector<1x241xi1>
    %625 = vector.broadcast %624 : vector<1x241xi1> to vector<8x241xi1>
    %626 = vector.broadcast %cst_400 : f32 to vector<8x241xf32>
    %627 = arith.select %625, %613, %626 : vector<8x241xi1>, vector<8x241xf32>
    %c64_401 = arith.constant 64 : index
    %c15_402 = arith.constant 15 : index
    %628 = vector.load %arg14[%c64_401, %c15_402] : memref<200x256xf32, #tpu.memory_space<vmem>>, vector<8x241xf32>
    tpu.vector_store %arg14[%c64_401, %c15_402], %627 {strides = array<i32>} : memref<200x256xf32, #tpu.memory_space<vmem>>, vector<8x241xf32>,
    %cst_403 = arith.constant 0.000000e+00 : f32
    %629 = vector.broadcast %cst_403 : f32 to vector<8x15xf32>
    %c64_404 = arith.constant 64 : index
    %c0_405 = arith.constant 0 : index
    %630 = vector.load %arg14[%c64_404, %c0_405] : memref<200x256xf32, #tpu.memory_space<vmem>>, vector<8x15xf32>
    tpu.vector_store %arg14[%c64_404, %c0_405], %629 {strides = array<i32>} : memref<200x256xf32, #tpu.memory_space<vmem>>, vector<8x15xf32>,
    %c0_406 = arith.constant 0 : index
    %c0_407 = arith.constant 0 : index
    %c0_408 = arith.constant 0 : index
    %631 = vector.load %arg10[%c0_406, %c0_407, %c0_408] : memref<1x8x256xf32, #tpu.memory_space<vmem>>, vector<1x8x242xf32>
    %632 = vector.shape_cast %631 : vector<1x8x242xf32> to vector<8x242xf32>
    %633 = tpu.iota {dimensions = array<i32: 1>} : vector<1x242xi32>
    %c14_i32_409 = arith.constant 14 : i32
    %634 = vector.broadcast %c14_i32_409 : i32 to vector<1x242xi32>
    %635 = arith.addi %633, %634 : vector<1x242xi32>
    %c16_i32_410 = arith.constant 16 : i32
    %636 = vector.broadcast %c16_i32_410 : i32 to vector<1x242xi32>
    %637 = arith.cmpi sge, %635, %636 : vector<1x242xi32>
    %c15_i32_411 = arith.constant 15 : i32
    %638 = vector.broadcast %c15_i32_411 : i32 to vector<1x242xi32>
    %639 = arith.andi %635, %638 : vector<1x242xi32>
    %c14_i32_412 = arith.constant 14 : i32
    %640 = vector.broadcast %c14_i32_412 : i32 to vector<1x242xi32>
    %641 = arith.cmpi slt, %639, %640 : vector<1x242xi32>
    %642 = arith.andi %637, %641 : vector<1x242xi1>
    %cst_413 = arith.constant 0.000000e+00 : f32
    %643 = vector.shape_cast %642 : vector<1x242xi1> to vector<1x242xi1>
    %644 = vector.broadcast %643 : vector<1x242xi1> to vector<8x242xi1>
    %645 = vector.broadcast %cst_413 : f32 to vector<8x242xf32>
    %646 = arith.select %644, %632, %645 : vector<8x242xi1>, vector<8x242xf32>
    %c72_414 = arith.constant 72 : index
    %c14 = arith.constant 14 : index
    %647 = vector.load %arg14[%c72_414, %c14] : memref<200x256xf32, #tpu.memory_space<vmem>>, vector<8x242xf32>
    tpu.vector_store %arg14[%c72_414, %c14], %646 {strides = array<i32>} : memref<200x256xf32, #tpu.memory_space<vmem>>, vector<8x242xf32>,
    %cst_415 = arith.constant 0.000000e+00 : f32
    %648 = vector.broadcast %cst_415 : f32 to vector<8x14xf32>
    %c72_416 = arith.constant 72 : index
    %c0_417 = arith.constant 0 : index
    %649 = vector.load %arg14[%c72_416, %c0_417] : memref<200x256xf32, #tpu.memory_space<vmem>>, vector<8x14xf32>
    tpu.vector_store %arg14[%c72_416, %c0_417], %648 {strides = array<i32>} : memref<200x256xf32, #tpu.memory_space<vmem>>, vector<8x14xf32>,
    %c0_418 = arith.constant 0 : index
    %c0_419 = arith.constant 0 : index
    %c0_420 = arith.constant 0 : index
    %650 = vector.load %arg10[%c0_418, %c0_419, %c0_420] : memref<1x8x256xf32, #tpu.memory_space<vmem>>, vector<1x8x254xf32>
    %651 = vector.shape_cast %650 : vector<1x8x254xf32> to vector<8x254xf32>
    %652 = tpu.iota {dimensions = array<i32: 1>} : vector<1x254xi32>
    %c2_i32_421 = arith.constant 2 : i32
    %653 = vector.broadcast %c2_i32_421 : i32 to vector<1x254xi32>
    %654 = arith.addi %652, %653 : vector<1x254xi32>
    %c15_i32_422 = arith.constant 15 : i32
    %655 = vector.broadcast %c15_i32_422 : i32 to vector<1x254xi32>
    %656 = arith.andi %654, %655 : vector<1x254xi32>
    %c2_i32_423 = arith.constant 2 : i32
    %657 = vector.broadcast %c2_i32_423 : i32 to vector<1x254xi32>
    %658 = arith.cmpi sge, %656, %657 : vector<1x254xi32>
    %cst_424 = arith.constant 0.000000e+00 : f32
    %659 = vector.shape_cast %658 : vector<1x254xi1> to vector<1x254xi1>
    %660 = vector.broadcast %659 : vector<1x254xi1> to vector<8x254xi1>
    %661 = vector.broadcast %cst_424 : f32 to vector<8x254xf32>
    %662 = arith.select %660, %651, %661 : vector<8x254xi1>, vector<8x254xf32>
    %c80_425 = arith.constant 80 : index
    %c2 = arith.constant 2 : index
    %663 = vector.load %arg14[%c80_425, %c2] : memref<200x256xf32, #tpu.memory_space<vmem>>, vector<8x254xf32>
    tpu.vector_store %arg14[%c80_425, %c2], %662 {strides = array<i32>} : memref<200x256xf32, #tpu.memory_space<vmem>>, vector<8x254xf32>,
    %cst_426 = arith.constant 0.000000e+00 : f32
    %664 = vector.broadcast %cst_426 : f32 to vector<8x2xf32>
    %c80_427 = arith.constant 80 : index
    %c0_428 = arith.constant 0 : index
    %665 = vector.load %arg14[%c80_427, %c0_428] : memref<200x256xf32, #tpu.memory_space<vmem>>, vector<8x2xf32>
    tpu.vector_store %arg14[%c80_427, %c0_428], %664 {strides = array<i32>} : memref<200x256xf32, #tpu.memory_space<vmem>>, vector<8x2xf32>,
    %c0_429 = arith.constant 0 : index
    %c0_430 = arith.constant 0 : index
    %c0_431 = arith.constant 0 : index
    %666 = vector.load %arg10[%c0_429, %c0_430, %c0_431] : memref<1x8x256xf32, #tpu.memory_space<vmem>>, vector<1x8x255xf32>
    %667 = vector.shape_cast %666 : vector<1x8x255xf32> to vector<8x255xf32>
    %668 = tpu.iota {dimensions = array<i32: 1>} : vector<1x255xi32>
    %c1_i32_432 = arith.constant 1 : i32
    %669 = vector.broadcast %c1_i32_432 : i32 to vector<1x255xi32>
    %670 = arith.addi %668, %669 : vector<1x255xi32>
    %c15_i32_433 = arith.constant 15 : i32
    %671 = vector.broadcast %c15_i32_433 : i32 to vector<1x255xi32>
    %672 = arith.andi %670, %671 : vector<1x255xi32>
    %c1_i32_434 = arith.constant 1 : i32
    %673 = vector.broadcast %c1_i32_434 : i32 to vector<1x255xi32>
    %674 = arith.cmpi sge, %672, %673 : vector<1x255xi32>
    %cst_435 = arith.constant 0.000000e+00 : f32
    %675 = vector.shape_cast %674 : vector<1x255xi1> to vector<1x255xi1>
    %676 = vector.broadcast %675 : vector<1x255xi1> to vector<8x255xi1>
    %677 = vector.broadcast %cst_435 : f32 to vector<8x255xf32>
    %678 = arith.select %676, %667, %677 : vector<8x255xi1>, vector<8x255xf32>
    %c88_436 = arith.constant 88 : index
    %c1_437 = arith.constant 1 : index
    %679 = vector.load %arg14[%c88_436, %c1_437] : memref<200x256xf32, #tpu.memory_space<vmem>>, vector<8x255xf32>
    tpu.vector_store %arg14[%c88_436, %c1_437], %678 {strides = array<i32>} : memref<200x256xf32, #tpu.memory_space<vmem>>, vector<8x255xf32>,
    %cst_438 = arith.constant 0.000000e+00 : f32
    %680 = vector.broadcast %cst_438 : f32 to vector<8x1xf32>
    %c88_439 = arith.constant 88 : index
    %c0_440 = arith.constant 0 : index
    %681 = vector.load %arg14[%c88_439, %c0_440] : memref<200x256xf32, #tpu.memory_space<vmem>>, vector<8x1xf32>
    tpu.vector_store %arg14[%c88_439, %c0_440], %680 {strides = array<i32>} : memref<200x256xf32, #tpu.memory_space<vmem>>, vector<8x1xf32>,
    %c0_441 = arith.constant 0 : index
    %c0_442 = arith.constant 0 : index
    %c0_443 = arith.constant 0 : index
    %682 = vector.load %arg10[%c0_441, %c0_442, %c0_443] : memref<1x8x256xf32, #tpu.memory_space<vmem>>, vector<1x8x256xf32>
    %683 = vector.shape_cast %682 : vector<1x8x256xf32> to vector<8x256xf32>
    %c96_444 = arith.constant 96 : index
    %c0_445 = arith.constant 0 : index
    %684 = vector.load %arg14[%c96_444, %c0_445] : memref<200x256xf32, #tpu.memory_space<vmem>>, vector<8x256xf32>
    tpu.vector_store %arg14[%c96_444, %c0_445], %683 {strides = array<i32>} : memref<200x256xf32, #tpu.memory_space<vmem>>, vector<8x256xf32>,
    %c0_446 = arith.constant 0 : index
    %c0_447 = arith.constant 0 : index
    %c1_448 = arith.constant 1 : index
    %685 = vector.load %arg10[%c0_446, %c0_447, %c1_448] : memref<1x8x256xf32, #tpu.memory_space<vmem>>, vector<1x8x255xf32>
    %686 = vector.shape_cast %685 : vector<1x8x255xf32> to vector<8x255xf32>
    %687 = tpu.iota {dimensions = array<i32: 1>} : vector<1x255xi32>
    %c0_i32_449 = arith.constant 0 : i32
    %688 = vector.broadcast %c0_i32_449 : i32 to vector<1x255xi32>
    %689 = arith.addi %687, %688 : vector<1x255xi32>
    %c15_i32_450 = arith.constant 15 : i32
    %690 = vector.broadcast %c15_i32_450 : i32 to vector<1x255xi32>
    %691 = arith.andi %689, %690 : vector<1x255xi32>
    %c15_i32_451 = arith.constant 15 : i32
    %692 = vector.broadcast %c15_i32_451 : i32 to vector<1x255xi32>
    %693 = arith.cmpi slt, %691, %692 : vector<1x255xi32>
    %cst_452 = arith.constant 0.000000e+00 : f32
    %694 = vector.shape_cast %693 : vector<1x255xi1> to vector<1x255xi1>
    %695 = vector.broadcast %694 : vector<1x255xi1> to vector<8x255xi1>
    %696 = vector.broadcast %cst_452 : f32 to vector<8x255xf32>
    %697 = arith.select %695, %686, %696 : vector<8x255xi1>, vector<8x255xf32>
    %c104_453 = arith.constant 104 : index
    %c0_454 = arith.constant 0 : index
    %698 = vector.load %arg14[%c104_453, %c0_454] : memref<200x256xf32, #tpu.memory_space<vmem>>, vector<8x255xf32>
    tpu.vector_store %arg14[%c104_453, %c0_454], %697 {strides = array<i32>} : memref<200x256xf32, #tpu.memory_space<vmem>>, vector<8x255xf32>,
    %cst_455 = arith.constant 0.000000e+00 : f32
    %699 = vector.broadcast %cst_455 : f32 to vector<8x1xf32>
    %c104_456 = arith.constant 104 : index
    %c255_457 = arith.constant 255 : index
    %700 = vector.load %arg14[%c104_456, %c255_457] : memref<200x256xf32, #tpu.memory_space<vmem>>, vector<8x1xf32>
    tpu.vector_store %arg14[%c104_456, %c255_457], %699 {strides = array<i32>} : memref<200x256xf32, #tpu.memory_space<vmem>>, vector<8x1xf32>,
    %c0_458 = arith.constant 0 : index
    %c0_459 = arith.constant 0 : index
    %c2_460 = arith.constant 2 : index
    %701 = vector.load %arg10[%c0_458, %c0_459, %c2_460] : memref<1x8x256xf32, #tpu.memory_space<vmem>>, vector<1x8x254xf32>
    %702 = vector.shape_cast %701 : vector<1x8x254xf32> to vector<8x254xf32>
    %703 = tpu.iota {dimensions = array<i32: 1>} : vector<1x254xi32>
    %c0_i32_461 = arith.constant 0 : i32
    %704 = vector.broadcast %c0_i32_461 : i32 to vector<1x254xi32>
    %705 = arith.addi %703, %704 : vector<1x254xi32>
    %c15_i32_462 = arith.constant 15 : i32
    %706 = vector.broadcast %c15_i32_462 : i32 to vector<1x254xi32>
    %707 = arith.andi %705, %706 : vector<1x254xi32>
    %c14_i32_463 = arith.constant 14 : i32
    %708 = vector.broadcast %c14_i32_463 : i32 to vector<1x254xi32>
    %709 = arith.cmpi slt, %707, %708 : vector<1x254xi32>
    %cst_464 = arith.constant 0.000000e+00 : f32
    %710 = vector.shape_cast %709 : vector<1x254xi1> to vector<1x254xi1>
    %711 = vector.broadcast %710 : vector<1x254xi1> to vector<8x254xi1>
    %712 = vector.broadcast %cst_464 : f32 to vector<8x254xf32>
    %713 = arith.select %711, %702, %712 : vector<8x254xi1>, vector<8x254xf32>
    %c112_465 = arith.constant 112 : index
    %c0_466 = arith.constant 0 : index
    %714 = vector.load %arg14[%c112_465, %c0_466] : memref<200x256xf32, #tpu.memory_space<vmem>>, vector<8x254xf32>
    tpu.vector_store %arg14[%c112_465, %c0_466], %713 {strides = array<i32>} : memref<200x256xf32, #tpu.memory_space<vmem>>, vector<8x254xf32>,
    %cst_467 = arith.constant 0.000000e+00 : f32
    %715 = vector.broadcast %cst_467 : f32 to vector<8x2xf32>
    %c112_468 = arith.constant 112 : index
    %c254 = arith.constant 254 : index
    %716 = vector.load %arg14[%c112_468, %c254] : memref<200x256xf32, #tpu.memory_space<vmem>>, vector<8x2xf32>
    tpu.vector_store %arg14[%c112_468, %c254], %715 {strides = array<i32>} : memref<200x256xf32, #tpu.memory_space<vmem>>, vector<8x2xf32>,
    %c0_469 = arith.constant 0 : index
    %c0_470 = arith.constant 0 : index
    %c14_471 = arith.constant 14 : index
    %717 = vector.load %arg10[%c0_469, %c0_470, %c14_471] : memref<1x8x256xf32, #tpu.memory_space<vmem>>, vector<1x8x242xf32>
    %718 = vector.shape_cast %717 : vector<1x8x242xf32> to vector<8x242xf32>
    %719 = tpu.iota {dimensions = array<i32: 1>} : vector<1x242xi32>
    %c0_i32_472 = arith.constant 0 : i32
    %720 = vector.broadcast %c0_i32_472 : i32 to vector<1x242xi32>
    %721 = arith.addi %719, %720 : vector<1x242xi32>
    %c240_i32_473 = arith.constant 240 : i32
    %722 = vector.broadcast %c240_i32_473 : i32 to vector<1x242xi32>
    %723 = arith.cmpi slt, %721, %722 : vector<1x242xi32>
    %c15_i32_474 = arith.constant 15 : i32
    %724 = vector.broadcast %c15_i32_474 : i32 to vector<1x242xi32>
    %725 = arith.andi %721, %724 : vector<1x242xi32>
    %c2_i32_475 = arith.constant 2 : i32
    %726 = vector.broadcast %c2_i32_475 : i32 to vector<1x242xi32>
    %727 = arith.cmpi sge, %725, %726 : vector<1x242xi32>
    %728 = arith.andi %723, %727 : vector<1x242xi1>
    %cst_476 = arith.constant 0.000000e+00 : f32
    %729 = vector.shape_cast %728 : vector<1x242xi1> to vector<1x242xi1>
    %730 = vector.broadcast %729 : vector<1x242xi1> to vector<8x242xi1>
    %731 = vector.broadcast %cst_476 : f32 to vector<8x242xf32>
    %732 = arith.select %730, %718, %731 : vector<8x242xi1>, vector<8x242xf32>
    %c120_477 = arith.constant 120 : index
    %c0_478 = arith.constant 0 : index
    %733 = vector.load %arg14[%c120_477, %c0_478] : memref<200x256xf32, #tpu.memory_space<vmem>>, vector<8x242xf32>
    tpu.vector_store %arg14[%c120_477, %c0_478], %732 {strides = array<i32>} : memref<200x256xf32, #tpu.memory_space<vmem>>, vector<8x242xf32>,
    %cst_479 = arith.constant 0.000000e+00 : f32
    %734 = vector.broadcast %cst_479 : f32 to vector<8x14xf32>
    %c120_480 = arith.constant 120 : index
    %c242 = arith.constant 242 : index
    %735 = vector.load %arg14[%c120_480, %c242] : memref<200x256xf32, #tpu.memory_space<vmem>>, vector<8x14xf32>
    tpu.vector_store %arg14[%c120_480, %c242], %734 {strides = array<i32>} : memref<200x256xf32, #tpu.memory_space<vmem>>, vector<8x14xf32>,
    %c0_481 = arith.constant 0 : index
    %c0_482 = arith.constant 0 : index
    %c15_483 = arith.constant 15 : index
    %736 = vector.load %arg10[%c0_481, %c0_482, %c15_483] : memref<1x8x256xf32, #tpu.memory_space<vmem>>, vector<1x8x241xf32>
    %737 = vector.shape_cast %736 : vector<1x8x241xf32> to vector<8x241xf32>
    %738 = tpu.iota {dimensions = array<i32: 1>} : vector<1x241xi32>
    %c0_i32_484 = arith.constant 0 : i32
    %739 = vector.broadcast %c0_i32_484 : i32 to vector<1x241xi32>
    %740 = arith.addi %738, %739 : vector<1x241xi32>
    %c240_i32_485 = arith.constant 240 : i32
    %741 = vector.broadcast %c240_i32_485 : i32 to vector<1x241xi32>
    %742 = arith.cmpi slt, %740, %741 : vector<1x241xi32>
    %c15_i32_486 = arith.constant 15 : i32
    %743 = vector.broadcast %c15_i32_486 : i32 to vector<1x241xi32>
    %744 = arith.andi %740, %743 : vector<1x241xi32>
    %c1_i32_487 = arith.constant 1 : i32
    %745 = vector.broadcast %c1_i32_487 : i32 to vector<1x241xi32>
    %746 = arith.cmpi sge, %744, %745 : vector<1x241xi32>
    %747 = arith.andi %742, %746 : vector<1x241xi1>
    %cst_488 = arith.constant 0.000000e+00 : f32
    %748 = vector.shape_cast %747 : vector<1x241xi1> to vector<1x241xi1>
    %749 = vector.broadcast %748 : vector<1x241xi1> to vector<8x241xi1>
    %750 = vector.broadcast %cst_488 : f32 to vector<8x241xf32>
    %751 = arith.select %749, %737, %750 : vector<8x241xi1>, vector<8x241xf32>
    %c128_489 = arith.constant 128 : index
    %c0_490 = arith.constant 0 : index
    %752 = vector.load %arg14[%c128_489, %c0_490] : memref<200x256xf32, #tpu.memory_space<vmem>>, vector<8x241xf32>
    tpu.vector_store %arg14[%c128_489, %c0_490], %751 {strides = array<i32>} : memref<200x256xf32, #tpu.memory_space<vmem>>, vector<8x241xf32>,
    %cst_491 = arith.constant 0.000000e+00 : f32
    %753 = vector.broadcast %cst_491 : f32 to vector<8x15xf32>
    %c128_492 = arith.constant 128 : index
    %c241_493 = arith.constant 241 : index
    %754 = vector.load %arg14[%c128_492, %c241_493] : memref<200x256xf32, #tpu.memory_space<vmem>>, vector<8x15xf32>
    tpu.vector_store %arg14[%c128_492, %c241_493], %753 {strides = array<i32>} : memref<200x256xf32, #tpu.memory_space<vmem>>, vector<8x15xf32>,
    %c0_494 = arith.constant 0 : index
    %c0_495 = arith.constant 0 : index
    %c16_496 = arith.constant 16 : index
    %755 = vector.load %arg10[%c0_494, %c0_495, %c16_496] : memref<1x8x256xf32, #tpu.memory_space<vmem>>, vector<1x8x240xf32>
    %756 = vector.shape_cast %755 : vector<1x8x240xf32> to vector<8x240xf32>
    %757 = tpu.iota {dimensions = array<i32: 1>} : vector<1x240xi32>
    %c0_i32_497 = arith.constant 0 : i32
    %758 = vector.broadcast %c0_i32_497 : i32 to vector<1x240xi32>
    %759 = arith.addi %757, %758 : vector<1x240xi32>
    %c240_i32_498 = arith.constant 240 : i32
    %760 = vector.broadcast %c240_i32_498 : i32 to vector<1x240xi32>
    %761 = arith.cmpi slt, %759, %760 : vector<1x240xi32>
    %cst_499 = arith.constant 0.000000e+00 : f32
    %762 = vector.shape_cast %761 : vector<1x240xi1> to vector<1x240xi1>
    %763 = vector.broadcast %762 : vector<1x240xi1> to vector<8x240xi1>
    %764 = vector.broadcast %cst_499 : f32 to vector<8x240xf32>
    %765 = arith.select %763, %756, %764 : vector<8x240xi1>, vector<8x240xf32>
    %c136_500 = arith.constant 136 : index
    %c0_501 = arith.constant 0 : index
    %766 = vector.load %arg14[%c136_500, %c0_501] : memref<200x256xf32, #tpu.memory_space<vmem>>, vector<8x240xf32>
    tpu.vector_store %arg14[%c136_500, %c0_501], %765 {strides = array<i32>} : memref<200x256xf32, #tpu.memory_space<vmem>>, vector<8x240xf32>,
    %cst_502 = arith.constant 0.000000e+00 : f32
    %767 = vector.broadcast %cst_502 : f32 to vector<8x16xf32>
    %c136_503 = arith.constant 136 : index
    %c240_504 = arith.constant 240 : index
    %768 = vector.load %arg14[%c136_503, %c240_504] : memref<200x256xf32, #tpu.memory_space<vmem>>, vector<8x16xf32>
    tpu.vector_store %arg14[%c136_503, %c240_504], %767 {strides = array<i32>} : memref<200x256xf32, #tpu.memory_space<vmem>>, vector<8x16xf32>,
    %c0_505 = arith.constant 0 : index
    %c0_506 = arith.constant 0 : index
    %c17_507 = arith.constant 17 : index
    %769 = vector.load %arg10[%c0_505, %c0_506, %c17_507] : memref<1x8x256xf32, #tpu.memory_space<vmem>>, vector<1x8x239xf32>
    %770 = vector.shape_cast %769 : vector<1x8x239xf32> to vector<8x239xf32>
    %771 = tpu.iota {dimensions = array<i32: 1>} : vector<1x239xi32>
    %c0_i32_508 = arith.constant 0 : i32
    %772 = vector.broadcast %c0_i32_508 : i32 to vector<1x239xi32>
    %773 = arith.addi %771, %772 : vector<1x239xi32>
    %c240_i32_509 = arith.constant 240 : i32
    %774 = vector.broadcast %c240_i32_509 : i32 to vector<1x239xi32>
    %775 = arith.cmpi slt, %773, %774 : vector<1x239xi32>
    %c15_i32_510 = arith.constant 15 : i32
    %776 = vector.broadcast %c15_i32_510 : i32 to vector<1x239xi32>
    %777 = arith.andi %773, %776 : vector<1x239xi32>
    %c15_i32_511 = arith.constant 15 : i32
    %778 = vector.broadcast %c15_i32_511 : i32 to vector<1x239xi32>
    %779 = arith.cmpi slt, %777, %778 : vector<1x239xi32>
    %780 = arith.andi %775, %779 : vector<1x239xi1>
    %cst_512 = arith.constant 0.000000e+00 : f32
    %781 = vector.shape_cast %780 : vector<1x239xi1> to vector<1x239xi1>
    %782 = vector.broadcast %781 : vector<1x239xi1> to vector<8x239xi1>
    %783 = vector.broadcast %cst_512 : f32 to vector<8x239xf32>
    %784 = arith.select %782, %770, %783 : vector<8x239xi1>, vector<8x239xf32>
    %c144_513 = arith.constant 144 : index
    %c0_514 = arith.constant 0 : index
    %785 = vector.load %arg14[%c144_513, %c0_514] : memref<200x256xf32, #tpu.memory_space<vmem>>, vector<8x239xf32>
    tpu.vector_store %arg14[%c144_513, %c0_514], %784 {strides = array<i32>} : memref<200x256xf32, #tpu.memory_space<vmem>>, vector<8x239xf32>,
    %cst_515 = arith.constant 0.000000e+00 : f32
    %786 = vector.broadcast %cst_515 : f32 to vector<8x17xf32>
    %c144_516 = arith.constant 144 : index
    %c239_517 = arith.constant 239 : index
    %787 = vector.load %arg14[%c144_516, %c239_517] : memref<200x256xf32, #tpu.memory_space<vmem>>, vector<8x17xf32>
    tpu.vector_store %arg14[%c144_516, %c239_517], %786 {strides = array<i32>} : memref<200x256xf32, #tpu.memory_space<vmem>>, vector<8x17xf32>,
    %c0_518 = arith.constant 0 : index
    %c0_519 = arith.constant 0 : index
    %c18_520 = arith.constant 18 : index
    %788 = vector.load %arg10[%c0_518, %c0_519, %c18_520] : memref<1x8x256xf32, #tpu.memory_space<vmem>>, vector<1x8x238xf32>
    %789 = vector.shape_cast %788 : vector<1x8x238xf32> to vector<8x238xf32>
    %790 = tpu.iota {dimensions = array<i32: 1>} : vector<1x238xi32>
    %c0_i32_521 = arith.constant 0 : i32
    %791 = vector.broadcast %c0_i32_521 : i32 to vector<1x238xi32>
    %792 = arith.addi %790, %791 : vector<1x238xi32>
    %c240_i32_522 = arith.constant 240 : i32
    %793 = vector.broadcast %c240_i32_522 : i32 to vector<1x238xi32>
    %794 = arith.cmpi slt, %792, %793 : vector<1x238xi32>
    %c15_i32_523 = arith.constant 15 : i32
    %795 = vector.broadcast %c15_i32_523 : i32 to vector<1x238xi32>
    %796 = arith.andi %792, %795 : vector<1x238xi32>
    %c14_i32_524 = arith.constant 14 : i32
    %797 = vector.broadcast %c14_i32_524 : i32 to vector<1x238xi32>
    %798 = arith.cmpi slt, %796, %797 : vector<1x238xi32>
    %799 = arith.andi %794, %798 : vector<1x238xi1>
    %cst_525 = arith.constant 0.000000e+00 : f32
    %800 = vector.shape_cast %799 : vector<1x238xi1> to vector<1x238xi1>
    %801 = vector.broadcast %800 : vector<1x238xi1> to vector<8x238xi1>
    %802 = vector.broadcast %cst_525 : f32 to vector<8x238xf32>
    %803 = arith.select %801, %789, %802 : vector<8x238xi1>, vector<8x238xf32>
    %c152_526 = arith.constant 152 : index
    %c0_527 = arith.constant 0 : index
    %804 = vector.load %arg14[%c152_526, %c0_527] : memref<200x256xf32, #tpu.memory_space<vmem>>, vector<8x238xf32>
    tpu.vector_store %arg14[%c152_526, %c0_527], %803 {strides = array<i32>} : memref<200x256xf32, #tpu.memory_space<vmem>>, vector<8x238xf32>,
    %cst_528 = arith.constant 0.000000e+00 : f32
    %805 = vector.broadcast %cst_528 : f32 to vector<8x18xf32>
    %c152_529 = arith.constant 152 : index
    %c238 = arith.constant 238 : index
    %806 = vector.load %arg14[%c152_529, %c238] : memref<200x256xf32, #tpu.memory_space<vmem>>, vector<8x18xf32>
    tpu.vector_store %arg14[%c152_529, %c238], %805 {strides = array<i32>} : memref<200x256xf32, #tpu.memory_space<vmem>>, vector<8x18xf32>,
    %c0_530 = arith.constant 0 : index
    %c0_531 = arith.constant 0 : index
    %c30_532 = arith.constant 30 : index
    %807 = vector.load %arg10[%c0_530, %c0_531, %c30_532] : memref<1x8x256xf32, #tpu.memory_space<vmem>>, vector<1x8x226xf32>
    %808 = vector.shape_cast %807 : vector<1x8x226xf32> to vector<8x226xf32>
    %809 = tpu.iota {dimensions = array<i32: 1>} : vector<1x226xi32>
    %c0_i32_533 = arith.constant 0 : i32
    %810 = vector.broadcast %c0_i32_533 : i32 to vector<1x226xi32>
    %811 = arith.addi %809, %810 : vector<1x226xi32>
    %c224_i32 = arith.constant 224 : i32
    %812 = vector.broadcast %c224_i32 : i32 to vector<1x226xi32>
    %813 = arith.cmpi slt, %811, %812 : vector<1x226xi32>
    %c15_i32_534 = arith.constant 15 : i32
    %814 = vector.broadcast %c15_i32_534 : i32 to vector<1x226xi32>
    %815 = arith.andi %811, %814 : vector<1x226xi32>
    %c2_i32_535 = arith.constant 2 : i32
    %816 = vector.broadcast %c2_i32_535 : i32 to vector<1x226xi32>
    %817 = arith.cmpi sge, %815, %816 : vector<1x226xi32>
    %818 = arith.andi %813, %817 : vector<1x226xi1>
    %cst_536 = arith.constant 0.000000e+00 : f32
    %819 = vector.shape_cast %818 : vector<1x226xi1> to vector<1x226xi1>
    %820 = vector.broadcast %819 : vector<1x226xi1> to vector<8x226xi1>
    %821 = vector.broadcast %cst_536 : f32 to vector<8x226xf32>
    %822 = arith.select %820, %808, %821 : vector<8x226xi1>, vector<8x226xf32>
    %c160_537 = arith.constant 160 : index
    %c0_538 = arith.constant 0 : index
    %823 = vector.load %arg14[%c160_537, %c0_538] : memref<200x256xf32, #tpu.memory_space<vmem>>, vector<8x226xf32>
    tpu.vector_store %arg14[%c160_537, %c0_538], %822 {strides = array<i32>} : memref<200x256xf32, #tpu.memory_space<vmem>>, vector<8x226xf32>,
    %cst_539 = arith.constant 0.000000e+00 : f32
    %824 = vector.broadcast %cst_539 : f32 to vector<8x30xf32>
    %c160_540 = arith.constant 160 : index
    %c226 = arith.constant 226 : index
    %825 = vector.load %arg14[%c160_540, %c226] : memref<200x256xf32, #tpu.memory_space<vmem>>, vector<8x30xf32>
    tpu.vector_store %arg14[%c160_540, %c226], %824 {strides = array<i32>} : memref<200x256xf32, #tpu.memory_space<vmem>>, vector<8x30xf32>,
    %c0_541 = arith.constant 0 : index
    %c0_542 = arith.constant 0 : index
    %c31_543 = arith.constant 31 : index
    %826 = vector.load %arg10[%c0_541, %c0_542, %c31_543] : memref<1x8x256xf32, #tpu.memory_space<vmem>>, vector<1x8x225xf32>
    %827 = vector.shape_cast %826 : vector<1x8x225xf32> to vector<8x225xf32>
    %828 = tpu.iota {dimensions = array<i32: 1>} : vector<1x225xi32>
    %c0_i32_544 = arith.constant 0 : i32
    %829 = vector.broadcast %c0_i32_544 : i32 to vector<1x225xi32>
    %830 = arith.addi %828, %829 : vector<1x225xi32>
    %c224_i32_545 = arith.constant 224 : i32
    %831 = vector.broadcast %c224_i32_545 : i32 to vector<1x225xi32>
    %832 = arith.cmpi slt, %830, %831 : vector<1x225xi32>
    %c15_i32_546 = arith.constant 15 : i32
    %833 = vector.broadcast %c15_i32_546 : i32 to vector<1x225xi32>
    %834 = arith.andi %830, %833 : vector<1x225xi32>
    %c1_i32_547 = arith.constant 1 : i32
    %835 = vector.broadcast %c1_i32_547 : i32 to vector<1x225xi32>
    %836 = arith.cmpi sge, %834, %835 : vector<1x225xi32>
    %837 = arith.andi %832, %836 : vector<1x225xi1>
    %cst_548 = arith.constant 0.000000e+00 : f32
    %838 = vector.shape_cast %837 : vector<1x225xi1> to vector<1x225xi1>
    %839 = vector.broadcast %838 : vector<1x225xi1> to vector<8x225xi1>
    %840 = vector.broadcast %cst_548 : f32 to vector<8x225xf32>
    %841 = arith.select %839, %827, %840 : vector<8x225xi1>, vector<8x225xf32>
    %c168_549 = arith.constant 168 : index
    %c0_550 = arith.constant 0 : index
    %842 = vector.load %arg14[%c168_549, %c0_550] : memref<200x256xf32, #tpu.memory_space<vmem>>, vector<8x225xf32>
    tpu.vector_store %arg14[%c168_549, %c0_550], %841 {strides = array<i32>} : memref<200x256xf32, #tpu.memory_space<vmem>>, vector<8x225xf32>,
    %cst_551 = arith.constant 0.000000e+00 : f32
    %843 = vector.broadcast %cst_551 : f32 to vector<8x31xf32>
    %c168_552 = arith.constant 168 : index
    %c225 = arith.constant 225 : index
    %844 = vector.load %arg14[%c168_552, %c225] : memref<200x256xf32, #tpu.memory_space<vmem>>, vector<8x31xf32>
    tpu.vector_store %arg14[%c168_552, %c225], %843 {strides = array<i32>} : memref<200x256xf32, #tpu.memory_space<vmem>>, vector<8x31xf32>,
    %c0_553 = arith.constant 0 : index
    %c0_554 = arith.constant 0 : index
    %c32_555 = arith.constant 32 : index
    %845 = vector.load %arg10[%c0_553, %c0_554, %c32_555] : memref<1x8x256xf32, #tpu.memory_space<vmem>>, vector<1x8x224xf32>
    %846 = vector.shape_cast %845 : vector<1x8x224xf32> to vector<8x224xf32>
    %847 = tpu.iota {dimensions = array<i32: 1>} : vector<1x224xi32>
    %c0_i32_556 = arith.constant 0 : i32
    %848 = vector.broadcast %c0_i32_556 : i32 to vector<1x224xi32>
    %849 = arith.addi %847, %848 : vector<1x224xi32>
    %c224_i32_557 = arith.constant 224 : i32
    %850 = vector.broadcast %c224_i32_557 : i32 to vector<1x224xi32>
    %851 = arith.cmpi slt, %849, %850 : vector<1x224xi32>
    %cst_558 = arith.constant 0.000000e+00 : f32
    %852 = vector.shape_cast %851 : vector<1x224xi1> to vector<1x224xi1>
    %853 = vector.broadcast %852 : vector<1x224xi1> to vector<8x224xi1>
    %854 = vector.broadcast %cst_558 : f32 to vector<8x224xf32>
    %855 = arith.select %853, %846, %854 : vector<8x224xi1>, vector<8x224xf32>
    %c176_559 = arith.constant 176 : index
    %c0_560 = arith.constant 0 : index
    %856 = vector.load %arg14[%c176_559, %c0_560] : memref<200x256xf32, #tpu.memory_space<vmem>>, vector<8x224xf32>
    tpu.vector_store %arg14[%c176_559, %c0_560], %855 {strides = array<i32>} : memref<200x256xf32, #tpu.memory_space<vmem>>, vector<8x224xf32>,
    %cst_561 = arith.constant 0.000000e+00 : f32
    %857 = vector.broadcast %cst_561 : f32 to vector<8x32xf32>
    %c176_562 = arith.constant 176 : index
    %c224 = arith.constant 224 : index
    %858 = vector.load %arg14[%c176_562, %c224] : memref<200x256xf32, #tpu.memory_space<vmem>>, vector<8x32xf32>
    tpu.vector_store %arg14[%c176_562, %c224], %857 {strides = array<i32>} : memref<200x256xf32, #tpu.memory_space<vmem>>, vector<8x32xf32>,
    %c0_563 = arith.constant 0 : index
    %c0_564 = arith.constant 0 : index
    %c33_565 = arith.constant 33 : index
    %859 = vector.load %arg10[%c0_563, %c0_564, %c33_565] : memref<1x8x256xf32, #tpu.memory_space<vmem>>, vector<1x8x223xf32>
    %860 = vector.shape_cast %859 : vector<1x8x223xf32> to vector<8x223xf32>
    %861 = tpu.iota {dimensions = array<i32: 1>} : vector<1x223xi32>
    %c0_i32_566 = arith.constant 0 : i32
    %862 = vector.broadcast %c0_i32_566 : i32 to vector<1x223xi32>
    %863 = arith.addi %861, %862 : vector<1x223xi32>
    %c224_i32_567 = arith.constant 224 : i32
    %864 = vector.broadcast %c224_i32_567 : i32 to vector<1x223xi32>
    %865 = arith.cmpi slt, %863, %864 : vector<1x223xi32>
    %c15_i32_568 = arith.constant 15 : i32
    %866 = vector.broadcast %c15_i32_568 : i32 to vector<1x223xi32>
    %867 = arith.andi %863, %866 : vector<1x223xi32>
    %c15_i32_569 = arith.constant 15 : i32
    %868 = vector.broadcast %c15_i32_569 : i32 to vector<1x223xi32>
    %869 = arith.cmpi slt, %867, %868 : vector<1x223xi32>
    %870 = arith.andi %865, %869 : vector<1x223xi1>
    %cst_570 = arith.constant 0.000000e+00 : f32
    %871 = vector.shape_cast %870 : vector<1x223xi1> to vector<1x223xi1>
    %872 = vector.broadcast %871 : vector<1x223xi1> to vector<8x223xi1>
    %873 = vector.broadcast %cst_570 : f32 to vector<8x223xf32>
    %874 = arith.select %872, %860, %873 : vector<8x223xi1>, vector<8x223xf32>
    %c184_571 = arith.constant 184 : index
    %c0_572 = arith.constant 0 : index
    %875 = vector.load %arg14[%c184_571, %c0_572] : memref<200x256xf32, #tpu.memory_space<vmem>>, vector<8x223xf32>
    tpu.vector_store %arg14[%c184_571, %c0_572], %874 {strides = array<i32>} : memref<200x256xf32, #tpu.memory_space<vmem>>, vector<8x223xf32>,
    %cst_573 = arith.constant 0.000000e+00 : f32
    %876 = vector.broadcast %cst_573 : f32 to vector<8x33xf32>
    %c184_574 = arith.constant 184 : index
    %c223 = arith.constant 223 : index
    %877 = vector.load %arg14[%c184_574, %c223] : memref<200x256xf32, #tpu.memory_space<vmem>>, vector<8x33xf32>
    tpu.vector_store %arg14[%c184_574, %c223], %876 {strides = array<i32>} : memref<200x256xf32, #tpu.memory_space<vmem>>, vector<8x33xf32>,
    %c0_575 = arith.constant 0 : index
    %c0_576 = arith.constant 0 : index
    %c34_577 = arith.constant 34 : index
    %878 = vector.load %arg10[%c0_575, %c0_576, %c34_577] : memref<1x8x256xf32, #tpu.memory_space<vmem>>, vector<1x8x222xf32>
    %879 = vector.shape_cast %878 : vector<1x8x222xf32> to vector<8x222xf32>
    %880 = tpu.iota {dimensions = array<i32: 1>} : vector<1x222xi32>
    %c0_i32_578 = arith.constant 0 : i32
    %881 = vector.broadcast %c0_i32_578 : i32 to vector<1x222xi32>
    %882 = arith.addi %880, %881 : vector<1x222xi32>
    %c224_i32_579 = arith.constant 224 : i32
    %883 = vector.broadcast %c224_i32_579 : i32 to vector<1x222xi32>
    %884 = arith.cmpi slt, %882, %883 : vector<1x222xi32>
    %c15_i32_580 = arith.constant 15 : i32
    %885 = vector.broadcast %c15_i32_580 : i32 to vector<1x222xi32>
    %886 = arith.andi %882, %885 : vector<1x222xi32>
    %c14_i32_581 = arith.constant 14 : i32
    %887 = vector.broadcast %c14_i32_581 : i32 to vector<1x222xi32>
    %888 = arith.cmpi slt, %886, %887 : vector<1x222xi32>
    %889 = arith.andi %884, %888 : vector<1x222xi1>
    %cst_582 = arith.constant 0.000000e+00 : f32
    %890 = vector.shape_cast %889 : vector<1x222xi1> to vector<1x222xi1>
    %891 = vector.broadcast %890 : vector<1x222xi1> to vector<8x222xi1>
    %892 = vector.broadcast %cst_582 : f32 to vector<8x222xf32>
    %893 = arith.select %891, %879, %892 : vector<8x222xi1>, vector<8x222xf32>
    %c192_583 = arith.constant 192 : index
    %c0_584 = arith.constant 0 : index
    %894 = vector.load %arg14[%c192_583, %c0_584] : memref<200x256xf32, #tpu.memory_space<vmem>>, vector<8x222xf32>
    tpu.vector_store %arg14[%c192_583, %c0_584], %893 {strides = array<i32>} : memref<200x256xf32, #tpu.memory_space<vmem>>, vector<8x222xf32>,
    %cst_585 = arith.constant 0.000000e+00 : f32
    %895 = vector.broadcast %cst_585 : f32 to vector<8x34xf32>
    %c192_586 = arith.constant 192 : index
    %c222 = arith.constant 222 : index
    %896 = vector.load %arg14[%c192_586, %c222] : memref<200x256xf32, #tpu.memory_space<vmem>>, vector<8x34xf32>
    tpu.vector_store %arg14[%c192_586, %c222], %895 {strides = array<i32>} : memref<200x256xf32, #tpu.memory_space<vmem>>, vector<8x34xf32>,
    %c0_587 = arith.constant 0 : index
    %c0_588 = arith.constant 0 : index
    %897 = vector.load %arg7[%c0_587, %c0_588] : memref<4x200xbf16, #tpu.memory_space<vmem>>, vector<4x200xbf16>
    %c0_589 = arith.constant 0 : index
    %c0_590 = arith.constant 0 : index
    %898 = vector.load %arg14[%c0_589, %c0_590] : memref<200x256xf32, #tpu.memory_space<vmem>>, vector<200x256xf32>
    %899 = arith.truncf %898 : vector<200x256xf32> to vector<200x256xbf16>
    %cst_591 = arith.constant dense<0.000000e+00> : vector<4x256xf32>
    %900 = tpu.matmul %897, %899, %cst_591 {dimension_numbers = #tpu.dot_dimension_numbers<[1], [0], [0], [1], [0, 0, 1, 1], [], []>} : vector<4x200xbf16>, vector<200x256xbf16>, vector<4x256xf32> -> vector<4x256xf32>
    %c0_592 = arith.constant 0 : index
    %c0_593 = arith.constant 0 : index
    %901 = vector.load %arg8[%c0_592, %c0_593] : memref<4x1xf32, #tpu.memory_space<vmem>>, vector<4x1xf32>
    %902 = vector.broadcast %901 : vector<4x1xf32> to vector<4x256xf32>
    %903 = arith.addf %900, %902 : vector<4x256xf32>
    %cst_594 = arith.constant 0.000000e+00 : f32
    %904 = vector.broadcast %cst_594 : f32 to vector<4x256xf32>
    %905 = arith.cmpf oge, %903, %904 : vector<4x256xf32>
    %cst_595 = arith.constant 0.00999999977 : f32
    %906 = vector.broadcast %cst_595 : f32 to vector<4x256xf32>
    %907 = arith.mulf %906, %903 : vector<4x256xf32>
    %908 = arith.select %905, %903, %907 : vector<4x256xi1>, vector<4x256xf32>
    %c0_596 = arith.constant 0 : index
    %c0_597 = arith.constant 0 : index
    %c0_598 = arith.constant 0 : index
    %909 = vector.load %arg9[%c0_596, %c0_597, %c0_598] : memref<1x4x256xf32, #tpu.memory_space<vmem>>, vector<1x4x256xf32>
    %910 = vector.shape_cast %909 : vector<1x4x256xf32> to vector<4x256xf32>
    %911 = vector.shape_cast %908 : vector<4x256xf32> to vector<1x4x256xf32>
    tpu.vector_store %arg9[%c0_596, %c0_597, %c0_598], %911 {strides = array<i32>} : memref<1x4x256xf32, #tpu.memory_space<vmem>>, vector<1x4x256xf32>,
    return
  }
  func.func @transform_0(%arg0: i32) -> (i32, i32, i32) {
    %c0_i32 = arith.constant 0 : i32
    %c0_i32_0 = arith.constant 0 : i32
    %c0_i32_1 = arith.constant 0 : i32
    return %arg0, %c0_i32, %c0_i32_0 : i32, i32, i32
  }
  func.func @transform_1(%arg0: i32) -> (i32, i32, i32) {
    %c0_i32 = arith.constant 0 : i32
    %c0_i32_0 = arith.constant 0 : i32
    %c0_i32_1 = arith.constant 0 : i32
    return %arg0, %c0_i32, %c0_i32_0 : i32, i32, i32
  }
  func.func @transform_2(%arg0: i32) -> (i32, i32, i32) {
    %c0_i32 = arith.constant 0 : i32
    %c0_i32_0 = arith.constant 0 : i32
    %c0_i32_1 = arith.constant 0 : i32
    return %arg0, %c0_i32, %c0_i32_0 : i32, i32, i32
  }
  func.func @transform_3(%arg0: i32) -> (i32, i32, i32) {
    %c0_i32 = arith.constant 0 : i32
    %c0_i32_0 = arith.constant 0 : i32
    %c0_i32_1 = arith.constant 0 : i32
    return %arg0, %c0_i32, %c0_i32_0 : i32, i32, i32
  }
  func.func @transform_4(%arg0: i32) -> (i32, i32) {
    %c0_i32 = arith.constant 0 : i32
    %c0_i32_0 = arith.constant 0 : i32
    %c0_i32_1 = arith.constant 0 : i32
    return %c0_i32, %c0_i32_0 : i32, i32
  }
  func.func @transform_5(%arg0: i32) -> (i32, i32) {
    %c0_i32 = arith.constant 0 : i32
    %c0_i32_0 = arith.constant 0 : i32
    %c0_i32_1 = arith.constant 0 : i32
    return %c0_i32, %c0_i32_0 : i32, i32
  }
  func.func @transform_6(%arg0: i32) -> (i32, i32) {
    %c0_i32 = arith.constant 0 : i32
    %c0_i32_0 = arith.constant 0 : i32
    %c0_i32_1 = arith.constant 0 : i32
    return %c0_i32, %c0_i32_0 : i32, i32
  }
  func.func @transform_7(%arg0: i32) -> (i32, i32) {
    %c0_i32 = arith.constant 0 : i32
    %c0_i32_0 = arith.constant 0 : i32
    %c0_i32_1 = arith.constant 0 : i32
    return %c0_i32, %c0_i32_0 : i32, i32
  }
  func.func @transform_8(%arg0: i32) -> (i32, i32, i32) {
    %c0_i32 = arith.constant 0 : i32
    %c0_i32_0 = arith.constant 0 : i32
    %c0_i32_1 = arith.constant 0 : i32
    return %arg0, %c0_i32, %c0_i32_0 : i32, i32, i32
  }
  func.func @transform_9(%arg0: i32) -> (i32, i32, i32) {
    %c0_i32 = arith.constant 0 : i32
    %c0_i32_0 = arith.constant 0 : i32
    %c0_i32_1 = arith.constant 0 : i32
    return %arg0, %c0_i32, %c0_i32_0 : i32, i32, i32
  }
  func.func @transform_10(%arg0: i32) -> (i32, i32, i32) {
    %c0_i32 = arith.constant 0 : i32
    %c0_i32_0 = arith.constant 0 : i32
    %c0_i32_1 = arith.constant 0 : i32
    return %arg0, %c0_i32, %c0_i32_0 : i32, i32, i32
  }
  func.func @transform_11(%arg0: i32) -> (i32, i32, i32) {
    %c0_i32 = arith.constant 0 : i32
    %c0_i32_0 = arith.constant 0 : i32
    %c0_i32_1 = arith.constant 0 : i32
    return %arg0, %c0_i32, %c0_i32_0 : i32, i32, i32
  }
}

</mosaic_0001>

<llo_original>
// kernel: conv_lstm_cell_forward.1
$region0: #{conv_lstm_cell_forward.1}
  #allocation0 [shape = 'u32[]', space=smem, size = 0x4, offset = 0x4, fixed_abs, tag = 'smem constant byte address 0x4 - core index']
  #allocation1 [shape = 'u32[144,128]{1,0:T(1,128)}', space=vmem, size = 0x12000, scoped, tag = 'internal scratch']
  #allocation2 [shape = 'f32[216,256]{1,0:T(8,128)}', space=vmem, size = 0x36000, scoped, tag = 'scratch operand']
  #allocation3 [shape = 'f32[200,256]{1,0:T(8,128)}', space=vmem, size = 0x32000, scoped, tag = 'scratch operand']
  %s0 = inlined_call_operand.vmem [shape: f32[2,4,256], index: 0, kind: input, shape index: {}]
  %s1 = inlined_call_operand.vmem [shape: f32[2,8,256], index: 1, kind: input, shape index: {}]
  %s2 = inlined_call_operand.vmem [shape: f32[2,8,256], index: 2, kind: input, shape index: {}]
  %s3 = inlined_call_operand.vmem [shape: f32[2,8,256], index: 3, kind: input, shape index: {}]
  %s4 = inlined_call_operand.vmem [shape: bf16[40,216], index: 4, kind: input, shape index: {}]
  %s5 = inlined_call_operand.vmem [shape: f32[40,1], index: 5, kind: input, shape index: {}]
  %s6 = inlined_call_operand.vmem [shape: bf16[4,200], index: 6, kind: input, shape index: {}]
  %s7 = inlined_call_operand.vmem [shape: f32[4,1], index: 7, kind: input, shape index: {}]
  %s8 = inlined_call_operand.vmem [shape: f32[2,4,256], index: 8, kind: output, shape index: {0}]
  %s9 = inlined_call_operand.vmem [shape: f32[2,8,256], index: 9, kind: output, shape index: {1}]
  %s10 = inlined_call_operand.vmem [shape: f32[2,8,256], index: 10, kind: output, shape index: {2}]
  %s11 = inlined_call_operand.vmem [shape: f32[2,8,256], index: 11, kind: output, shape index: {3}]
  %12 = xla_tuple %s8, %s9, %s10, %s11
  %s13 = sld [smem:[#allocation0]]
  $region89: #{conv_lstm_cell_forward.1} parent=0
    _
  %s15 = ssub.s32 1, %s13
  %s16 = scalar_select 0, %s15, %s13
  loop: start=0, step=1, limit=4
  $region2: #{conv_lstm_cell_forward.1} parent=0 // loop_pre_header
    _
  $region3: #{conv_lstm_cell_forward.1} parent=0 // loop_header
    %s18 = sphi 0, %s22
    %p19 = scmp.ge.s32.totalorder %s18, 4
    %s28 = sphi 0, %s30
    %s31 = sphi 0, %s28
    %s32 = sphi 0, %s31
    %s48 = sphi 0, %s32
    %s54 = sphi 0, %s56
    %s57 = sphi 0, %s54
    %s58 = sphi 0, %s57
    %s74 = sphi 0, %s58
    %s80 = sphi 0, %s82
    %s83 = sphi 0, %s80
    %s84 = sphi 0, %s83
    %s100 = sphi 0, %s84
    %s106 = sphi 0, %s108
    %s109 = sphi 0, %s106
    %s110 = sphi 0, %s109
    %s126 = sphi 0, %s110
    %s130 = sphi 0, %s130
    %s132 = sphi 0, %s130
    %s133 = sphi 0, %s132
    %s147 = sphi 0, %s133
    %s151 = sphi 0, %s151
    %s153 = sphi 0, %s151
    %s154 = sphi 0, %s153
    %s168 = sphi 0, %s154
    %s172 = sphi 0, %s172
    %s174 = sphi 0, %s172
    %s175 = sphi 0, %s174
    %s189 = sphi 0, %s175
    %s193 = sphi 0, %s193
    %s195 = sphi 0, %s193
    %s196 = sphi 0, %s195
    %s210 = sphi 0, %s196
    %s216 = sphi 0, %s218
    %s219 = sphi 0, %s216
    %s220 = sphi 0, %s219
    %s236 = sphi 0, %s220
    %s242 = sphi 0, %s244
    %s245 = sphi 0, %s242
    %s246 = sphi 0, %s245
    %s262 = sphi 0, %s246
    %s268 = sphi 0, %s270
    %s271 = sphi 0, %s268
    %s272 = sphi 0, %s271
    %s288 = sphi 0, %s272
    %s294 = sphi 0, %s296
    %s297 = sphi 0, %s294
    %s298 = sphi 0, %s297
    %s314 = sphi 0, %s298
  $region4: #{conv_lstm_cell_forward.1} parent=0 // loop_header_branch
    %21 = sbr.rel (%p19) target = $region8
  $region5: #{conv_lstm_cell_forward.1} parent=0 // loop_body
    %s23 = ssub.s32 %s18, 1
    %s24 = ssub.s32 %s18, 2
    %s25 = sadd.s32 %s18, 1
    %s26 = ssub.s32 %s18, %s25
    %p27 = scmp.eq.s32.totalorder %s26, 0
    %s29 = sadd.s32 %s28, 1
    %s30 = scalar_select %p27, %s28, %s29
    %p33 = pneg %p27
    %p34 = scmp.eq.s32.totalorder %s18, 1
    %p35 = por %p33, %p34
    %p36 = scmp.ne.s32.totalorder %s28, %s31
    %p37 = scmp.eq.s32.totalorder %s18, 0
    %p38 = por %p36, %p37
    %p39 = scmp.ne.s32.totalorder %s28, %s31
    %p40 = scmp.eq.s32.totalorder %s23, 1
    %p41 = por %p39, %p40
    %p42 = scmp.ne.s32.totalorder %s31, %s32
    %p43 = scmp.eq.s32.totalorder %s23, 0
    %p44 = por %p42, %p43
    %p45 = scmp.ne.s32.totalorder %s31, %s32
    %p46 = scmp.eq.s32.totalorder %s24, 1
    %p47 = por %p45, %p46
    %p49 = scmp.ne.s32.totalorder %s32, %s48
    %p50 = scmp.eq.s32.totalorder %s24, 0
    %p51 = por %p49, %p50
    %s52 = ssub.s32 %s18, %s25
    %p53 = scmp.eq.s32.totalorder %s52, 0
    %s55 = sadd.s32 %s54, 1
    %s56 = scalar_select %p53, %s54, %s55
    %p59 = pneg %p53
    %p60 = scmp.eq.s32.totalorder %s18, 1
    %p61 = por %p59, %p60
    %p62 = scmp.ne.s32.totalorder %s54, %s57
    %p63 = scmp.eq.s32.totalorder %s18, 0
    %p64 = por %p62, %p63
    %p65 = scmp.ne.s32.totalorder %s54, %s57
    %p66 = scmp.eq.s32.totalorder %s23, 1
    %p67 = por %p65, %p66
    %p68 = scmp.ne.s32.totalorder %s57, %s58
    %p69 = scmp.eq.s32.totalorder %s23, 0
    %p70 = por %p68, %p69
    %p71 = scmp.ne.s32.totalorder %s57, %s58
    %p72 = scmp.eq.s32.totalorder %s24, 1
    %p73 = por %p71, %p72
    %p75 = scmp.ne.s32.totalorder %s58, %s74
    %p76 = scmp.eq.s32.totalorder %s24, 0
    %p77 = por %p75, %p76
    %s78 = ssub.s32 %s18, %s25
    %p79 = scmp.eq.s32.totalorder %s78, 0
    %s81 = sadd.s32 %s80, 1
    %s82 = scalar_select %p79, %s80, %s81
    %p85 = pneg %p79
    %p86 = scmp.eq.s32.totalorder %s18, 1
    %p87 = por %p85, %p86
    %p88 = scmp.ne.s32.totalorder %s80, %s83
    %p89 = scmp.eq.s32.totalorder %s18, 0
    %p90 = por %p88, %p89
    %p91 = scmp.ne.s32.totalorder %s80, %s83
    %p92 = scmp.eq.s32.totalorder %s23, 1
    %p93 = por %p91, %p92
    %p94 = scmp.ne.s32.totalorder %s83, %s84
    %p95 = scmp.eq.s32.totalorder %s23, 0
    %p96 = por %p94, %p95
    %p97 = scmp.ne.s32.totalorder %s83, %s84
    %p98 = scmp.eq.s32.totalorder %s24, 1
    %p99 = por %p97, %p98
    %p101 = scmp.ne.s32.totalorder %s84, %s100
    %p102 = scmp.eq.s32.totalorder %s24, 0
    %p103 = por %p101, %p102
    %s104 = ssub.s32 %s18, %s25
    %p105 = scmp.eq.s32.totalorder %s104, 0
    %s107 = sadd.s32 %s106, 1
    %s108 = scalar_select %p105, %s106, %s107
    %p111 = pneg %p105
    %p112 = scmp.eq.s32.totalorder %s18, 1
    %p113 = por %p111, %p112
    %p114 = scmp.ne.s32.totalorder %s106, %s109
    %p115 = scmp.eq.s32.totalorder %s18, 0
    %p116 = por %p114, %p115
    %p117 = scmp.ne.s32.totalorder %s106, %s109
    %p118 = scmp.eq.s32.totalorder %s23, 1
    %p119 = por %p117, %p118
    %p120 = scmp.ne.s32.totalorder %s109, %s110
    %p121 = scmp.eq.s32.totalorder %s23, 0
    %p122 = por %p120, %p121
    %p123 = scmp.ne.s32.totalorder %s109, %s110
    %p124 = scmp.eq.s32.totalorder %s24, 1
    %p125 = por %p123, %p124
    %p127 = scmp.ne.s32.totalorder %s110, %s126
    %p128 = scmp.eq.s32.totalorder %s24, 0
    %p129 = por %p127, %p128
    %s131 = sadd.s32 %s130, 1
    %p134 = scmp.eq.s32.totalorder %s18, 1
    %p135 = scmp.ne.s32.totalorder %s130, %s132
    %p136 = scmp.eq.s32.totalorder %s18, 0
    %p137 = por %p135, %p136
    %p138 = scmp.ne.s32.totalorder %s130, %s132
    %p139 = scmp.eq.s32.totalorder %s23, 1
    %p140 = por %p138, %p139
    %p141 = scmp.ne.s32.totalorder %s132, %s133
    %p142 = scmp.eq.s32.totalorder %s23, 0
    %p143 = por %p141, %p142
    %p144 = scmp.ne.s32.totalorder %s132, %s133
    %p145 = scmp.eq.s32.totalorder %s24, 1
    %p146 = por %p144, %p145
    %p148 = scmp.ne.s32.totalorder %s133, %s147
    %p149 = scmp.eq.s32.totalorder %s24, 0
    %p150 = por %p148, %p149
    %s152 = sadd.s32 %s151, 1
    %p155 = scmp.eq.s32.totalorder %s18, 1
    %p156 = scmp.ne.s32.totalorder %s151, %s153
    %p157 = scmp.eq.s32.totalorder %s18, 0
    %p158 = por %p156, %p157
    %p159 = scmp.ne.s32.totalorder %s151, %s153
    %p160 = scmp.eq.s32.totalorder %s23, 1
    %p161 = por %p159, %p160
    %p162 = scmp.ne.s32.totalorder %s153, %s154
    %p163 = scmp.eq.s32.totalorder %s23, 0
    %p164 = por %p162, %p163
    %p165 = scmp.ne.s32.totalorder %s153, %s154
    %p166 = scmp.eq.s32.totalorder %s24, 1
    %p167 = por %p165, %p166
    %p169 = scmp.ne.s32.totalorder %s154, %s168
    %p170 = scmp.eq.s32.totalorder %s24, 0
    %p171 = por %p169, %p170
    %s173 = sadd.s32 %s172, 1
    %p176 = scmp.eq.s32.totalorder %s18, 1
    %p177 = scmp.ne.s32.totalorder %s172, %s174
    %p178 = scmp.eq.s32.totalorder %s18, 0
    %p179 = por %p177, %p178
    %p180 = scmp.ne.s32.totalorder %s172, %s174
    %p181 = scmp.eq.s32.totalorder %s23, 1
    %p182 = por %p180, %p181
    %p183 = scmp.ne.s32.totalorder %s174, %s175
    %p184 = scmp.eq.s32.totalorder %s23, 0
    %p185 = por %p183, %p184
    %p186 = scmp.ne.s32.totalorder %s174, %s175
    %p187 = scmp.eq.s32.totalorder %s24, 1
    %p188 = por %p186, %p187
    %p190 = scmp.ne.s32.totalorder %s175, %s189
    %p191 = scmp.eq.s32.totalorder %s24, 0
    %p192 = por %p190, %p191
    %s194 = sadd.s32 %s193, 1
    %p197 = scmp.eq.s32.totalorder %s18, 1
    %p198 = scmp.ne.s32.totalorder %s193, %s195
    %p199 = scmp.eq.s32.totalorder %s18, 0
    %p200 = por %p198, %p199
    %p201 = scmp.ne.s32.totalorder %s193, %s195
    %p202 = scmp.eq.s32.totalorder %s23, 1
    %p203 = por %p201, %p202
    %p204 = scmp.ne.s32.totalorder %s195, %s196
    %p205 = scmp.eq.s32.totalorder %s23, 0
    %p206 = por %p204, %p205
    %p207 = scmp.ne.s32.totalorder %s195, %s196
    %p208 = scmp.eq.s32.totalorder %s24, 1
    %p209 = por %p207, %p208
    %p211 = scmp.ne.s32.totalorder %s196, %s210
    %p212 = scmp.eq.s32.totalorder %s24, 0
    %p213 = por %p211, %p212
    %s214 = ssub.s32 %s18, %s25
    %p215 = scmp.eq.s32.totalorder %s214, 0
    %s217 = sadd.s32 %s216, 1
    %s218 = scalar_select %p215, %s216, %s217
    %p221 = pneg %p215
    %p222 = scmp.eq.s32.totalorder %s18, 1
    %p223 = por %p221, %p222
    %p224 = scmp.ne.s32.totalorder %s216, %s219
    %p225 = scmp.eq.s32.totalorder %s18, 0
    %p226 = por %p224, %p225
    %p227 = scmp.ne.s32.totalorder %s216, %s219
    %p228 = scmp.eq.s32.totalorder %s23, 1
    %p229 = por %p227, %p228
    %p230 = scmp.ne.s32.totalorder %s219, %s220
    %p231 = scmp.eq.s32.totalorder %s23, 0
    %p232 = por %p230, %p231
    %p233 = scmp.ne.s32.totalorder %s219, %s220
    %p234 = scmp.eq.s32.totalorder %s24, 1
    %p235 = por %p233, %p234
    %p237 = scmp.ne.s32.totalorder %s220, %s236
    %p238 = scmp.eq.s32.totalorder %s24, 0
    %p239 = por %p237, %p238
    %s240 = ssub.s32 %s18, %s25
    %p241 = scmp.eq.s32.totalorder %s240, 0
    %s243 = sadd.s32 %s242, 1
    %s244 = scalar_select %p241, %s242, %s243
    %p247 = pneg %p241
    %p248 = scmp.eq.s32.totalorder %s18, 1
    %p249 = por %p247, %p248
    %p250 = scmp.ne.s32.totalorder %s242, %s245
    %p251 = scmp.eq.s32.totalorder %s18, 0
    %p252 = por %p250, %p251
    %p253 = scmp.ne.s32.totalorder %s242, %s245
    %p254 = scmp.eq.s32.totalorder %s23, 1
    %p255 = por %p253, %p254
    %p256 = scmp.ne.s32.totalorder %s245, %s246
    %p257 = scmp.eq.s32.totalorder %s23, 0
    %p258 = por %p256, %p257
    %p259 = scmp.ne.s32.totalorder %s245, %s246
    %p260 = scmp.eq.s32.totalorder %s24, 1
    %p261 = por %p259, %p260
    %p263 = scmp.ne.s32.totalorder %s246, %s262
    %p264 = scmp.eq.s32.totalorder %s24, 0
    %p265 = por %p263, %p264
    %s266 = ssub.s32 %s18, %s25
    %p267 = scmp.eq.s32.totalorder %s266, 0
    %s269 = sadd.s32 %s268, 1
    %s270 = scalar_select %p267, %s268, %s269
    %p273 = pneg %p267
    %p274 = scmp.eq.s32.totalorder %s18, 1
    %p275 = por %p273, %p274
    %p276 = scmp.ne.s32.totalorder %s268, %s271
    %p277 = scmp.eq.s32.totalorder %s18, 0
    %p278 = por %p276, %p277
    %p279 = scmp.ne.s32.totalorder %s268, %s271
    %p280 = scmp.eq.s32.totalorder %s23, 1
    %p281 = por %p279, %p280
    %p282 = scmp.ne.s32.totalorder %s271, %s272
    %p283 = scmp.eq.s32.totalorder %s23, 0
    %p284 = por %p282, %p283
    %p285 = scmp.ne.s32.totalorder %s271, %s272
    %p286 = scmp.eq.s32.totalorder %s24, 1
    %p287 = por %p285, %p286
    %p289 = scmp.ne.s32.totalorder %s272, %s288
    %p290 = scmp.eq.s32.totalorder %s24, 0
    %p291 = por %p289, %p290
    %s292 = ssub.s32 %s18, %s25
    %p293 = scmp.eq.s32.totalorder %s292, 0
    %s295 = sadd.s32 %s294, 1
    %s296 = scalar_select %p293, %s294, %s295
    %p299 = pneg %p293
    %p300 = scmp.eq.s32.totalorder %s18, 1
    %p301 = por %p299, %p300
    %p302 = scmp.ne.s32.totalorder %s294, %s297
    %p303 = scmp.eq.s32.totalorder %s18, 0
    %p304 = por %p302, %p303
    %p305 = scmp.ne.s32.totalorder %s294, %s297
    %p306 = scmp.eq.s32.totalorder %s23, 1
    %p307 = por %p305, %p306
    %p308 = scmp.ne.s32.totalorder %s297, %s298
    %p309 = scmp.eq.s32.totalorder %s23, 0
    %p310 = por %p308, %p309
    %p311 = scmp.ne.s32.totalorder %s297, %s298
    %p312 = scmp.eq.s32.totalorder %s24, 1
    %p313 = por %p311, %p312
    %p315 = scmp.ne.s32.totalorder %s298, %s314
    %p316 = scmp.eq.s32.totalorder %s24, 0
    %p317 = por %p315, %p316
    %p318 = scmp.le.s32.totalorder 1, %s18
    %p319 = scmp.lt.s32.totalorder %s18, 3
    %p320 = pnand %p318, %p319
    %p321 = pneg %p320
    // Predicated region
    $region9: #{conv_lstm_cell_forward.1} parent=5 // pred_check
      _
    $region10: #{conv_lstm_cell_forward.1} parent=5 // pred_check_branch
      %323 = sbr.rel (%p320) target = $region12
    $region11: #{conv_lstm_cell_forward.1} parent=5 // pred_region
      %s324 = ssub.s32 %s18, 1
      // Predicated region
      $region13: #{conv_lstm_cell_forward.1} parent=11 // pred_check
        %p325 = pneg %p143
      $region14: #{conv_lstm_cell_forward.1} parent=11 // pred_check_branch
        %327 = sbr.rel (%p325) target = $region16
      $region15: #{conv_lstm_cell_forward.1} parent=11 // pred_region
        _
      $region16: #{conv_lstm_cell_forward.1} parent=11 // pred_fallthru
        _
      // Predicated region
      $region17: #{conv_lstm_cell_forward.1} parent=11 // pred_check
        %p328 = pneg %p164
      $region18: #{conv_lstm_cell_forward.1} parent=11 // pred_check_branch
        %330 = sbr.rel (%p328) target = $region20
      $region19: #{conv_lstm_cell_forward.1} parent=11 // pred_region
        _
      $region20: #{conv_lstm_cell_forward.1} parent=11 // pred_fallthru
        _
      // Predicated region
      $region21: #{conv_lstm_cell_forward.1} parent=11 // pred_check
        %p331 = pneg %p185
      $region22: #{conv_lstm_cell_forward.1} parent=11 // pred_check_branch
        %333 = sbr.rel (%p331) target = $region24
      $region23: #{conv_lstm_cell_forward.1} parent=11 // pred_region
        _
      $region24: #{conv_lstm_cell_forward.1} parent=11 // pred_fallthru
        _
      // Predicated region
      $region25: #{conv_lstm_cell_forward.1} parent=11 // pred_check
        %p334 = pneg %p206
      $region26: #{conv_lstm_cell_forward.1} parent=11 // pred_check_branch
        %336 = sbr.rel (%p334) target = $region28
      $region27: #{conv_lstm_cell_forward.1} parent=11 // pred_region
        _
      $region28: #{conv_lstm_cell_forward.1} parent=11 // pred_fallthru
        _
    $region12: #{conv_lstm_cell_forward.1} parent=5 // pred_fallthru
      _
    %p337 = scmp.lt.s32.totalorder %s18, 2
    // Predicated region
    $region29: #{conv_lstm_cell_forward.1} parent=5 // pred_check
      %p338 = pneg %p337
    $region30: #{conv_lstm_cell_forward.1} parent=5 // pred_check_branch
      %340 = sbr.rel (%p338) target = $region32
    $region31: #{conv_lstm_cell_forward.1} parent=5 // pred_region
      // Predicated region
      $region33: #{conv_lstm_cell_forward.1} parent=31 // pred_check
        %p341 = pneg %p38
      $region34: #{conv_lstm_cell_forward.1} parent=31 // pred_check_branch
        %343 = sbr.rel (%p341) target = $region36
      $region35: #{conv_lstm_cell_forward.1} parent=31 // pred_region
        %p344 = scmp.lt.s32.totalorder %s18, 1
        %s345 = scalar_select %p344, %s18, 1
        %s346 = smul.addr %s345, 2
        %s347 = smul.addr %s346, 4
        %s348 = scalar_lea.vmem %s0, %s347
      $region36: #{conv_lstm_cell_forward.1} parent=31 // pred_fallthru
        _
      // Predicated region
      $region37: #{conv_lstm_cell_forward.1} parent=31 // pred_check
        %p349 = pneg %p64
      $region38: #{conv_lstm_cell_forward.1} parent=31 // pred_check_branch
        %351 = sbr.rel (%p349) target = $region40
      $region39: #{conv_lstm_cell_forward.1} parent=31 // pred_region
        %p352 = scmp.lt.s32.totalorder %s18, 1
        %s353 = scalar_select %p352, %s18, 1
        %s354 = smul.addr %s353, 2
        %s355 = smul.addr %s354, 8
        %s356 = scalar_lea.vmem %s1, %s355
      $region40: #{conv_lstm_cell_forward.1} parent=31 // pred_fallthru
        _
      // Predicated region
      $region41: #{conv_lstm_cell_forward.1} parent=31 // pred_check
        %p357 = pneg %p90
      $region42: #{conv_lstm_cell_forward.1} parent=31 // pred_check_branch
        %359 = sbr.rel (%p357) target = $region44
      $region43: #{conv_lstm_cell_forward.1} parent=31 // pred_region
        %p360 = scmp.lt.s32.totalorder %s18, 1
        %s361 = scalar_select %p360, %s18, 1
        %s362 = smul.addr %s361, 2
        %s363 = smul.addr %s362, 8
        %s364 = scalar_lea.vmem %s2, %s363
      $region44: #{conv_lstm_cell_forward.1} parent=31 // pred_fallthru
        _
      // Predicated region
      $region45: #{conv_lstm_cell_forward.1} parent=31 // pred_check
        %p365 = pneg %p116
      $region46: #{conv_lstm_cell_forward.1} parent=31 // pred_check_branch
        %367 = sbr.rel (%p365) target = $region48
      $region47: #{conv_lstm_cell_forward.1} parent=31 // pred_region
        %p368 = scmp.lt.s32.totalorder %s18, 1
        %s369 = scalar_select %p368, %s18, 1
        %s370 = smul.addr %s369, 2
        %s371 = smul.addr %s370, 8
        %s372 = scalar_lea.vmem %s3, %s371
      $region48: #{conv_lstm_cell_forward.1} parent=31 // pred_fallthru
        _
    $region32: #{conv_lstm_cell_forward.1} parent=5 // pred_fallthru
      _
    %p373 = scmp.le.s32.totalorder 1, %s18
    %p374 = scmp.lt.s32.totalorder %s18, 3
    %p375 = pnand %p373, %p374
    %p376 = pneg %p375
    // Predicated region
    $region49: #{conv_lstm_cell_forward.1} parent=5 // pred_check
      _
    $region50: #{conv_lstm_cell_forward.1} parent=5 // pred_check_branch
      %378 = sbr.rel (%p375) target = $region52
    $region51: #{conv_lstm_cell_forward.1} parent=5 // pred_region
      %s379 = ssub.s32 %s18, 1
      %p380 = scmp.lt.s32.totalorder %s23, 1
      %s381 = scalar_select %p380, %s23, 1
      %s382 = smul.addr %s381, 2
      %s383 = smul.addr %s382, 4
      %s384 = scalar_lea.vmem %s0, %s383
      %p385 = pneg %p44
      %p386 = pneg %p41
      %p387 = scmp.lt.s32.totalorder %s23, 1
      %s388 = scalar_select %p387, %s23, 1
      %s389 = smul.addr %s388, 2
      %s390 = smul.addr %s389, 8
      %s391 = scalar_lea.vmem %s1, %s390
      %p392 = pneg %p70
      %p393 = pneg %p67
      %p394 = scmp.lt.s32.totalorder %s23, 1
      %s395 = scalar_select %p394, %s23, 1
      %s396 = smul.addr %s395, 2
      %s397 = smul.addr %s396, 8
      %s398 = scalar_lea.vmem %s2, %s397
      %p399 = pneg %p96
      %p400 = pneg %p93
      %p401 = scmp.lt.s32.totalorder %s23, 1
      %s402 = scalar_select %p401, %s23, 1
      %s403 = smul.addr %s402, 2
      %s404 = smul.addr %s403, 8
      %s405 = scalar_lea.vmem %s3, %s404
      %p406 = pneg %p122
      %p407 = pneg %p119
      %p408 = pneg %p143
      %p409 = pneg %p140
      %p410 = pneg %p164
      %p411 = pneg %p161
      %p412 = pneg %p185
      %p413 = pneg %p182
      %p414 = pneg %p206
      %p415 = pneg %p203
      %p416 = pneg %p232
      %p417 = pneg %p229
      %p418 = scmp.lt.s32.totalorder %s23, 1
      %s419 = scalar_select %p418, %s23, 1
      %s420 = smul.addr %s419, 2
      %s421 = smul.addr %s420, 4
      %s422 = scalar_lea.vmem %s8, %s421
      %p423 = pneg %p258
      %p424 = pneg %p255
      %p425 = scmp.lt.s32.totalorder %s23, 1
      %s426 = scalar_select %p425, %s23, 1
      %s427 = smul.addr %s426, 2
      %s428 = smul.addr %s427, 8
      %s429 = scalar_lea.vmem %s9, %s428
      %p430 = pneg %p284
      %p431 = pneg %p281
      %p432 = scmp.lt.s32.totalorder %s23, 1
      %s433 = scalar_select %p432, %s23, 1
      %s434 = smul.addr %s433, 2
      %s435 = smul.addr %s434, 8
      %s436 = scalar_lea.vmem %s10, %s435
      %p437 = pneg %p310
      %p438 = pneg %p307
      %p439 = scmp.lt.s32.totalorder %s23, 1
      %s440 = scalar_select %p439, %s23, 1
      %s441 = smul.addr %s440, 2
      %s442 = smul.addr %s441, 8
      %s443 = scalar_lea.vmem %s11, %s442
      %p444 = scmp.lt.s32.totalorder %s23, 1
      %s445 = scalar_select %p444, %s23, 1
      %s446 = smul.addr %s445, 2
      %s447 = smul.addr %s446, 4
      %s448 = scalar_lea.vmem %s0, %s447
      %p449 = scmp.lt.s32.totalorder %s23, 1
      %s450 = scalar_select %p449, %s23, 1
      %s451 = smul.addr %s450, 2
      %s452 = smul.addr %s451, 8
      %s453 = scalar_lea.vmem %s1, %s452
      %p454 = scmp.lt.s32.totalorder %s23, 1
      %s455 = scalar_select %p454, %s23, 1
      %s456 = smul.addr %s455, 2
      %s457 = smul.addr %s456, 8
      %s458 = scalar_lea.vmem %s2, %s457
      %p459 = scmp.lt.s32.totalorder %s23, 1
      %s460 = scalar_select %p459, %s23, 1
      %s461 = smul.addr %s460, 2
      %s462 = smul.addr %s461, 8
      %s463 = scalar_lea.vmem %s3, %s462
      %p464 = scmp.lt.s32.totalorder %s23, 1
      %s465 = scalar_select %p464, %s23, 1
      %s466 = smul.addr %s465, 2
      %s467 = smul.addr %s466, 4
      %s468 = scalar_lea.vmem %s8, %s467
      %p469 = scmp.lt.s32.totalorder %s23, 1
      %s470 = scalar_select %p469, %s23, 1
      %s471 = smul.addr %s470, 2
      %s472 = smul.addr %s471, 8
      %s473 = scalar_lea.vmem %s9, %s472
      %p474 = scmp.lt.s32.totalorder %s23, 1
      %s475 = scalar_select %p474, %s23, 1
      %s476 = smul.addr %s475, 2
      %s477 = smul.addr %s476, 8
      %s478 = scalar_lea.vmem %s10, %s477
      %p479 = scmp.lt.s32.totalorder %s23, 1
      %s480 = scalar_select %p479, %s23, 1
      %s481 = smul.addr %s480, 2
      %s482 = smul.addr %s481, 8
      %s483 = scalar_lea.vmem %s11, %s482
      %v485 = vld [vmem:[%s453] sm:$0xff]
      %v486 = vld [vmem:[%s453 + $0x8] sm:$0xff]
      %v487 = vlaneseq
      %v488 = vand.u32 %v487, 127
      %v489 = vadd.s32 %v488, 128
      %v490 = vadd.s32 %v488, 17
      %v491 = vadd.s32 %v489, 17
      %vm492 = vcmp.ge.s32.totalorder %v490, 16
      %vm493 = vcmp.ge.s32.totalorder %v491, 16
      %v494 = vand.u32 %v490, 15
      %v495 = vand.u32 %v491, 15
      %vm496 = vcmp.ge.s32.totalorder %v494, 1
      %vm497 = vcmp.ge.s32.totalorder %v495, 1
      %vm498 = vmand %vm492, %vm496
      %vm499 = vmand %vm493, %vm497
      %v500 = vsel %vm498, 1, 0
      %v501 = vsel %vm499, 1, 0
      %vm502 = vcmp.eq.s32.totalorder %v500, 1
      %vm503 = vcmp.eq.s32.totalorder %v501, 1
      %v504 = vsel %vm502, %v485, 0.0
      %v505 = vsel %vm503, %v486, 0.0
      %508 = vrot.lane.b32.xlu0 %v504, 17
      %v509 = vpop.permute.xlu0 %508
      %510 = vrot.lane.b32.xlu0 %v505, 17
      %v511 = vpop.permute.xlu0 %510
      %vm512 = vcmask 138240
      %v513 = vsel %vm512, %v509, %v511
      %vm516 = vcmask 1047688
      %517 = vst.msk [vmem:[#allocation2] sm:$0xff] %vm516, %v509
      %518 = vst [vmem:[#allocation2 + $0x8] sm:$0xff] %v513
      %519 = vst.msk [vmem:[#allocation2] sm:$0xff] %vm512, 0.0
      %v520 = vld [vmem:[%s458] sm:$0xff]
      %v521 = vld [vmem:[%s458 + $0x8] sm:$0xff]
      %v522 = vsel %vm502, %v520, 0.0
      %v523 = vsel %vm503, %v521, 0.0
      %526 = vrot.lane.b32.xlu0 %v522, 17
      %v527 = vpop.permute.xlu0 %526
      %528 = vrot.lane.b32.xlu0 %v523, 17
      %v529 = vpop.permute.xlu0 %528
      %v530 = vsel %vm512, %v527, %v529
      %533 = vst.msk [vmem:[#allocation2 + $0x10] sm:$0xff] %vm516, %v527
      %534 = vst [vmem:[#allocation2 + $0x18] sm:$0xff] %v530
      %535 = vst.msk [vmem:[#allocation2 + $0x10] sm:$0xff] %vm512, 0.0
      %v536 = vld [vmem:[%s448] sm:$0xff]
      %v538 = vcombine.high %v536, %v536
      %v540 = vsel %vm502, %v536, 0.0
      %v541 = vsel %vm503, %v538, 0.0
      %544 = vrot.lane.b32.xlu0 %v540, 17
      %v545 = vpop.permute.xlu0 %544
      %546 = vrot.lane.b32.xlu0 %v541, 17
      %v547 = vpop.permute.xlu0 %546
      %v548 = vsel %vm512, %v545, %v547
      %vm551 = vcmask 1043592
      %552 = vst.msk [vmem:[#allocation2 + $0x20] sm:$0xf] %vm551, %v545
      %553 = vst [vmem:[#allocation2 + $0x28] sm:$0xf] %v548
      %vm554 = vcmask 134144
      %555 = vst.msk [vmem:[#allocation2 + $0x20] sm:$0xf] %vm554, 0.0
      %556 = vst [vmem:[#allocation2 + $0x20] sm:$0xf0] 0.0
      %557 = vst [vmem:[#allocation2 + $0x28] sm:$0xf0] 0.0
      %v558 = vld [vmem:[%s453] sm:$0xff]
      %v559 = vld [vmem:[%s453 + $0x8] sm:$0xff]
      %v560 = vadd.s32 %v488, 16
      %v561 = vadd.s32 %v489, 16
      %vm562 = vcmp.ge.s32.totalorder %v560, 16
      %vm563 = vcmp.ge.s32.totalorder %v561, 16
      %v564 = vsel %vm562, 1, 0
      %v565 = vsel %vm563, 1, 0
      %vm566 = vcmp.eq.s32.totalorder %v564, 1
      %vm567 = vcmp.eq.s32.totalorder %v565, 1
      %v568 = vsel %vm566, %v558, 0.0
      %v569 = vsel %vm567, %v559, 0.0
      %572 = vrot.lane.b32.xlu0 %v568, 16
      %v573 = vpop.permute.xlu0 %572
      %574 = vrot.lane.b32.xlu0 %v569, 16
      %v575 = vpop.permute.xlu0 %574
      %vm576 = vcmask 130048
      %v577 = vsel %vm576, %v573, %v575
      %vm580 = vcmask 1047680
      %581 = vst.msk [vmem:[#allocation2 + $0x30] sm:$0xff] %vm580, %v573
      %582 = vst [vmem:[#allocation2 + $0x38] sm:$0xff] %v577
      %583 = vst.msk [vmem:[#allocation2 + $0x30] sm:$0xff] %vm576, 0.0
      %v584 = vld [vmem:[%s458] sm:$0xff]
      %v585 = vld [vmem:[%s458 + $0x8] sm:$0xff]
      %v586 = vsel %vm566, %v584, 0.0
      %v587 = vsel %vm567, %v585, 0.0
      %590 = vrot.lane.b32.xlu0 %v586, 16
      %v591 = vpop.permute.xlu0 %590
      %592 = vrot.lane.b32.xlu0 %v587, 16
      %v593 = vpop.permute.xlu0 %592
      %v594 = vsel %vm576, %v591, %v593
      %597 = vst.msk [vmem:[#allocation2 + $0x40] sm:$0xff] %vm580, %v591
      %598 = vst [vmem:[#allocation2 + $0x48] sm:$0xff] %v594
      %599 = vst.msk [vmem:[#allocation2 + $0x40] sm:$0xff] %vm576, 0.0
      %v600 = vld [vmem:[%s448] sm:$0xff]
      %v602 = vcombine.high %v600, %v600
      %v604 = vsel %vm566, %v600, 0.0
      %v605 = vsel %vm567, %v602, 0.0
      %608 = vrot.lane.b32.xlu0 %v604, 16
      %v609 = vpop.permute.xlu0 %608
      %610 = vrot.lane.b32.xlu0 %v605, 16
      %v611 = vpop.permute.xlu0 %610
      %v612 = vsel %vm576, %v609, %v611
      %vm615 = vcmask 1043584
      %616 = vst.msk [vmem:[#allocation2 + $0x50] sm:$0xf] %vm615, %v609
      %617 = vst [vmem:[#allocation2 + $0x58] sm:$0xf] %v612
      %vm618 = vcmask 125952
      %619 = vst.msk [vmem:[#allocation2 + $0x50] sm:$0xf] %vm618, 0.0
      %620 = vst [vmem:[#allocation2 + $0x50] sm:$0xf0] 0.0
      %621 = vst [vmem:[#allocation2 + $0x58] sm:$0xf0] 0.0
      %v622 = vld [vmem:[%s453] sm:$0xff]
      %v623 = vld [vmem:[%s453 + $0x8] sm:$0xff]
      %v624 = vadd.s32 %v488, 15
      %v625 = vadd.s32 %v489, 15
      %vm626 = vcmp.ge.s32.totalorder %v624, 16
      %vm627 = vcmp.ge.s32.totalorder %v625, 16
      %v628 = vand.u32 %v624, 15
      %v629 = vand.u32 %v625, 15
      %vm630 = vcmp.lt.s32.totalorder %v628, 15
      %vm631 = vcmp.lt.s32.totalorder %v629, 15
      %vm632 = vmand %vm626, %vm630
      %vm633 = vmand %vm627, %vm631
      %v634 = vsel %vm632, 1, 0
      %v635 = vsel %vm633, 1, 0
      %vm636 = vcmp.eq.s32.totalorder %v634, 1
      %vm637 = vcmp.eq.s32.totalorder %v635, 1
      %v638 = vsel %vm636, %v622, 0.0
      %v639 = vsel %vm637, %v623, 0.0
      %642 = vrot.lane.b32.xlu0 %v638, 15
      %v643 = vpop.permute.xlu0 %642
      %644 = vrot.lane.b32.xlu0 %v639, 15
      %v645 = vpop.permute.xlu0 %644
      %vm646 = vcmask 121856
      %v647 = vsel %vm646, %v643, %v645
      %vm650 = vcmask 1047672
      %651 = vst.msk [vmem:[#allocation2 + $0x60] sm:$0xff] %vm650, %v643
      %652 = vst [vmem:[#allocation2 + $0x68] sm:$0xff] %v647
      %653 = vst.msk [vmem:[#allocation2 + $0x60] sm:$0xff] %vm646, 0.0
      %v654 = vld [vmem:[%s458] sm:$0xff]
      %v655 = vld [vmem:[%s458 + $0x8] sm:$0xff]
      %v656 = vsel %vm636, %v654, 0.0
      %v657 = vsel %vm637, %v655, 0.0
      %660 = vrot.lane.b32.xlu0 %v656, 15
      %v661 = vpop.permute.xlu0 %660
      %662 = vrot.lane.b32.xlu0 %v657, 15
      %v663 = vpop.permute.xlu0 %662
      %v664 = vsel %vm646, %v661, %v663
      %667 = vst.msk [vmem:[#allocation2 + $0x70] sm:$0xff] %vm650, %v661
      %668 = vst [vmem:[#allocation2 + $0x78] sm:$0xff] %v664
      %669 = vst.msk [vmem:[#allocation2 + $0x70] sm:$0xff] %vm646, 0.0
      %v670 = vld [vmem:[%s448] sm:$0xff]
      %v672 = vcombine.high %v670, %v670
      %v674 = vsel %vm636, %v670, 0.0
      %v675 = vsel %vm637, %v672, 0.0
      %678 = vrot.lane.b32.xlu0 %v674, 15
      %v679 = vpop.permute.xlu0 %678
      %680 = vrot.lane.b32.xlu0 %v675, 15
      %v681 = vpop.permute.xlu0 %680
      %v682 = vsel %vm646, %v679, %v681
      %vm685 = vcmask 1043576
      %686 = vst.msk [vmem:[#allocation2 + $0x80] sm:$0xf] %vm685, %v679
      %687 = vst [vmem:[#allocation2 + $0x88] sm:$0xf] %v682
      %vm688 = vcmask 117760
      %689 = vst.msk [vmem:[#allocation2 + $0x80] sm:$0xf] %vm688, 0.0
      %690 = vst [vmem:[#allocation2 + $0x80] sm:$0xf0] 0.0
      %691 = vst [vmem:[#allocation2 + $0x88] sm:$0xf0] 0.0
      %v692 = vld [vmem:[%s453] sm:$0xff]
      %v693 = vld [vmem:[%s453 + $0x8] sm:$0xff]
      %v694 = vadd.s32 %v488, 1
      %v695 = vadd.s32 %v489, 1
      %v696 = vand.u32 %v694, 15
      %v697 = vand.u32 %v695, 15
      %vm698 = vcmp.ge.s32.totalorder %v696, 1
      %vm699 = vcmp.ge.s32.totalorder %v697, 1
      %v700 = vsel %vm698, 1, 0
      %v701 = vsel %vm699, 1, 0
      %vm702 = vcmp.eq.s32.totalorder %v700, 1
      %vm703 = vcmp.eq.s32.totalorder %v701, 1
      %v704 = vsel %vm702, %v692, 0.0
      %v705 = vsel %vm703, %v693, 0.0
      %708 = vrot.lane.b32.xlu0 %v704, 1
      %v709 = vpop.permute.xlu0 %708
      %710 = vrot.lane.b32.xlu0 %v705, 1
      %v711 = vpop.permute.xlu0 %710
      %vm712 = vcmask 7168
      %v713 = vsel %vm712, %v709, %v711
      %vm716 = vcmask 1047560
      %717 = vst.msk [vmem:[#allocation2 + $0x90] sm:$0xff] %vm716, %v709
      %718 = vst [vmem:[#allocation2 + $0x98] sm:$0xff] %v713
      %719 = vst.msk [vmem:[#allocation2 + $0x90] sm:$0xff] %vm712, 0.0
      %v720 = vld [vmem:[%s458] sm:$0xff]
      %v721 = vld [vmem:[%s458 + $0x8] sm:$0xff]
      %v722 = vsel %vm702, %v720, 0.0
      %v723 = vsel %vm703, %v721, 0.0
      %726 = vrot.lane.b32.xlu0 %v722, 1
      %v727 = vpop.permute.xlu0 %726
      %728 = vrot.lane.b32.xlu0 %v723, 1
      %v729 = vpop.permute.xlu0 %728
      %v730 = vsel %vm712, %v727, %v729
      %733 = vst.msk [vmem:[#allocation2 + $0xa0] sm:$0xff] %vm716, %v727
      %734 = vst [vmem:[#allocation2 + $0xa8] sm:$0xff] %v730
      %735 = vst.msk [vmem:[#allocation2 + $0xa0] sm:$0xff] %vm712, 0.0
      %v736 = vld [vmem:[%s448] sm:$0xff]
      %v738 = vcombine.high %v736, %v736
      %v740 = vsel %vm702, %v736, 0.0
      %v741 = vsel %vm703, %v738, 0.0
      %744 = vrot.lane.b32.xlu0 %v740, 1
      %v745 = vpop.permute.xlu0 %744
      %746 = vrot.lane.b32.xlu0 %v741, 1
      %v747 = vpop.permute.xlu0 %746
      %v748 = vsel %vm712, %v745, %v747
      %vm751 = vcmask 1043464
      %752 = vst.msk [vmem:[#allocation2 + $0xb0] sm:$0xf] %vm751, %v745
      %753 = vst [vmem:[#allocation2 + $0xb8] sm:$0xf] %v748
      %vm754 = vcmask 3072
      %755 = vst.msk [vmem:[#allocation2 + $0xb0] sm:$0xf] %vm754, 0.0
      %756 = vst [vmem:[#allocation2 + $0xb0] sm:$0xf0] 0.0
      %757 = vst [vmem:[#allocation2 + $0xb8] sm:$0xf0] 0.0
      %v758 = vld [vmem:[%s453] sm:$0xff]
      %v759 = vld [vmem:[%s453 + $0x8] sm:$0xff]
      %760 = vst [vmem:[#allocation2 + $0xc0] sm:$0xff] %v758
      %761 = vst [vmem:[#allocation2 + $0xc8] sm:$0xff] %v759
      %v762 = vld [vmem:[%s458] sm:$0xff]
      %v763 = vld [vmem:[%s458 + $0x8] sm:$0xff]
      %764 = vst [vmem:[#allocation2 + $0xd0] sm:$0xff] %v762
      %765 = vst [vmem:[#allocation2 + $0xd8] sm:$0xff] %v763
      %v766 = vld [vmem:[%s448] sm:$0xff]
      %v768 = vcombine.high %v766, %v766
      %770 = vst [vmem:[#allocation2 + $0xe0] sm:$0xf] %v766
      %771 = vst [vmem:[#allocation2 + $0xe8] sm:$0xf] %v768
      %772 = vst [vmem:[#allocation2 + $0xe0] sm:$0xf0] 0.0
      %773 = vst [vmem:[#allocation2 + $0xe8] sm:$0xf0] 0.0
      %v774 = vld [vmem:[%s453] sm:$0xff]
      %v775 = vld [vmem:[%s453 + $0x8] sm:$0xff]
      %v776 = vand.u32 %v488, 15
      %v777 = vand.u32 %v489, 15
      %vm778 = vcmp.lt.s32.totalorder %v776, 15
      %vm779 = vcmp.lt.s32.totalorder %v777, 15
      %v780 = vsel %vm778, 1, 0
      %v781 = vsel %vm779, 1, 0
      %vm782 = vcmp.eq.s32.totalorder %v780, 1
      %vm783 = vcmp.eq.s32.totalorder %v781, 1
      %786 = vrot.lane.b32.xlu0 %v774, 127
      %v787 = vpop.permute.xlu0 %786
      %788 = vrot.lane.b32.xlu0 %v775, 127
      %v789 = vpop.permute.xlu0 %788
      %vm790 = vcmask 1039360
      %v791 = vsel %vm790, %v787, %v789
      %v794 = vsel %vm782, %v791, 0.0
      %v795 = vsel %vm783, %v789, 0.0
      %796 = vst [vmem:[#allocation2 + $0xf0] sm:$0xff] %v794
      %797 = vst.msk [vmem:[#allocation2 + $0xf8] sm:$0xff] %vm790, %v795
      %vm798 = vcmask 1048568
      %799 = vst.msk [vmem:[#allocation2 + $0xf8] sm:$0xff] %vm798, 0.0
      %v800 = vld [vmem:[%s458] sm:$0xff]
      %v801 = vld [vmem:[%s458 + $0x8] sm:$0xff]
      %804 = vrot.lane.b32.xlu0 %v800, 127
      %v805 = vpop.permute.xlu0 %804
      %806 = vrot.lane.b32.xlu0 %v801, 127
      %v807 = vpop.permute.xlu0 %806
      %v808 = vsel %vm790, %v805, %v807
      %v811 = vsel %vm782, %v808, 0.0
      %v812 = vsel %vm783, %v807, 0.0
      %813 = vst [vmem:[#allocation2 + $0x100] sm:$0xff] %v811
      %814 = vst.msk [vmem:[#allocation2 + $0x108] sm:$0xff] %vm790, %v812
      %815 = vst.msk [vmem:[#allocation2 + $0x108] sm:$0xff] %vm798, 0.0
      %v816 = vld [vmem:[%s448] sm:$0xff]
      %v818 = vcombine.high %v816, %v816
      %819 = vrot.lane.b32.xlu0 %v816, 127
      %v820 = vpop.permute.xlu0 %819
      %821 = vrot.lane.b32.xlu0 %v818, 127
      %v822 = vpop.permute.xlu0 %821
      %v823 = vsel %vm790, %v820, %v822
      %v826 = vsel %vm782, %v823, 0.0
      %v827 = vsel %vm783, %v822, 0.0
      %828 = vst [vmem:[#allocation2 + $0x110] sm:$0xf] %v826
      %vm829 = vcmask 1035264
      %830 = vst.msk [vmem:[#allocation2 + $0x118] sm:$0xf] %vm829, %v827
      %vm831 = vcmask 1044472
      %832 = vst.msk [vmem:[#allocation2 + $0x118] sm:$0xf] %vm831, 0.0
      %833 = vst [vmem:[#allocation2 + $0x110] sm:$0xf0] 0.0
      %834 = vst [vmem:[#allocation2 + $0x118] sm:$0xf0] 0.0
      %v835 = vld [vmem:[%s453] sm:$0xff]
      %v836 = vld [vmem:[%s453 + $0x8] sm:$0xff]
      %vm837 = vcmp.lt.s32.totalorder %v488, 240
      %vm838 = vcmp.lt.s32.totalorder %v489, 240
      %vm839 = vcmp.ge.s32.totalorder %v776, 1
      %vm840 = vcmp.ge.s32.totalorder %v777, 1
      %vm841 = vmand %vm837, %vm839
      %vm842 = vmand %vm838, %vm840
      %v843 = vsel %vm841, 1, 0
      %v844 = vsel %vm842, 1, 0
      %vm845 = vcmp.eq.s32.totalorder %v843, 1
      %vm846 = vcmp.eq.s32.totalorder %v844, 1
      %849 = vrot.lane.b32.xlu0 %v835, 113
      %v850 = vpop.permute.xlu0 %849
      %851 = vrot.lane.b32.xlu0 %v836, 113
      %v852 = vpop.permute.xlu0 %851
      %vm853 = vcmask 924672
      %v854 = vsel %vm853, %v850, %v852
      %v857 = vsel %vm845, %v854, 0.0
      %v858 = vsel %vm846, %v852, 0.0
      %859 = vst [vmem:[#allocation2 + $0x120] sm:$0xff] %v857
      %860 = vst.msk [vmem:[#allocation2 + $0x128] sm:$0xff] %vm853, %v858
      %vm861 = vcmask 1048456
      %862 = vst.msk [vmem:[#allocation2 + $0x128] sm:$0xff] %vm861, 0.0
      %v863 = vld [vmem:[%s458] sm:$0xff]
      %v864 = vld [vmem:[%s458 + $0x8] sm:$0xff]
      %867 = vrot.lane.b32.xlu0 %v863, 113
      %v868 = vpop.permute.xlu0 %867
      %869 = vrot.lane.b32.xlu0 %v864, 113
      %v870 = vpop.permute.xlu0 %869
      %v871 = vsel %vm853, %v868, %v870
      %v874 = vsel %vm845, %v871, 0.0
      %v875 = vsel %vm846, %v870, 0.0
      %876 = vst [vmem:[#allocation2 + $0x130] sm:$0xff] %v874
      %877 = vst.msk [vmem:[#allocation2 + $0x138] sm:$0xff] %vm853, %v875
      %878 = vst.msk [vmem:[#allocation2 + $0x138] sm:$0xff] %vm861, 0.0
      %v879 = vld [vmem:[%s448] sm:$0xff]
      %v881 = vcombine.high %v879, %v879
      %882 = vrot.lane.b32.xlu0 %v879, 113
      %v883 = vpop.permute.xlu0 %882
      %884 = vrot.lane.b32.xlu0 %v881, 113
      %v885 = vpop.permute.xlu0 %884
      %v886 = vsel %vm853, %v883, %v885
      %v889 = vsel %vm845, %v886, 0.0
      %v890 = vsel %vm846, %v885, 0.0
      %891 = vst [vmem:[#allocation2 + $0x140] sm:$0xf] %v889
      %vm892 = vcmask 920576
      %893 = vst.msk [vmem:[#allocation2 + $0x148] sm:$0xf] %vm892, %v890
      %vm894 = vcmask 1044360
      %895 = vst.msk [vmem:[#allocation2 + $0x148] sm:$0xf] %vm894, 0.0
      %896 = vst [vmem:[#allocation2 + $0x140] sm:$0xf0] 0.0
      %897 = vst [vmem:[#allocation2 + $0x148] sm:$0xf0] 0.0
      %v898 = vld [vmem:[%s453] sm:$0xff]
      %v899 = vld [vmem:[%s453 + $0x8] sm:$0xff]
      %v900 = vsel %vm837, 1, 0
      %v901 = vsel %vm838, 1, 0
      %vm902 = vcmp.eq.s32.totalorder %v900, 1
      %vm903 = vcmp.eq.s32.totalorder %v901, 1
      %906 = vrot.lane.b32.xlu0 %v898, 112
      %v907 = vpop.permute.xlu0 %906
      %908 = vrot.lane.b32.xlu0 %v899, 112
      %v909 = vpop.permute.xlu0 %908
      %vm910 = vcmask 916480
      %v911 = vsel %vm910, %v907, %v909
      %v914 = vsel %vm902, %v911, 0.0
      %v915 = vsel %vm903, %v909, 0.0
      %916 = vst [vmem:[#allocation2 + $0x150] sm:$0xff] %v914
      %917 = vst.msk [vmem:[#allocation2 + $0x158] sm:$0xff] %vm910, %v915
      %vm918 = vcmask 1048448
      %919 = vst.msk [vmem:[#allocation2 + $0x158] sm:$0xff] %vm918, 0.0
      %v920 = vld [vmem:[%s458] sm:$0xff]
      %v921 = vld [vmem:[%s458 + $0x8] sm:$0xff]
      %924 = vrot.lane.b32.xlu0 %v920, 112
      %v925 = vpop.permute.xlu0 %924
      %926 = vrot.lane.b32.xlu0 %v921, 112
      %v927 = vpop.permute.xlu0 %926
      %v928 = vsel %vm910, %v925, %v927
      %v931 = vsel %vm902, %v928, 0.0
      %v932 = vsel %vm903, %v927, 0.0
      %933 = vst [vmem:[#allocation2 + $0x160] sm:$0xff] %v931
      %934 = vst.msk [vmem:[#allocation2 + $0x168] sm:$0xff] %vm910, %v932
      %935 = vst.msk [vmem:[#allocation2 + $0x168] sm:$0xff] %vm918, 0.0
      %v936 = vld [vmem:[%s448] sm:$0xff]
      %v938 = vcombine.high %v936, %v936
      %939 = vrot.lane.b32.xlu0 %v936, 112
      %v940 = vpop.permute.xlu0 %939
      %941 = vrot.lane.b32.xlu0 %v938, 112
      %v942 = vpop.permute.xlu0 %941
      %v943 = vsel %vm910, %v940, %v942
      %v946 = vsel %vm902, %v943, 0.0
      %v947 = vsel %vm903, %v942, 0.0
      %948 = vst [vmem:[#allocation2 + $0x170] sm:$0xf] %v946
      %vm949 = vcmask 912384
      %950 = vst.msk [vmem:[#allocation2 + $0x178] sm:$0xf] %vm949, %v947
      %vm951 = vcmask 1044352
      %952 = vst.msk [vmem:[#allocation2 + $0x178] sm:$0xf] %vm951, 0.0
      %953 = vst [vmem:[#allocation2 + $0x170] sm:$0xf0] 0.0
      %954 = vst [vmem:[#allocation2 + $0x178] sm:$0xf0] 0.0
      %v955 = vld [vmem:[%s453] sm:$0xff]
      %v956 = vld [vmem:[%s453 + $0x8] sm:$0xff]
      %vm957 = vmand %vm837, %vm778
      %vm958 = vmand %vm838, %vm779
      %v959 = vsel %vm957, 1, 0
      %v960 = vsel %vm958, 1, 0
      %vm961 = vcmp.eq.s32.totalorder %v959, 1
      %vm962 = vcmp.eq.s32.totalorder %v960, 1
      %965 = vrot.lane.b32.xlu0 %v955, 111
      %v966 = vpop.permute.xlu0 %965
      %967 = vrot.lane.b32.xlu0 %v956, 111
      %v968 = vpop.permute.xlu0 %967
      %vm969 = vcmask 908288
      %v970 = vsel %vm969, %v966, %v968
      %v973 = vsel %vm961, %v970, 0.0
      %v974 = vsel %vm962, %v968, 0.0
      %975 = vst [vmem:[#allocation2 + $0x180] sm:$0xff] %v973
      %976 = vst.msk [vmem:[#allocation2 + $0x188] sm:$0xff] %vm969, %v974
      %vm977 = vcmask 1048440
      %978 = vst.msk [vmem:[#allocation2 + $0x188] sm:$0xff] %vm977, 0.0
      %v979 = vld [vmem:[%s458] sm:$0xff]
      %v980 = vld [vmem:[%s458 + $0x8] sm:$0xff]
      %983 = vrot.lane.b32.xlu0 %v979, 111
      %v984 = vpop.permute.xlu0 %983
      %985 = vrot.lane.b32.xlu0 %v980, 111
      %v986 = vpop.permute.xlu0 %985
      %v987 = vsel %vm969, %v984, %v986
      %v990 = vsel %vm961, %v987, 0.0
      %v991 = vsel %vm962, %v986, 0.0
      %992 = vst [vmem:[#allocation2 + $0x190] sm:$0xff] %v990
      %993 = vst.msk [vmem:[#allocation2 + $0x198] sm:$0xff] %vm969, %v991
      %994 = vst.msk [vmem:[#allocation2 + $0x198] sm:$0xff] %vm977, 0.0
      %v995 = vld [vmem:[%s448] sm:$0xff]
      %v997 = vcombine.high %v995, %v995
      %998 = vrot.lane.b32.xlu0 %v995, 111
      %v999 = vpop.permute.xlu0 %998
      %1000 = vrot.lane.b32.xlu0 %v997, 111
      %v1001 = vpop.permute.xlu0 %1000
      %v1002 = vsel %vm969, %v999, %v1001
      %v1005 = vsel %vm961, %v1002, 0.0
      %v1006 = vsel %vm962, %v1001, 0.0
      %1007 = vst [vmem:[#allocation2 + $0x1a0] sm:$0xf] %v1005
      %vm1008 = vcmask 904192
      %1009 = vst.msk [vmem:[#allocation2 + $0x1a8] sm:$0xf] %vm1008, %v1006
      %vm1010 = vcmask 1044344
      %1011 = vst.msk [vmem:[#allocation2 + $0x1a8] sm:$0xf] %vm1010, 0.0
      %1012 = vst [vmem:[#allocation2 + $0x1a0] sm:$0xf0] 0.0
      %1013 = vst [vmem:[#allocation2 + $0x1a8] sm:$0xf0] 0.0
      %v1014 = vld [vmem:[%s4] sm:$0xff]
      %v1015 = vld [vmem:[%s4 + $0x8] sm:$0xff]
      %v1016 = vld [vmem:[%s4 + $0x10] sm:$0xff]
      %v1017 = vld [vmem:[%s4 + $0x18] sm:$0xff]
      %v1018 = vld [vmem:[%s4 + $0x20] sm:$0xff]
      %v1019 = vld [vmem:[#allocation2] sm:$0xff]
      %v1020 = vld [vmem:[#allocation2 + $0x8] sm:$0xff]
      %v1021 = vld [vmem:[#allocation2 + $0x10] sm:$0xff]
      %v1022 = vld [vmem:[#allocation2 + $0x18] sm:$0xff]
      %v1023 = vld [vmem:[#allocation2 + $0x20] sm:$0xff]
      %v1024 = vld [vmem:[#allocation2 + $0x28] sm:$0xff]
      %v1025 = vld [vmem:[#allocation2 + $0x30] sm:$0xff]
      %v1026 = vld [vmem:[#allocation2 + $0x38] sm:$0xff]
      %v1027 = vld [vmem:[#allocation2 + $0x40] sm:$0xff]
      %v1028 = vld [vmem:[#allocation2 + $0x48] sm:$0xff]
      %v1029 = vld [vmem:[#allocation2 + $0x50] sm:$0xff]
      %v1030 = vld [vmem:[#allocation2 + $0x58] sm:$0xff]
      %v1031 = vld [vmem:[#allocation2 + $0x60] sm:$0xff]
      %v1032 = vld [vmem:[#allocation2 + $0x68] sm:$0xff]
      %v1033 = vld [vmem:[#allocation2 + $0x70] sm:$0xff]
      %v1034 = vld [vmem:[#allocation2 + $0x78] sm:$0xff]
      %v1035 = vld [vmem:[#allocation2 + $0x80] sm:$0xff]
      %v1036 = vld [vmem:[#allocation2 + $0x88] sm:$0xff]
      %v1037 = vld [vmem:[#allocation2 + $0x90] sm:$0xff]
      %v1038 = vld [vmem:[#allocation2 + $0x98] sm:$0xff]
      %v1039 = vld [vmem:[#allocation2 + $0xa0] sm:$0xff]
      %v1040 = vld [vmem:[#allocation2 + $0xa8] sm:$0xff]
      %v1041 = vld [vmem:[#allocation2 + $0xb0] sm:$0xff]
      %v1042 = vld [vmem:[#allocation2 + $0xb8] sm:$0xff]
      %v1043 = vld [vmem:[#allocation2 + $0xc0] sm:$0xff]
      %v1044 = vld [vmem:[#allocation2 + $0xc8] sm:$0xff]
      %v1045 = vld [vmem:[#allocation2 + $0xd0] sm:$0xff]
      %v1046 = vld [vmem:[#allocation2 + $0xd8] sm:$0xff]
      %v1047 = vld [vmem:[#allocation2 + $0xe0] sm:$0xff]
      %v1048 = vld [vmem:[#allocation2 + $0xe8] sm:$0xff]
      %v1049 = vld [vmem:[#allocation2 + $0xf0] sm:$0xff]
      %v1050 = vld [vmem:[#allocation2 + $0xf8] sm:$0xff]
      %v1051 = vld [vmem:[#allocation2 + $0x100] sm:$0xff]
      %v1052 = vld [vmem:[#allocation2 + $0x108] sm:$0xff]
      %v1053 = vld [vmem:[#allocation2 + $0x110] sm:$0xff]
      %v1054 = vld [vmem:[#allocation2 + $0x118] sm:$0xff]
      %v1055 = vld [vmem:[#allocation2 + $0x120] sm:$0xff]
      %v1056 = vld [vmem:[#allocation2 + $0x128] sm:$0xff]
      %v1057 = vld [vmem:[#allocation2 + $0x130] sm:$0xff]
      %v1058 = vld [vmem:[#allocation2 + $0x138] sm:$0xff]
      %v1059 = vld [vmem:[#allocation2 + $0x140] sm:$0xff]
      %v1060 = vld [vmem:[#allocation2 + $0x148] sm:$0xff]
      %v1061 = vld [vmem:[#allocation2 + $0x150] sm:$0xff]
      %v1062 = vld [vmem:[#allocation2 + $0x158] sm:$0xff]
      %v1063 = vld [vmem:[#allocation2 + $0x160] sm:$0xff]
      %v1064 = vld [vmem:[#allocation2 + $0x168] sm:$0xff]
      %v1065 = vld [vmem:[#allocation2 + $0x170] sm:$0xff]
      %v1066 = vld [vmem:[#allocation2 + $0x178] sm:$0xff]
      %v1067 = vld [vmem:[#allocation2 + $0x180] sm:$0xff]
      %v1068 = vld [vmem:[#allocation2 + $0x188] sm:$0xff]
      %v1069 = vld [vmem:[#allocation2 + $0x190] sm:$0xff]
      %v1070 = vld [vmem:[#allocation2 + $0x198] sm:$0xff]
      %v1071 = vld [vmem:[#allocation2 + $0x1a0] sm:$0xff]
      %v1072 = vld [vmem:[#allocation2 + $0x1a8] sm:$0xff]
      %v1073 = vpack.c.bf16 %v1021, %v1019
      %v1074 = vpack.c.bf16 %v1022, %v1020
      %v1075 = vpack.c.bf16 %v1025, %v1023
      %v1076 = vpack.c.bf16 %v1026, %v1024
      %v1077 = vpack.c.bf16 %v1029, %v1027
      %v1078 = vpack.c.bf16 %v1030, %v1028
      %v1079 = vpack.c.bf16 %v1033, %v1031
      %v1080 = vpack.c.bf16 %v1034, %v1032
      %v1081 = vpack.c.bf16 %v1037, %v1035
      %v1082 = vpack.c.bf16 %v1038, %v1036
      %v1083 = vpack.c.bf16 %v1041, %v1039
      %v1084 = vpack.c.bf16 %v1042, %v1040
      %v1085 = vpack.c.bf16 %v1045, %v1043
      %v1086 = vpack.c.bf16 %v1046, %v1044
      %v1087 = vpack.c.bf16 %v1049, %v1047
      %v1088 = vpack.c.bf16 %v1050, %v1048
      %v1089 = vpack.c.bf16 %v1053, %v1051
      %v1090 = vpack.c.bf16 %v1054, %v1052
      %v1091 = vpack.c.bf16 %v1057, %v1055
      %v1092 = vpack.c.bf16 %v1058, %v1056
      %v1093 = vpack.c.bf16 %v1061, %v1059
      %v1094 = vpack.c.bf16 %v1062, %v1060
      %v1095 = vpack.c.bf16 %v1065, %v1063
      %v1096 = vpack.c.bf16 %v1066, %v1064
      %v1097 = vpack.c.bf16 %v1069, %v1067
      %v1098 = vpack.c.bf16 %v1070, %v1068
      %v1099 = vpack.c.bf16 %v1071, %v1071
      %v1100 = vpack.c.bf16 %v1072, %v1072
      %v1101 = vld [vmem:[%s5] sm:$0xff]
      %v1102 = vld [vmem:[%s5 + $0x8] sm:$0xff]
      %v1103 = vld [vmem:[%s5 + $0x10] sm:$0xff]
      %v1104 = vld [vmem:[%s5 + $0x18] sm:$0xff]
      %v1105 = vld [vmem:[%s5 + $0x20] sm:$0xff]
      %1107 = vset.pattern.permute.xlu0 0
      %1108 = vperm.xlu0 %1107, %v1101
      %v1109 = vpop.permute.xlu0 %1108
      %1112 = vset.pattern.permute.xlu0 0
      %1113 = vperm.xlu0 %1112, %v1102
      %v1114 = vpop.permute.xlu0 %1113
      %1117 = vset.pattern.permute.xlu0 0
      %1118 = vperm.xlu0 %1117, %v1103
      %v1119 = vpop.permute.xlu0 %1118
      %1122 = vset.pattern.permute.xlu0 0
      %1123 = vperm.xlu0 %1122, %v1104
      %v1124 = vpop.permute.xlu0 %1123
      %1127 = vset.pattern.permute.xlu0 0
      %1128 = vperm.xlu0 %1127, %v1105
      %v1129 = vpop.permute.xlu0 %1128
      %v1136 = vunpack.c.l.b16 %v1014
      %v1137 = vunpack.c.h.b16 %v1014
      %v1138 = vunpack.c.l.b16 %v1015
      %v1139 = vunpack.c.h.b16 %v1015
      %v1140 = vunpack.c.l.b16 %v1016
      %v1141 = vunpack.c.h.b16 %v1016
      %v1142 = vunpack.c.l.b16 %v1017
      %v1143 = vunpack.c.h.b16 %v1017
      %v1144 = vunpack.c.l.b16 %v1018
      %v1145 = vunpack.c.h.b16 %v1018
      %v1146 = vpack.c.b16 %v1138, %v1136
      %v1147 = vpack.c.b16 %v1139, %v1137
      %v1148 = vpack.c.b16 %v1142, %v1140
      %v1149 = vpack.c.b16 %v1143, %v1141
      %v1150 = vpack.c.b16 %v1144, %v1144
      %v1151 = vpack.c.b16 %v1145, %v1145
      %vm1155 = vcmask 719872
      %v1157 = vsel %vm1155, %v1147, 0
      %v1160 = vsel %vm1155, %v1149, 0
      %v1163 = vsel %vm1155, %v1151, 0
      %vm1165 = vcmask 1043456
      %v1167 = vsel %vm1165, %v1099, 0
      %v1170 = vsel %vm1165, %v1100, 0
      %1172 = vmatprep.subr.bf16.mxu0 %v1088
      %1173 = vmatpush1.bf16.msra.mxu0 %v1087
      %1174 = vmatprep.subr.bf16.mxu0 %v1086
      %1175 = vmatpush1.bf16.msra.mxu0 %v1085
      %1176 = vmatprep.subr.bf16.mxu0 %v1084
      %1177 = vmatpush1.bf16.msra.mxu0 %v1083
      %1178 = vmatprep.subr.bf16.mxu0 %v1082
      %1179 = vmatpush1.bf16.msra.mxu0 %v1081
      %1180 = vmatprep.subr.bf16.mxu0 %v1080
      %1181 = vmatpush1.bf16.msra.mxu0 %v1079
      %1182 = vmatprep.subr.bf16.mxu0 %v1078
      %1183 = vmatpush1.bf16.msra.mxu0 %v1077
      %1184 = vmatprep.subr.bf16.mxu0 %v1076
      %1185 = vmatpush1.bf16.msra.mxu0 %v1075
      %1186 = vmatprep.subr.bf16.mxu0 %v1074
      %1187 = vmatpush1.bf16.msra.mxu0 %v1073
      %1188 = vmatprep.subr.bf16.mxu0 0
      %1189 = vmatpush2.bf16.msra.mxu0 0
      %1190 = vmatprep.subr.bf16.mxu0 0
      %1191 = vmatpush2.bf16.msra.mxu0 0
      %1192 = vmatprep.subr.bf16.mxu0 %v1170
      %1193 = vmatpush2.bf16.msra.mxu0 %v1167
      %1194 = vmatprep.subr.bf16.mxu0 %v1098
      %1195 = vmatpush2.bf16.msra.mxu0 %v1097
      %1196 = vmatprep.subr.bf16.mxu0 %v1096
      %1197 = vmatpush2.bf16.msra.mxu0 %v1095
      %1198 = vmatprep.subr.bf16.mxu0 %v1094
      %1199 = vmatpush2.bf16.msra.mxu0 %v1093
      %1200 = vmatprep.subr.bf16.mxu0 %v1092
      %1201 = vmatpush2.bf16.msra.mxu0 %v1091
      %1202 = vmatprep.subr.bf16.mxu0 %v1090
      %1203 = vmatpush2.bf16.msra.mxu0 %v1089
      %1204 = vmatprep.mubr.bf16.mxu0 %v1157
      %1205 = vmatmul.mubr.bf16.gmra.mxu0 %v1146
      %v1206 = vpop.f32.mrf.mxu0
      %v1207 = vadd.f32 %v1109, %v1206
      %v1208 = vpop.f32.mrf.mxu0
      %v1209 = vadd.f32 %v1109, %v1208
      %v1210 = vpop.f32.mrf.mxu0
      %v1211 = vadd.f32 %v1114, %v1210
      %v1212 = vpop.f32.mrf.mxu0
      %v1213 = vadd.f32 %v1114, %v1212
      %1214 = vmatprep.mubr.bf16.mxu0 %v1160
      %1215 = vmatmul.mubr.bf16.gmra.mxu0 %v1148
      %v1216 = vpop.f32.mrf.mxu0
      %v1217 = vadd.f32 %v1119, %v1216
      %v1218 = vpop.f32.mrf.mxu0
      %v1219 = vadd.f32 %v1119, %v1218
      %v1220 = vpop.f32.mrf.mxu0
      %v1221 = vadd.f32 %v1124, %v1220
      %v1222 = vpop.f32.mrf.mxu0
      %v1223 = vadd.f32 %v1124, %v1222
      %1224 = vmatprep.mubr.bf16.mxu0 %v1163
      %1225 = vmatmul.mubr.bf16.gmra.mxu0 %v1150
      %v1226 = vpop.f32.mrf.mxu0
      %v1227 = vadd.f32 %v1129, %v1226
      %v1228 = vpop.f32.mrf.mxu0
      %v1229 = vadd.f32 %v1129, %v1228
      %v1230 = vpop.f32.mrf.mxu0
      %v1231 = vpop.f32.mrf.mxu0
      %1232 = vdwg.mxu0
      %v1233 = vxor.u32 %v1207, 2147483648
      %v1234 = vxor.u32 %v1209, 2147483648
      %v1235 = vxor.u32 %v1211, 2147483648
      %v1236 = vxor.u32 %v1213, 2147483648
      %v1237 = vxor.u32 %v1217, 2147483648
      %v1238 = vxor.u32 %v1219, 2147483648
      %v1239 = vmul.f32 %v1233, 1.442695
      %v1240 = vpow.pop %v1239
      %v1241 = vmul.f32 %v1234, 1.442695
      %v1242 = vpow.pop %v1241
      %v1243 = vmul.f32 %v1235, 1.442695
      %v1244 = vpow.pop %v1243
      %v1245 = vmul.f32 %v1236, 1.442695
      %v1246 = vpow.pop %v1245
      %v1247 = vmul.f32 %v1237, 1.442695
      %v1248 = vpow.pop %v1247
      %v1249 = vmul.f32 %v1238, 1.442695
      %v1250 = vpow.pop %v1249
      %v1251 = vadd.f32 %v1240, 1.0
      %v1252 = vadd.f32 %v1242, 1.0
      %v1253 = vadd.f32 %v1244, 1.0
      %v1254 = vadd.f32 %v1246, 1.0
      %v1255 = vadd.f32 %v1248, 1.0
      %v1256 = vadd.f32 %v1250, 1.0
      %v1257 = vrcp.pop %v1251
      %v1258 = vmul.f32 1.0, %v1257
      %v1259 = vrcp.pop %v1252
      %v1260 = vmul.f32 1.0, %v1259
      %v1261 = vrcp.pop %v1253
      %v1262 = vmul.f32 1.0, %v1261
      %v1263 = vrcp.pop %v1254
      %v1264 = vmul.f32 1.0, %v1263
      %v1265 = vrcp.pop %v1255
      %v1266 = vmul.f32 1.0, %v1265
      %v1267 = vrcp.pop %v1256
      %v1268 = vmul.f32 1.0, %v1267
      %v1269 = vtanh.pop %v1221
      %v1270 = vtanh.pop %v1223
      %v1271 = vld [vmem:[%s463] sm:$0xff]
      %v1272 = vld [vmem:[%s463 + $0x8] sm:$0xff]
      %v1273 = vmul.f32 %v1262, %v1271
      %v1274 = vmul.f32 %v1264, %v1272
      %v1275 = vmul.f32 %v1258, %v1269
      %v1276 = vmul.f32 %v1260, %v1270
      %v1277 = vadd.f32 %v1273, %v1275
      %v1278 = vadd.f32 %v1274, %v1276
      %v1279 = vtanh.pop %v1277
      %v1280 = vtanh.pop %v1278
      %v1281 = vmul.f32 %v1266, %v1279
      %v1282 = vmul.f32 %v1268, %v1280
      %1283 = vst [vmem:[%s473] sm:$0xff] %v1281
      %1284 = vst [vmem:[%s473 + $0x8] sm:$0xff] %v1282
      %1285 = vst [vmem:[%s478] sm:$0xff] %v1277
      %1286 = vst [vmem:[%s478 + $0x8] sm:$0xff] %v1278
      %1287 = vst [vmem:[%s483] sm:$0xff] %v1227
      %1288 = vst [vmem:[%s483 + $0x8] sm:$0xff] %v1229
      %v1289 = vld [vmem:[%s473] sm:$0xff]
      %v1290 = vld [vmem:[%s473 + $0x8] sm:$0xff]
      %v1291 = vadd.s32 %v488, 34
      %v1292 = vadd.s32 %v489, 34
      %vm1293 = vcmp.ge.s32.totalorder %v1291, 32
      %vm1294 = vcmp.ge.s32.totalorder %v1292, 32
      %v1295 = vand.u32 %v1291, 15
      %v1296 = vand.u32 %v1292, 15
      %vm1297 = vcmp.ge.s32.totalorder %v1295, 2
      %vm1298 = vcmp.ge.s32.totalorder %v1296, 2
      %vm1299 = vmand %vm1293, %vm1297
      %vm1300 = vmand %vm1294, %vm1298
      %v1301 = vsel %vm1299, 1, 0
      %v1302 = vsel %vm1300, 1, 0
      %vm1303 = vcmp.eq.s32.totalorder %v1301, 1
      %vm1304 = vcmp.eq.s32.totalorder %v1302, 1
      %v1305 = vsel %vm1303, %v1289, 0.0
      %v1306 = vsel %vm1304, %v1290, 0.0
      %1309 = vrot.lane.b32.xlu0 %v1305, 34
      %v1310 = vpop.permute.xlu0 %1309
      %1311 = vrot.lane.b32.xlu0 %v1306, 34
      %v1312 = vpop.permute.xlu0 %1311
      %vm1313 = vcmask 277504
      %v1314 = vsel %vm1313, %v1310, %v1312
      %vm1317 = vcmask 1047824
      %1318 = vst.msk [vmem:[#allocation3] sm:$0xff] %vm1317, %v1310
      %1319 = vst [vmem:[#allocation3 + $0x8] sm:$0xff] %v1314
      %1320 = vst.msk [vmem:[#allocation3] sm:$0xff] %vm1313, 0.0
      %v1321 = vld [vmem:[%s473] sm:$0xff]
      %v1322 = vld [vmem:[%s473 + $0x8] sm:$0xff]
      %v1323 = vadd.s32 %v488, 33
      %v1324 = vadd.s32 %v489, 33
      %vm1325 = vcmp.ge.s32.totalorder %v1323, 32
      %vm1326 = vcmp.ge.s32.totalorder %v1324, 32
      %v1327 = vand.u32 %v1323, 15
      %v1328 = vand.u32 %v1324, 15
      %vm1329 = vcmp.ge.s32.totalorder %v1327, 1
      %vm1330 = vcmp.ge.s32.totalorder %v1328, 1
      %vm1331 = vmand %vm1325, %vm1329
      %vm1332 = vmand %vm1326, %vm1330
      %v1333 = vsel %vm1331, 1, 0
      %v1334 = vsel %vm1332, 1, 0
      %vm1335 = vcmp.eq.s32.totalorder %v1333, 1
      %vm1336 = vcmp.eq.s32.totalorder %v1334, 1
      %v1337 = vsel %vm1335, %v1321, 0.0
      %v1338 = vsel %vm1336, %v1322, 0.0
      %1341 = vrot.lane.b32.xlu0 %v1337, 33
      %v1342 = vpop.permute.xlu0 %1341
      %1343 = vrot.lane.b32.xlu0 %v1338, 33
      %v1344 = vpop.permute.xlu0 %1343
      %vm1345 = vcmask 269312
      %v1346 = vsel %vm1345, %v1342, %v1344
      %vm1349 = vcmask 1047816
      %1350 = vst.msk [vmem:[#allocation3 + $0x10] sm:$0xff] %vm1349, %v1342
      %1351 = vst [vmem:[#allocation3 + $0x18] sm:$0xff] %v1346
      %1352 = vst.msk [vmem:[#allocation3 + $0x10] sm:$0xff] %vm1345, 0.0
      %v1353 = vld [vmem:[%s473] sm:$0xff]
      %v1354 = vld [vmem:[%s473 + $0x8] sm:$0xff]
      %v1355 = vadd.s32 %v488, 32
      %v1356 = vadd.s32 %v489, 32
      %vm1357 = vcmp.ge.s32.totalorder %v1355, 32
      %vm1358 = vcmp.ge.s32.totalorder %v1356, 32
      %v1359 = vsel %vm1357, 1, 0
      %v1360 = vsel %vm1358, 1, 0
      %vm1361 = vcmp.eq.s32.totalorder %v1359, 1
      %vm1362 = vcmp.eq.s32.totalorder %v1360, 1
      %v1363 = vsel %vm1361, %v1353, 0.0
      %v1364 = vsel %vm1362, %v1354, 0.0
      %1367 = vrot.lane.b32.xlu0 %v1363, 32
      %v1368 = vpop.permute.xlu0 %1367
      %1369 = vrot.lane.b32.xlu0 %v1364, 32
      %v1370 = vpop.permute.xlu0 %1369
      %vm1371 = vcmask 261120
      %v1372 = vsel %vm1371, %v1368, %v1370
      %vm1375 = vcmask 1047808
      %1376 = vst.msk [vmem:[#allocation3 + $0x20] sm:$0xff] %vm1375, %v1368
      %1377 = vst [vmem:[#allocation3 + $0x28] sm:$0xff] %v1372
      %1378 = vst.msk [vmem:[#allocation3 + $0x20] sm:$0xff] %vm1371, 0.0
      %v1379 = vld [vmem:[%s473] sm:$0xff]
      %v1380 = vld [vmem:[%s473 + $0x8] sm:$0xff]
      %v1381 = vadd.s32 %v488, 31
      %v1382 = vadd.s32 %v489, 31
      %vm1383 = vcmp.ge.s32.totalorder %v1381, 32
      %vm1384 = vcmp.ge.s32.totalorder %v1382, 32
      %v1385 = vand.u32 %v1381, 15
      %v1386 = vand.u32 %v1382, 15
      %vm1387 = vcmp.lt.s32.totalorder %v1385, 15
      %vm1388 = vcmp.lt.s32.totalorder %v1386, 15
      %vm1389 = vmand %vm1383, %vm1387
      %vm1390 = vmand %vm1384, %vm1388
      %v1391 = vsel %vm1389, 1, 0
      %v1392 = vsel %vm1390, 1, 0
      %vm1393 = vcmp.eq.s32.totalorder %v1391, 1
      %vm1394 = vcmp.eq.s32.totalorder %v1392, 1
      %v1395 = vsel %vm1393, %v1379, 0.0
      %v1396 = vsel %vm1394, %v1380, 0.0
      %1399 = vrot.lane.b32.xlu0 %v1395, 31
      %v1400 = vpop.permute.xlu0 %1399
      %1401 = vrot.lane.b32.xlu0 %v1396, 31
      %v1402 = vpop.permute.xlu0 %1401
      %vm1403 = vcmask 252928
      %v1404 = vsel %vm1403, %v1400, %v1402
      %vm1407 = vcmask 1047800
      %1408 = vst.msk [vmem:[#allocation3 + $0x30] sm:$0xff] %vm1407, %v1400
      %1409 = vst [vmem:[#allocation3 + $0x38] sm:$0xff] %v1404
      %1410 = vst.msk [vmem:[#allocation3 + $0x30] sm:$0xff] %vm1403, 0.0
      %v1411 = vld [vmem:[%s473] sm:$0xff]
      %v1412 = vld [vmem:[%s473 + $0x8] sm:$0xff]
      %v1413 = vadd.s32 %v488, 30
      %v1414 = vadd.s32 %v489, 30
      %vm1415 = vcmp.ge.s32.totalorder %v1413, 32
      %vm1416 = vcmp.ge.s32.totalorder %v1414, 32
      %v1417 = vand.u32 %v1413, 15
      %v1418 = vand.u32 %v1414, 15
      %vm1419 = vcmp.lt.s32.totalorder %v1417, 14
      %vm1420 = vcmp.lt.s32.totalorder %v1418, 14
      %vm1421 = vmand %vm1415, %vm1419
      %vm1422 = vmand %vm1416, %vm1420
      %v1423 = vsel %vm1421, 1, 0
      %v1424 = vsel %vm1422, 1, 0
      %vm1425 = vcmp.eq.s32.totalorder %v1423, 1
      %vm1426 = vcmp.eq.s32.totalorder %v1424, 1
      %v1427 = vsel %vm1425, %v1411, 0.0
      %v1428 = vsel %vm1426, %v1412, 0.0
      %1431 = vrot.lane.b32.xlu0 %v1427, 30
      %v1432 = vpop.permute.xlu0 %1431
      %1433 = vrot.lane.b32.xlu0 %v1428, 30
      %v1434 = vpop.permute.xlu0 %1433
      %vm1435 = vcmask 244736
      %v1436 = vsel %vm1435, %v1432, %v1434
      %vm1439 = vcmask 1047792
      %1440 = vst.msk [vmem:[#allocation3 + $0x40] sm:$0xff] %vm1439, %v1432
      %1441 = vst [vmem:[#allocation3 + $0x48] sm:$0xff] %v1436
      %1442 = vst.msk [vmem:[#allocation3 + $0x40] sm:$0xff] %vm1435, 0.0
      %v1443 = vld [vmem:[%s473] sm:$0xff]
      %v1444 = vld [vmem:[%s473 + $0x8] sm:$0xff]
      %v1445 = vadd.s32 %v488, 18
      %v1446 = vadd.s32 %v489, 18
      %vm1447 = vcmp.ge.s32.totalorder %v1445, 16
      %vm1448 = vcmp.ge.s32.totalorder %v1446, 16
      %v1449 = vand.u32 %v1445, 15
      %v1450 = vand.u32 %v1446, 15
      %vm1451 = vcmp.ge.s32.totalorder %v1449, 2
      %vm1452 = vcmp.ge.s32.totalorder %v1450, 2
      %vm1453 = vmand %vm1447, %vm1451
      %vm1454 = vmand %vm1448, %vm1452
      %v1455 = vsel %vm1453, 1, 0
      %v1456 = vsel %vm1454, 1, 0
      %vm1457 = vcmp.eq.s32.totalorder %v1455, 1
      %vm1458 = vcmp.eq.s32.totalorder %v1456, 1
      %v1459 = vsel %vm1457, %v1443, 0.0
      %v1460 = vsel %vm1458, %v1444, 0.0
      %1463 = vrot.lane.b32.xlu0 %v1459, 18
      %v1464 = vpop.permute.xlu0 %1463
      %1465 = vrot.lane.b32.xlu0 %v1460, 18
      %v1466 = vpop.permute.xlu0 %1465
      %vm1467 = vcmask 146432
      %v1468 = vsel %vm1467, %v1464, %v1466
      %vm1471 = vcmask 1047696
      %1472 = vst.msk [vmem:[#allocation3 + $0x50] sm:$0xff] %vm1471, %v1464
      %1473 = vst [vmem:[#allocation3 + $0x58] sm:$0xff] %v1468
      %1474 = vst.msk [vmem:[#allocation3 + $0x50] sm:$0xff] %vm1467, 0.0
      %v1475 = vld [vmem:[%s473] sm:$0xff]
      %v1476 = vld [vmem:[%s473 + $0x8] sm:$0xff]
      %v1477 = vsel %vm502, %v1475, 0.0
      %v1478 = vsel %vm503, %v1476, 0.0
      %1481 = vrot.lane.b32.xlu0 %v1477, 17
      %v1482 = vpop.permute.xlu0 %1481
      %1483 = vrot.lane.b32.xlu0 %v1478, 17
      %v1484 = vpop.permute.xlu0 %1483
      %v1485 = vsel %vm512, %v1482, %v1484
      %1488 = vst.msk [vmem:[#allocation3 + $0x60] sm:$0xff] %vm516, %v1482
      %1489 = vst [vmem:[#allocation3 + $0x68] sm:$0xff] %v1485
      %1490 = vst.msk [vmem:[#allocation3 + $0x60] sm:$0xff] %vm512, 0.0
      %v1491 = vld [vmem:[%s473] sm:$0xff]
      %v1492 = vld [vmem:[%s473 + $0x8] sm:$0xff]
      %v1493 = vsel %vm566, %v1491, 0.0
      %v1494 = vsel %vm567, %v1492, 0.0
      %1497 = vrot.lane.b32.xlu0 %v1493, 16
      %v1498 = vpop.permute.xlu0 %1497
      %1499 = vrot.lane.b32.xlu0 %v1494, 16
      %v1500 = vpop.permute.xlu0 %1499
      %v1501 = vsel %vm576, %v1498, %v1500
      %1504 = vst.msk [vmem:[#allocation3 + $0x70] sm:$0xff] %vm580, %v1498
      %1505 = vst [vmem:[#allocation3 + $0x78] sm:$0xff] %v1501
      %1506 = vst.msk [vmem:[#allocation3 + $0x70] sm:$0xff] %vm576, 0.0
      %v1507 = vld [vmem:[%s473] sm:$0xff]
      %v1508 = vld [vmem:[%s473 + $0x8] sm:$0xff]
      %v1509 = vsel %vm636, %v1507, 0.0
      %v1510 = vsel %vm637, %v1508, 0.0
      %1513 = vrot.lane.b32.xlu0 %v1509, 15
      %v1514 = vpop.permute.xlu0 %1513
      %1515 = vrot.lane.b32.xlu0 %v1510, 15
      %v1516 = vpop.permute.xlu0 %1515
      %v1517 = vsel %vm646, %v1514, %v1516
      %1520 = vst.msk [vmem:[#allocation3 + $0x80] sm:$0xff] %vm650, %v1514
      %1521 = vst [vmem:[#allocation3 + $0x88] sm:$0xff] %v1517
      %1522 = vst.msk [vmem:[#allocation3 + $0x80] sm:$0xff] %vm646, 0.0
      %v1523 = vld [vmem:[%s473] sm:$0xff]
      %v1524 = vld [vmem:[%s473 + $0x8] sm:$0xff]
      %v1525 = vadd.s32 %v488, 14
      %v1526 = vadd.s32 %v489, 14
      %vm1527 = vcmp.ge.s32.totalorder %v1525, 16
      %vm1528 = vcmp.ge.s32.totalorder %v1526, 16
      %v1529 = vand.u32 %v1525, 15
      %v1530 = vand.u32 %v1526, 15
      %vm1531 = vcmp.lt.s32.totalorder %v1529, 14
      %vm1532 = vcmp.lt.s32.totalorder %v1530, 14
      %vm1533 = vmand %vm1527, %vm1531
      %vm1534 = vmand %vm1528, %vm1532
      %v1535 = vsel %vm1533, 1, 0
      %v1536 = vsel %vm1534, 1, 0
      %vm1537 = vcmp.eq.s32.totalorder %v1535, 1
      %vm1538 = vcmp.eq.s32.totalorder %v1536, 1
      %v1539 = vsel %vm1537, %v1523, 0.0
      %v1540 = vsel %vm1538, %v1524, 0.0
      %1543 = vrot.lane.b32.xlu0 %v1539, 14
      %v1544 = vpop.permute.xlu0 %1543
      %1545 = vrot.lane.b32.xlu0 %v1540, 14
      %v1546 = vpop.permute.xlu0 %1545
      %vm1547 = vcmask 113664
      %v1548 = vsel %vm1547, %v1544, %v1546
      %vm1551 = vcmask 1047664
      %1552 = vst.msk [vmem:[#allocation3 + $0x90] sm:$0xff] %vm1551, %v1544
      %1553 = vst [vmem:[#allocation3 + $0x98] sm:$0xff] %v1548
      %1554 = vst.msk [vmem:[#allocation3 + $0x90] sm:$0xff] %vm1547, 0.0
      %v1555 = vld [vmem:[%s473] sm:$0xff]
      %v1556 = vld [vmem:[%s473 + $0x8] sm:$0xff]
      %v1557 = vadd.s32 %v488, 2
      %v1558 = vadd.s32 %v489, 2
      %v1559 = vand.u32 %v1557, 15
      %v1560 = vand.u32 %v1558, 15
      %vm1561 = vcmp.ge.s32.totalorder %v1559, 2
      %vm1562 = vcmp.ge.s32.totalorder %v1560, 2
      %v1563 = vsel %vm1561, 1, 0
      %v1564 = vsel %vm1562, 1, 0
      %vm1565 = vcmp.eq.s32.totalorder %v1563, 1
      %vm1566 = vcmp.eq.s32.totalorder %v1564, 1
      %v1567 = vsel %vm1565, %v1555, 0.0
      %v1568 = vsel %vm1566, %v1556, 0.0
      %1571 = vrot.lane.b32.xlu0 %v1567, 2
      %v1572 = vpop.permute.xlu0 %1571
      %1573 = vrot.lane.b32.xlu0 %v1568, 2
      %v1574 = vpop.permute.xlu0 %1573
      %vm1575 = vcmask 15360
      %v1576 = vsel %vm1575, %v1572, %v1574
      %vm1579 = vcmask 1047568
      %1580 = vst.msk [vmem:[#allocation3 + $0xa0] sm:$0xff] %vm1579, %v1572
      %1581 = vst [vmem:[#allocation3 + $0xa8] sm:$0xff] %v1576
      %1582 = vst.msk [vmem:[#allocation3 + $0xa0] sm:$0xff] %vm1575, 0.0
      %v1583 = vld [vmem:[%s473] sm:$0xff]
      %v1584 = vld [vmem:[%s473 + $0x8] sm:$0xff]
      %v1585 = vsel %vm702, %v1583, 0.0
      %v1586 = vsel %vm703, %v1584, 0.0
      %1589 = vrot.lane.b32.xlu0 %v1585, 1
      %v1590 = vpop.permute.xlu0 %1589
      %1591 = vrot.lane.b32.xlu0 %v1586, 1
      %v1592 = vpop.permute.xlu0 %1591
      %v1593 = vsel %vm712, %v1590, %v1592
      %1596 = vst.msk [vmem:[#allocation3 + $0xb0] sm:$0xff] %vm716, %v1590
      %1597 = vst [vmem:[#allocation3 + $0xb8] sm:$0xff] %v1593
      %1598 = vst.msk [vmem:[#allocation3 + $0xb0] sm:$0xff] %vm712, 0.0
      %v1599 = vld [vmem:[%s473] sm:$0xff]
      %v1600 = vld [vmem:[%s473 + $0x8] sm:$0xff]
      %1601 = vst [vmem:[#allocation3 + $0xc0] sm:$0xff] %v1599
      %1602 = vst [vmem:[#allocation3 + $0xc8] sm:$0xff] %v1600
      %v1603 = vld [vmem:[%s473] sm:$0xff]
      %v1604 = vld [vmem:[%s473 + $0x8] sm:$0xff]
      %1607 = vrot.lane.b32.xlu0 %v1603, 127
      %v1608 = vpop.permute.xlu0 %1607
      %1609 = vrot.lane.b32.xlu0 %v1604, 127
      %v1610 = vpop.permute.xlu0 %1609
      %v1611 = vsel %vm790, %v1608, %v1610
      %v1614 = vsel %vm782, %v1611, 0.0
      %v1615 = vsel %vm783, %v1610, 0.0
      %1616 = vst [vmem:[#allocation3 + $0xd0] sm:$0xff] %v1614
      %1617 = vst.msk [vmem:[#allocation3 + $0xd8] sm:$0xff] %vm790, %v1615
      %1618 = vst.msk [vmem:[#allocation3 + $0xd8] sm:$0xff] %vm798, 0.0
      %v1619 = vld [vmem:[%s473] sm:$0xff]
      %v1620 = vld [vmem:[%s473 + $0x8] sm:$0xff]
      %vm1621 = vcmp.lt.s32.totalorder %v776, 14
      %vm1622 = vcmp.lt.s32.totalorder %v777, 14
      %v1623 = vsel %vm1621, 1, 0
      %v1624 = vsel %vm1622, 1, 0
      %vm1625 = vcmp.eq.s32.totalorder %v1623, 1
      %vm1626 = vcmp.eq.s32.totalorder %v1624, 1
      %1629 = vrot.lane.b32.xlu0 %v1619, 126
      %v1630 = vpop.permute.xlu0 %1629
      %1631 = vrot.lane.b32.xlu0 %v1620, 126
      %v1632 = vpop.permute.xlu0 %1631
      %vm1633 = vcmask 1031168
      %v1634 = vsel %vm1633, %v1630, %v1632
      %v1637 = vsel %vm1625, %v1634, 0.0
      %v1638 = vsel %vm1626, %v1632, 0.0
      %1639 = vst [vmem:[#allocation3 + $0xe0] sm:$0xff] %v1637
      %1640 = vst.msk [vmem:[#allocation3 + $0xe8] sm:$0xff] %vm1633, %v1638
      %vm1641 = vcmask 1048560
      %1642 = vst.msk [vmem:[#allocation3 + $0xe8] sm:$0xff] %vm1641, 0.0
      %v1643 = vld [vmem:[%s473] sm:$0xff]
      %v1644 = vld [vmem:[%s473 + $0x8] sm:$0xff]
      %vm1645 = vcmp.ge.s32.totalorder %v776, 2
      %vm1646 = vcmp.ge.s32.totalorder %v777, 2
      %vm1647 = vmand %vm837, %vm1645
      %vm1648 = vmand %vm838, %vm1646
      %v1649 = vsel %vm1647, 1, 0
      %v1650 = vsel %vm1648, 1, 0
      %vm1651 = vcmp.eq.s32.totalorder %v1649, 1
      %vm1652 = vcmp.eq.s32.totalorder %v1650, 1
      %1655 = vrot.lane.b32.xlu0 %v1643, 114
      %v1656 = vpop.permute.xlu0 %1655
      %1657 = vrot.lane.b32.xlu0 %v1644, 114
      %v1658 = vpop.permute.xlu0 %1657
      %vm1659 = vcmask 932864
      %v1660 = vsel %vm1659, %v1656, %v1658
      %v1663 = vsel %vm1651, %v1660, 0.0
      %v1664 = vsel %vm1652, %v1658, 0.0
      %1665 = vst [vmem:[#allocation3 + $0xf0] sm:$0xff] %v1663
      %1666 = vst.msk [vmem:[#allocation3 + $0xf8] sm:$0xff] %vm1659, %v1664
      %vm1667 = vcmask 1048464
      %1668 = vst.msk [vmem:[#allocation3 + $0xf8] sm:$0xff] %vm1667, 0.0
      %v1669 = vld [vmem:[%s473] sm:$0xff]
      %v1670 = vld [vmem:[%s473 + $0x8] sm:$0xff]
      %1673 = vrot.lane.b32.xlu0 %v1669, 113
      %v1674 = vpop.permute.xlu0 %1673
      %1675 = vrot.lane.b32.xlu0 %v1670, 113
      %v1676 = vpop.permute.xlu0 %1675
      %v1677 = vsel %vm853, %v1674, %v1676
      %v1680 = vsel %vm845, %v1677, 0.0
      %v1681 = vsel %vm846, %v1676, 0.0
      %1682 = vst [vmem:[#allocation3 + $0x100] sm:$0xff] %v1680
      %1683 = vst.msk [vmem:[#allocation3 + $0x108] sm:$0xff] %vm853, %v1681
      %1684 = vst.msk [vmem:[#allocation3 + $0x108] sm:$0xff] %vm861, 0.0
      %v1685 = vld [vmem:[%s473] sm:$0xff]
      %v1686 = vld [vmem:[%s473 + $0x8] sm:$0xff]
      %1689 = vrot.lane.b32.xlu0 %v1685, 112
      %v1690 = vpop.permute.xlu0 %1689
      %1691 = vrot.lane.b32.xlu0 %v1686, 112
      %v1692 = vpop.permute.xlu0 %1691
      %v1693 = vsel %vm910, %v1690, %v1692
      %v1696 = vsel %vm902, %v1693, 0.0
      %v1697 = vsel %vm903, %v1692, 0.0
      %1698 = vst [vmem:[#allocation3 + $0x110] sm:$0xff] %v1696
      %1699 = vst.msk [vmem:[#allocation3 + $0x118] sm:$0xff] %vm910, %v1697
      %1700 = vst.msk [vmem:[#allocation3 + $0x118] sm:$0xff] %vm918, 0.0
      %v1701 = vld [vmem:[%s473] sm:$0xff]
      %v1702 = vld [vmem:[%s473 + $0x8] sm:$0xff]
      %1705 = vrot.lane.b32.xlu0 %v1701, 111
      %v1706 = vpop.permute.xlu0 %1705
      %1707 = vrot.lane.b32.xlu0 %v1702, 111
      %v1708 = vpop.permute.xlu0 %1707
      %v1709 = vsel %vm969, %v1706, %v1708
      %v1712 = vsel %vm961, %v1709, 0.0
      %v1713 = vsel %vm962, %v1708, 0.0
      %1714 = vst [vmem:[#allocation3 + $0x120] sm:$0xff] %v1712
      %1715 = vst.msk [vmem:[#allocation3 + $0x128] sm:$0xff] %vm969, %v1713
      %1716 = vst.msk [vmem:[#allocation3 + $0x128] sm:$0xff] %vm977, 0.0
      %v1717 = vld [vmem:[%s473] sm:$0xff]
      %v1718 = vld [vmem:[%s473 + $0x8] sm:$0xff]
      %vm1719 = vmand %vm837, %vm1621
      %vm1720 = vmand %vm838, %vm1622
      %v1721 = vsel %vm1719, 1, 0
      %v1722 = vsel %vm1720, 1, 0
      %vm1723 = vcmp.eq.s32.totalorder %v1721, 1
      %vm1724 = vcmp.eq.s32.totalorder %v1722, 1
      %1727 = vrot.lane.b32.xlu0 %v1717, 110
      %v1728 = vpop.permute.xlu0 %1727
      %1729 = vrot.lane.b32.xlu0 %v1718, 110
      %v1730 = vpop.permute.xlu0 %1729
      %vm1731 = vcmask 900096
      %v1732 = vsel %vm1731, %v1728, %v1730
      %v1735 = vsel %vm1723, %v1732, 0.0
      %v1736 = vsel %vm1724, %v1730, 0.0
      %1737 = vst [vmem:[#allocation3 + $0x130] sm:$0xff] %v1735
      %1738 = vst.msk [vmem:[#allocation3 + $0x138] sm:$0xff] %vm1731, %v1736
      %vm1739 = vcmask 1048432
      %1740 = vst.msk [vmem:[#allocation3 + $0x138] sm:$0xff] %vm1739, 0.0
      %v1741 = vld [vmem:[%s473] sm:$0xff]
      %v1742 = vld [vmem:[%s473 + $0x8] sm:$0xff]
      %vm1743 = vcmp.lt.s32.totalorder %v488, 224
      %vm1744 = vcmp.lt.s32.totalorder %v489, 224
      %vm1745 = vmand %vm1743, %vm1645
      %vm1746 = vmand %vm1744, %vm1646
      %v1747 = vsel %vm1745, 1, 0
      %v1748 = vsel %vm1746, 1, 0
      %vm1749 = vcmp.eq.s32.totalorder %v1747, 1
      %vm1750 = vcmp.eq.s32.totalorder %v1748, 1
      %1753 = vrot.lane.b32.xlu0 %v1741, 98
      %v1754 = vpop.permute.xlu0 %1753
      %1755 = vrot.lane.b32.xlu0 %v1742, 98
      %v1756 = vpop.permute.xlu0 %1755
      %vm1757 = vcmask 801792
      %v1758 = vsel %vm1757, %v1754, %v1756
      %v1761 = vsel %vm1749, %v1758, 0.0
      %v1762 = vsel %vm1750, %v1756, 0.0
      %1763 = vst [vmem:[#allocation3 + $0x140] sm:$0xff] %v1761
      %1764 = vst.msk [vmem:[#allocation3 + $0x148] sm:$0xff] %vm1757, %v1762
      %vm1765 = vcmask 1048336
      %1766 = vst.msk [vmem:[#allocation3 + $0x148] sm:$0xff] %vm1765, 0.0
      %v1767 = vld [vmem:[%s473] sm:$0xff]
      %v1768 = vld [vmem:[%s473 + $0x8] sm:$0xff]
      %vm1769 = vmand %vm1743, %vm839
      %vm1770 = vmand %vm1744, %vm840
      %v1771 = vsel %vm1769, 1, 0
      %v1772 = vsel %vm1770, 1, 0
      %vm1773 = vcmp.eq.s32.totalorder %v1771, 1
      %vm1774 = vcmp.eq.s32.totalorder %v1772, 1
      %1777 = vrot.lane.b32.xlu0 %v1767, 97
      %v1778 = vpop.permute.xlu0 %1777
      %1779 = vrot.lane.b32.xlu0 %v1768, 97
      %v1780 = vpop.permute.xlu0 %1779
      %vm1781 = vcmask 793600
      %v1782 = vsel %vm1781, %v1778, %v1780
      %v1785 = vsel %vm1773, %v1782, 0.0
      %v1786 = vsel %vm1774, %v1780, 0.0
      %1787 = vst [vmem:[#allocation3 + $0x150] sm:$0xff] %v1785
      %1788 = vst.msk [vmem:[#allocation3 + $0x158] sm:$0xff] %vm1781, %v1786
      %vm1789 = vcmask 1048328
      %1790 = vst.msk [vmem:[#allocation3 + $0x158] sm:$0xff] %vm1789, 0.0
      %v1791 = vld [vmem:[%s473] sm:$0xff]
      %v1792 = vld [vmem:[%s473 + $0x8] sm:$0xff]
      %v1793 = vsel %vm1743, 1, 0
      %v1794 = vsel %vm1744, 1, 0
      %vm1795 = vcmp.eq.s32.totalorder %v1793, 1
      %vm1796 = vcmp.eq.s32.totalorder %v1794, 1
      %1799 = vrot.lane.b32.xlu0 %v1791, 96
      %v1800 = vpop.permute.xlu0 %1799
      %1801 = vrot.lane.b32.xlu0 %v1792, 96
      %v1802 = vpop.permute.xlu0 %1801
      %vm1803 = vcmask 785408
      %v1804 = vsel %vm1803, %v1800, %v1802
      %v1807 = vsel %vm1795, %v1804, 0.0
      %v1808 = vsel %vm1796, %v1802, 0.0
      %1809 = vst [vmem:[#allocation3 + $0x160] sm:$0xff] %v1807
      %1810 = vst.msk [vmem:[#allocation3 + $0x168] sm:$0xff] %vm1803, %v1808
      %vm1811 = vcmask 1048320
      %1812 = vst.msk [vmem:[#allocation3 + $0x168] sm:$0xff] %vm1811, 0.0
      %v1813 = vld [vmem:[%s473] sm:$0xff]
      %v1814 = vld [vmem:[%s473 + $0x8] sm:$0xff]
      %vm1815 = vmand %vm1743, %vm778
      %vm1816 = vmand %vm1744, %vm779
      %v1817 = vsel %vm1815, 1, 0
      %v1818 = vsel %vm1816, 1, 0
      %vm1819 = vcmp.eq.s32.totalorder %v1817, 1
      %vm1820 = vcmp.eq.s32.totalorder %v1818, 1
      %1823 = vrot.lane.b32.xlu0 %v1813, 95
      %v1824 = vpop.permute.xlu0 %1823
      %1825 = vrot.lane.b32.xlu0 %v1814, 95
      %v1826 = vpop.permute.xlu0 %1825
      %vm1827 = vcmask 777216
      %v1828 = vsel %vm1827, %v1824, %v1826
      %v1831 = vsel %vm1819, %v1828, 0.0
      %v1832 = vsel %vm1820, %v1826, 0.0
      %1833 = vst [vmem:[#allocation3 + $0x170] sm:$0xff] %v1831
      %1834 = vst.msk [vmem:[#allocation3 + $0x178] sm:$0xff] %vm1827, %v1832
      %vm1835 = vcmask 1048312
      %1836 = vst.msk [vmem:[#allocation3 + $0x178] sm:$0xff] %vm1835, 0.0
      %v1837 = vld [vmem:[%s473] sm:$0xff]
      %v1838 = vld [vmem:[%s473 + $0x8] sm:$0xff]
      %vm1839 = vmand %vm1743, %vm1621
      %vm1840 = vmand %vm1744, %vm1622
      %v1841 = vsel %vm1839, 1, 0
      %v1842 = vsel %vm1840, 1, 0
      %vm1843 = vcmp.eq.s32.totalorder %v1841, 1
      %vm1844 = vcmp.eq.s32.totalorder %v1842, 1
      %1847 = vrot.lane.b32.xlu0 %v1837, 94
      %v1848 = vpop.permute.xlu0 %1847
      %1849 = vrot.lane.b32.xlu0 %v1838, 94
      %v1850 = vpop.permute.xlu0 %1849
      %vm1851 = vcmask 769024
      %v1852 = vsel %vm1851, %v1848, %v1850
      %v1855 = vsel %vm1843, %v1852, 0.0
      %v1856 = vsel %vm1844, %v1850, 0.0
      %1857 = vst [vmem:[#allocation3 + $0x180] sm:$0xff] %v1855
      %1858 = vst.msk [vmem:[#allocation3 + $0x188] sm:$0xff] %vm1851, %v1856
      %vm1859 = vcmask 1048304
      %1860 = vst.msk [vmem:[#allocation3 + $0x188] sm:$0xff] %vm1859, 0.0
      %v1861 = vld [vmem:[%s6] sm:$0xf]
      %v1862 = vld [vmem:[#allocation3] sm:$0xff]
      %v1863 = vld [vmem:[#allocation3 + $0x8] sm:$0xff]
      %v1864 = vld [vmem:[#allocation3 + $0x10] sm:$0xff]
      %v1865 = vld [vmem:[#allocation3 + $0x18] sm:$0xff]
      %v1866 = vld [vmem:[#allocation3 + $0x20] sm:$0xff]
      %v1867 = vld [vmem:[#allocation3 + $0x28] sm:$0xff]
      %v1868 = vld [vmem:[#allocation3 + $0x30] sm:$0xff]
      %v1869 = vld [vmem:[#allocation3 + $0x38] sm:$0xff]
      %v1870 = vld [vmem:[#allocation3 + $0x40] sm:$0xff]
      %v1871 = vld [vmem:[#allocation3 + $0x48] sm:$0xff]
      %v1872 = vld [vmem:[#allocation3 + $0x50] sm:$0xff]
      %v1873 = vld [vmem:[#allocation3 + $0x58] sm:$0xff]
      %v1874 = vld [vmem:[#allocation3 + $0x60] sm:$0xff]
      %v1875 = vld [vmem:[#allocation3 + $0x68] sm:$0xff]
      %v1876 = vld [vmem:[#allocation3 + $0x70] sm:$0xff]
      %v1877 = vld [vmem:[#allocation3 + $0x78] sm:$0xff]
      %v1878 = vld [vmem:[#allocation3 + $0x80] sm:$0xff]
      %v1879 = vld [vmem:[#allocation3 + $0x88] sm:$0xff]
      %v1880 = vld [vmem:[#allocation3 + $0x90] sm:$0xff]
      %v1881 = vld [vmem:[#allocation3 + $0x98] sm:$0xff]
      %v1882 = vld [vmem:[#allocation3 + $0xa0] sm:$0xff]
      %v1883 = vld [vmem:[#allocation3 + $0xa8] sm:$0xff]
      %v1884 = vld [vmem:[#allocation3 + $0xb0] sm:$0xff]
      %v1885 = vld [vmem:[#allocation3 + $0xb8] sm:$0xff]
      %v1886 = vld [vmem:[#allocation3 + $0xc0] sm:$0xff]
      %v1887 = vld [vmem:[#allocation3 + $0xc8] sm:$0xff]
      %v1888 = vld [vmem:[#allocation3 + $0xd0] sm:$0xff]
      %v1889 = vld [vmem:[#allocation3 + $0xd8] sm:$0xff]
      %v1890 = vld [vmem:[#allocation3 + $0xe0] sm:$0xff]
      %v1891 = vld [vmem:[#allocation3 + $0xe8] sm:$0xff]
      %v1892 = vld [vmem:[#allocation3 + $0xf0] sm:$0xff]
      %v1893 = vld [vmem:[#allocation3 + $0xf8] sm:$0xff]
      %v1894 = vld [vmem:[#allocation3 + $0x100] sm:$0xff]
      %v1895 = vld [vmem:[#allocation3 + $0x108] sm:$0xff]
      %v1896 = vld [vmem:[#allocation3 + $0x110] sm:$0xff]
      %v1897 = vld [vmem:[#allocation3 + $0x118] sm:$0xff]
      %v1898 = vld [vmem:[#allocation3 + $0x120] sm:$0xff]
      %v1899 = vld [vmem:[#allocation3 + $0x128] sm:$0xff]
      %v1900 = vld [vmem:[#allocation3 + $0x130] sm:$0xff]
      %v1901 = vld [vmem:[#allocation3 + $0x138] sm:$0xff]
      %v1902 = vld [vmem:[#allocation3 + $0x140] sm:$0xff]
      %v1903 = vld [vmem:[#allocation3 + $0x148] sm:$0xff]
      %v1904 = vld [vmem:[#allocation3 + $0x150] sm:$0xff]
      %v1905 = vld [vmem:[#allocation3 + $0x158] sm:$0xff]
      %v1906 = vld [vmem:[#allocation3 + $0x160] sm:$0xff]
      %v1907 = vld [vmem:[#allocation3 + $0x168] sm:$0xff]
      %v1908 = vld [vmem:[#allocation3 + $0x170] sm:$0xff]
      %v1909 = vld [vmem:[#allocation3 + $0x178] sm:$0xff]
      %v1910 = vld [vmem:[#allocation3 + $0x180] sm:$0xff]
      %v1911 = vld [vmem:[#allocation3 + $0x188] sm:$0xff]
      %v1912 = vpack.c.bf16 %v1864, %v1862
      %v1913 = vpack.c.bf16 %v1865, %v1863
      %v1914 = vpack.c.bf16 %v1868, %v1866
      %v1915 = vpack.c.bf16 %v1869, %v1867
      %v1916 = vpack.c.bf16 %v1872, %v1870
      %v1917 = vpack.c.bf16 %v1873, %v1871
      %v1918 = vpack.c.bf16 %v1876, %v1874
      %v1919 = vpack.c.bf16 %v1877, %v1875
      %v1920 = vpack.c.bf16 %v1880, %v1878
      %v1921 = vpack.c.bf16 %v1881, %v1879
      %v1922 = vpack.c.bf16 %v1884, %v1882
      %v1923 = vpack.c.bf16 %v1885, %v1883
      %v1924 = vpack.c.bf16 %v1888, %v1886
      %v1925 = vpack.c.bf16 %v1889, %v1887
      %v1926 = vpack.c.bf16 %v1892, %v1890
      %v1927 = vpack.c.bf16 %v1893, %v1891
      %v1928 = vpack.c.bf16 %v1896, %v1894
      %v1929 = vpack.c.bf16 %v1897, %v1895
      %v1930 = vpack.c.bf16 %v1900, %v1898
      %v1931 = vpack.c.bf16 %v1901, %v1899
      %v1932 = vpack.c.bf16 %v1904, %v1902
      %v1933 = vpack.c.bf16 %v1905, %v1903
      %v1934 = vpack.c.bf16 %v1908, %v1906
      %v1935 = vpack.c.bf16 %v1909, %v1907
      %v1936 = vpack.c.bf16 %v1910, %v1910
      %v1937 = vpack.c.bf16 %v1911, %v1911
      %v1938 = vld [vmem:[%s7] sm:$0xf]
      %1940 = vset.pattern.permute.xlu0 0
      %1941 = vperm.xlu0 %1940, %v1938
      %v1942 = vpop.permute.xlu0 %1941
      %v1946 = vunpack.c.l.s4 1983009808
      %v1947 = vunpack.c.0.s8 %v1946
      %v1948 = vlaneseq
      %v1949 = vshrl.u32 %v1948, 7
      %v1950 = vsub.s32 %v1947, %v1949
      %v1951 = vrot.slane %v1861, %v1950
      %v1952 = vcombine.high %v1951, %v1951
      %vm1954 = vcmask 588800
      %v1956 = vsel %vm1954, %v1952, 0
      %v1959 = vsel %vm1165, %v1936, 0
      %v1962 = vsel %vm1165, %v1937, 0
      %1964 = vmatprep.subr.bf16.mxu0 %v1927
      %1965 = vmatpush1.bf16.msra.mxu0 %v1926
      %1966 = vmatprep.subr.bf16.mxu0 %v1925
      %1967 = vmatpush1.bf16.msra.mxu0 %v1924
      %1968 = vmatprep.subr.bf16.mxu0 %v1923
      %1969 = vmatpush1.bf16.msra.mxu0 %v1922
      %1970 = vmatprep.subr.bf16.mxu0 %v1921
      %1971 = vmatpush1.bf16.msra.mxu0 %v1920
      %1972 = vmatprep.subr.bf16.mxu0 %v1919
      %1973 = vmatpush1.bf16.msra.mxu0 %v1918
      %1974 = vmatprep.subr.bf16.mxu0 %v1917
      %1975 = vmatpush1.bf16.msra.mxu0 %v1916
      %1976 = vmatprep.subr.bf16.mxu0 %v1915
      %1977 = vmatpush1.bf16.msra.mxu0 %v1914
      %1978 = vmatprep.subr.bf16.mxu0 %v1913
      %1979 = vmatpush1.bf16.msra.mxu0 %v1912
      %1980 = vmatprep.subr.bf16.mxu0 0
      %1981 = vmatpush2.bf16.msra.mxu0 0
      %1982 = vmatprep.subr.bf16.mxu0 0
      %1983 = vmatpush2.bf16.msra.mxu0 0
      %1984 = vmatprep.subr.bf16.mxu0 0
      %1985 = vmatpush2.bf16.msra.mxu0 0
      %1986 = vmatprep.subr.bf16.mxu0 %v1962
      %1987 = vmatpush2.bf16.msra.mxu0 %v1959
      %1988 = vmatprep.subr.bf16.mxu0 %v1935
      %1989 = vmatpush2.bf16.msra.mxu0 %v1934
      %1990 = vmatprep.subr.bf16.mxu0 %v1933
      %1991 = vmatpush2.bf16.msra.mxu0 %v1932
      %1992 = vmatprep.subr.bf16.mxu0 %v1931
      %1993 = vmatpush2.bf16.msra.mxu0 %v1930
      %1994 = vmatprep.subr.bf16.mxu0 %v1929
      %1995 = vmatpush2.bf16.msra.mxu0 %v1928
      %1996 = vmatprep.mubr.bf16.mxu0 %v1956
      %1997 = vmatmul.mubr.bf16.gmra.mxu0 %v1951
      %v1998 = vpop.f32.mrf.mxu0
      %v1999 = vadd.f32 %v1942, %v1998
      %v2000 = vpop.f32.mrf.mxu0
      %v2001 = vadd.f32 %v1942, %v2000
      %v2002 = vpop.f32.mrf.mxu0
      %v2003 = vpop.f32.mrf.mxu0
      %2004 = vdwg.mxu0
      %vm2005 = vcmp.ge.f32.partialorder %v1999, 0.0
      %vm2006 = vcmp.ge.f32.partialorder %v2001, 0.0
      %v2007 = vmul.f32 %v1999, 0.01
      %v2008 = vmul.f32 %v2001, 0.01
      %v2009 = vsel %vm2005, %v1999, %v2007
      %v2010 = vsel %vm2006, %v2001, %v2008
      %v2013 = vcombine.low %v2009, %v2010
      %2015 = vst [vmem:[%s468] sm:$0xff] %v2013
      %p2016 = scmp.lt.s32.totalorder %s23, 1
      %s2017 = scalar_select %p2016, %s23, 1
      %s2018 = smul.addr %s2017, 2
      %s2019 = smul.addr %s2018, 4
      %s2020 = scalar_lea.vmem %s8, %s2019
      %p2021 = scmp.lt.s32.totalorder %s23, 1
      %s2022 = scalar_select %p2021, %s23, 1
      %s2023 = smul.addr %s2022, 2
      %s2024 = smul.addr %s2023, 8
      %s2025 = scalar_lea.vmem %s9, %s2024
      %p2026 = scmp.lt.s32.totalorder %s23, 1
      %s2027 = scalar_select %p2026, %s23, 1
      %s2028 = smul.addr %s2027, 2
      %s2029 = smul.addr %s2028, 8
      %s2030 = scalar_lea.vmem %s10, %s2029
      %p2031 = scmp.lt.s32.totalorder %s23, 1
      %s2032 = scalar_select %p2031, %s23, 1
      %s2033 = smul.addr %s2032, 2
      %s2034 = smul.addr %s2033, 8
      %s2035 = scalar_lea.vmem %s11, %s2034
      // Predicated region
      $region53: #{conv_lstm_cell_forward.1} parent=51 // pred_check
        %p2036 = pneg %p229
      $region54: #{conv_lstm_cell_forward.1} parent=51 // pred_check_branch
        %2038 = sbr.rel (%p2036) target = $region56
      $region55: #{conv_lstm_cell_forward.1} parent=51 // pred_region
        _
      $region56: #{conv_lstm_cell_forward.1} parent=51 // pred_fallthru
        _
      // Predicated region
      $region57: #{conv_lstm_cell_forward.1} parent=51 // pred_check
        %p2039 = pneg %p255
      $region58: #{conv_lstm_cell_forward.1} parent=51 // pred_check_branch
        %2041 = sbr.rel (%p2039) target = $region60
      $region59: #{conv_lstm_cell_forward.1} parent=51 // pred_region
        _
      $region60: #{conv_lstm_cell_forward.1} parent=51 // pred_fallthru
        _
      // Predicated region
      $region61: #{conv_lstm_cell_forward.1} parent=51 // pred_check
        %p2042 = pneg %p281
      $region62: #{conv_lstm_cell_forward.1} parent=51 // pred_check_branch
        %2044 = sbr.rel (%p2042) target = $region64
      $region63: #{conv_lstm_cell_forward.1} parent=51 // pred_region
        _
      $region64: #{conv_lstm_cell_forward.1} parent=51 // pred_fallthru
        _
      // Predicated region
      $region65: #{conv_lstm_cell_forward.1} parent=51 // pred_check
        %p2045 = pneg %p307
      $region66: #{conv_lstm_cell_forward.1} parent=51 // pred_check_branch
        %2047 = sbr.rel (%p2045) target = $region68
      $region67: #{conv_lstm_cell_forward.1} parent=51 // pred_region
        _
      $region68: #{conv_lstm_cell_forward.1} parent=51 // pred_fallthru
        _
    $region52: #{conv_lstm_cell_forward.1} parent=5 // pred_fallthru
      _
    %p2048 = scmp.le.s32.totalorder 2, %s18
    // Predicated region
    $region69: #{conv_lstm_cell_forward.1} parent=5 // pred_check
      %p2049 = pneg %p2048
    $region70: #{conv_lstm_cell_forward.1} parent=5 // pred_check_branch
      %2051 = sbr.rel (%p2049) target = $region72
    $region71: #{conv_lstm_cell_forward.1} parent=5 // pred_region
      %s2052 = ssub.s32 %s18, 2
      // Predicated region
      $region73: #{conv_lstm_cell_forward.1} parent=71 // pred_check
        %p2053 = pneg %p235
      $region74: #{conv_lstm_cell_forward.1} parent=71 // pred_check_branch
        %2055 = sbr.rel (%p2053) target = $region76
      $region75: #{conv_lstm_cell_forward.1} parent=71 // pred_region
        %p2056 = scmp.lt.s32.totalorder %s24, 1
        %s2057 = scalar_select %p2056, %s24, 1
        %s2058 = smul.addr %s2057, 2
        %s2059 = smul.addr %s2058, 4
        %s2060 = scalar_lea.vmem %s8, %s2059
      $region76: #{conv_lstm_cell_forward.1} parent=71 // pred_fallthru
        _
      // Predicated region
      $region77: #{conv_lstm_cell_forward.1} parent=71 // pred_check
        %p2061 = pneg %p261
      $region78: #{conv_lstm_cell_forward.1} parent=71 // pred_check_branch
        %2063 = sbr.rel (%p2061) target = $region80
      $region79: #{conv_lstm_cell_forward.1} parent=71 // pred_region
        %p2064 = scmp.lt.s32.totalorder %s24, 1
        %s2065 = scalar_select %p2064, %s24, 1
        %s2066 = smul.addr %s2065, 2
        %s2067 = smul.addr %s2066, 8
        %s2068 = scalar_lea.vmem %s9, %s2067
      $region80: #{conv_lstm_cell_forward.1} parent=71 // pred_fallthru
        _
      // Predicated region
      $region81: #{conv_lstm_cell_forward.1} parent=71 // pred_check
        %p2069 = pneg %p287
      $region82: #{conv_lstm_cell_forward.1} parent=71 // pred_check_branch
        %2071 = sbr.rel (%p2069) target = $region84
      $region83: #{conv_lstm_cell_forward.1} parent=71 // pred_region
        %p2072 = scmp.lt.s32.totalorder %s24, 1
        %s2073 = scalar_select %p2072, %s24, 1
        %s2074 = smul.addr %s2073, 2
        %s2075 = smul.addr %s2074, 8
        %s2076 = scalar_lea.vmem %s10, %s2075
      $region84: #{conv_lstm_cell_forward.1} parent=71 // pred_fallthru
        _
      // Predicated region
      $region85: #{conv_lstm_cell_forward.1} parent=71 // pred_check
        %p2077 = pneg %p313
      $region86: #{conv_lstm_cell_forward.1} parent=71 // pred_check_branch
        %2079 = sbr.rel (%p2077) target = $region88
      $region87: #{conv_lstm_cell_forward.1} parent=71 // pred_region
        %p2080 = scmp.lt.s32.totalorder %s24, 1
        %s2081 = scalar_select %p2080, %s24, 1
        %s2082 = smul.addr %s2081, 2
        %s2083 = smul.addr %s2082, 8
        %s2084 = scalar_lea.vmem %s11, %s2083
      $region88: #{conv_lstm_cell_forward.1} parent=71 // pred_fallthru
        _
    $region72: #{conv_lstm_cell_forward.1} parent=5 // pred_fallthru
      _
  $region6: #{conv_lstm_cell_forward.1} parent=0 // loop_footer
    %s22 = sadd.s32 1, %s18
  $region7: #{conv_lstm_cell_forward.1} parent=0 // loop_footer_branch
    %17 = sbr.rel target = $region3
  $region8: #{conv_lstm_cell_forward.1} parent=0 // loop_exit
    _

</llo_original>
